<compile_context>
chip_gen: v6e
topology: v6e:2x2x1
jax: 0.10.0
libtpu: 0.0.40
codegen_flags: <defaults>
</compile_context>

<pallas_src>
import functools

import jax
import jax.numpy as jnp
from jax import lax
from jax.experimental import pallas as pl
from jax.experimental.pallas import tpu as pltpu


_TILE_ROWS = 1024  # target rows of the (HW, C) slab per grid step


def _vmem_limit_bytes():
    cap = 128 * 1024 * 1024
    try:
        cap = int(pltpu.get_tpu_info().vmem_capacity_bytes)
    except Exception:
        pass
    # ~28 MiB on 64-MiB-VMEM parts (v7x-class), 64 MiB on 128-MiB parts (v5e/v6e).
    return (28 if cap <= 64 * 1024 * 1024 else 64) * 1024 * 1024


def _cparams(dims):
    return pltpu.CompilerParams(dimension_semantics=dims,
                                vmem_limit_bytes=_vmem_limit_bytes())


def _pick_tile(total, target=_TILE_ROWS):
    """Largest divisor of `total` that is a multiple of 8 and <= target (else total)."""
    if total <= target:
        return total
    start = target - (target % 8)
    for cand in range(start, 7, -8):
        if total % cand == 0:
            return cand
    return total


def _gn_scale_shift(ssum, ssq, gamma, beta, count, num_groups, eps):
    """Fold GroupNorm stats into per-sample, per-channel (scale, shift), f32.

    ssum/ssq: (N, 1, C) per-channel sums over the normalized positions.
    NOTE: one-pass variance (E[x^2]-E[x]^2) in f32, clamped at 0; adequate at these
    spatial counts.  # TODO(synk): shifted two-pass formulation for very large HW.
    """
    N, _, C = ssum.shape
    cg = C // num_groups
    s = ssum.astype(jnp.float32).reshape(N, num_groups, cg).sum(axis=-1)
    q = ssq.astype(jnp.float32).reshape(N, num_groups, cg).sum(axis=-1)
    mean = s / count
    var = jnp.maximum(q / count - mean * mean, 0.0)
    inv = lax.rsqrt(var + eps)
    mean_c = jnp.repeat(mean, cg, axis=1)                      # (N, C)
    inv_c = jnp.repeat(inv, cg, axis=1)
    scale = inv_c * gamma.astype(jnp.float32)[None, :]
    shift = beta.astype(jnp.float32)[None, :] - mean_c * scale
    return scale, shift


# ------------------------------ Pallas kernels ------------------------------ #

def _pw_stats_kernel(x_ref, w_ref, b_ref, y_ref, sum_ref, ssq_ref):
    """1x1 conv (+bias); emits raw output tile + per-channel sum/sumsq partials."""
    t = pl.program_id(1)
    y = jnp.dot(x_ref[0], w_ref[...], preferred_element_type=jnp.float32)
    y = y + b_ref[...].astype(jnp.float32)
    y_ref[0] = y.astype(y_ref.dtype)

    @pl.when(t == 0)
    def _init():
        sum_ref[...] = jnp.zeros_like(sum_ref)
        ssq_ref[...] = jnp.zeros_like(ssq_ref)

    sum_ref[0] += jnp.sum(y, axis=0, keepdims=True)
    ssq_ref[0] += jnp.sum(y * y, axis=0, keepdims=True)


def _pw_affine_stats_kernel(x_ref, sc_ref, sh_ref, w_ref, b_ref,
                            y_ref, sum_ref, ssq_ref, *, relu6):
    """GN affine (+ReLU6) prologue + 1x1 conv; emits raw output + stats partials."""
    t = pl.program_id(1)
    x = x_ref[0].astype(jnp.float32) * sc_ref[0] + sh_ref[0]
    if relu6:
        x = jnp.clip(x, 0.0, 6.0)
    y = jnp.dot(x.astype(w_ref.dtype), w_ref[...],
                preferred_element_type=jnp.float32)
    y = y + b_ref[...].astype(jnp.float32)
    y_ref[0] = y.astype(y_ref.dtype)

    @pl.when(t == 0)
    def _init():
        sum_ref[...] = jnp.zeros_like(sum_ref)
        ssq_ref[...] = jnp.zeros_like(ssq_ref)

    sum_ref[0] += jnp.sum(y, axis=0, keepdims=True)
    ssq_ref[0] += jnp.sum(y * y, axis=0, keepdims=True)


def _dw_kernel(x_ref, sc_ref, sh_ref, w_ref, b_ref,
               y_ref, sum_ref, ssq_ref, xh_ref, *, stride):
    """GN1 affine + ReLU6 prologue, 3x3 depthwise conv (pad 1, H-stride fused),
    GN2 stats over the surviving output positions.

    x_ref: (1, H, W, C) raw expand output;  sc/sh: (1, 1, C) f32 folded GN1 affine
    w_ref: (3, 3, C);  b_ref: (1, 1, C)
    y_ref: (1, Ho, W, C)   (W subsample, if any, is done outside)
    xh_ref: VMEM scratch (H + 2, W + 16, C), input dtype.  Interior stored at
            column offset 8 (sublane-aligned store); only halo strips are zeroed.
    """
    H, W, C = x_ref.shape[1], x_ref.shape[2], x_ref.shape[3]
    Ho = y_ref.shape[1]
    LP = 8
    WP = xh_ref.shape[1]

    yin = x_ref[0].astype(jnp.float32) * sc_ref[0] + sh_ref[0]
    yin = jnp.clip(yin, 0.0, 6.0)

    zero_row = jnp.zeros((1, WP, C), xh_ref.dtype)
    zero_col = jnp.zeros((H, 1, C), xh_ref.dtype)
    xh_ref[0:1] = zero_row                                   # top halo row
    xh_ref[H + 1:H + 2] = zero_row                           # bottom halo row
    xh_ref[1:H + 1, LP - 1:LP, :] = zero_col                 # left halo column
    xh_ref[1:H + 1, LP + W:LP + W + 1, :] = zero_col         # right halo column
    xh_ref[1:H + 1, LP:LP + W, :] = yin.astype(xh_ref.dtype)  # aligned interior store

    wv = w_ref[...].astype(jnp.float32)                      # (3, 3, C)
    acc = jnp.zeros((H, W, C), jnp.float32)
    for dx in range(3):                                      # column offset dx - 1
        xs = xh_ref[:, LP - 1 + dx:LP - 1 + dx + W, :].astype(jnp.float32)
        for dy in range(3):                                  # row offset dy - 1
            acc = acc + wv[dy:dy + 1, dx:dx + 1, :] * xs[dy:dy + H]
    acc = acc + b_ref[...].astype(jnp.float32)

    if stride > 1:
        hp = Ho * stride
        if hp > H:  # only for odd H
            acc = jnp.concatenate(
                [acc, jnp.zeros((hp - H, W, C), acc.dtype)], axis=0)
        acc = acc.reshape(Ho, stride, W, C)[:, 0]            # H subsample (rows 0,s,2s,..)
    y_ref[0] = acc.astype(y_ref.dtype)

    # GN2 statistics over the surviving (strided) output positions only.
    if stride > 1:
        col_ok = (lax.broadcasted_iota(jnp.int32, (1, W, 1), 1) % stride) == 0
        zs = jnp.where(col_ok, acc, 0.0)
        zq = jnp.where(col_ok, acc * acc, 0.0)
    else:
        zs, zq = acc, acc * acc
    s = jnp.sum(jnp.sum(zs, axis=1, keepdims=True), axis=0, keepdims=True)   # (1,1,C)
    q = jnp.sum(jnp.sum(zq, axis=1, keepdims=True), axis=0, keepdims=True)
    sum_ref[0] = s[0]
    ssq_ref[0] = q[0]


def _affine_kernel(y_ref, sc_ref, sh_ref, o_ref):
    o_ref[0] = (y_ref[0].astype(jnp.float32) * sc_ref[0] + sh_ref[0]).astype(o_ref.dtype)


def _affine_res_kernel(y_ref, sc_ref, sh_ref, r_ref, o_ref):
    v = y_ref[0].astype(jnp.float32) * sc_ref[0] + sh_ref[0]
    o_ref[0] = (v + r_ref[0].astype(jnp.float32)).astype(o_ref.dtype)


# -------------------------------- wrappers ----------------------------------- #

def expand_pw(x_cl, w, b):
    """1x1 conv, tiled (N, HW-tiles); returns (raw output, sum, sumsq)."""
    N, HW, Cin = x_cl.shape
    Cout = w.shape[0]
    T = _pick_tile(HW)
    wt = jnp.transpose(w)                                     # (Cin, Cout), tiny
    return pl.pallas_call(
        _pw_stats_kernel,
        out_shape=(jax.ShapeDtypeStruct((N, HW, Cout), x_cl.dtype),
                   jax.ShapeDtypeStruct((N, 1, Cout), jnp.float32),
                   jax.ShapeDtypeStruct((N, 1, Cout), jnp.float32)),
        grid=(N, HW // T),
        in_specs=[pl.BlockSpec((1, T, Cin), lambda n, t: (n, t, 0)),
                  pl.BlockSpec((Cin, Cout), lambda n, t: (0, 0)),
                  pl.BlockSpec((1, Cout), lambda n, t: (0, 0))],
        out_specs=(pl.BlockSpec((1, T, Cout), lambda n, t: (n, t, 0)),
                   pl.BlockSpec((1, 1, Cout), lambda n, t: (n, 0, 0)),
                   pl.BlockSpec((1, 1, Cout), lambda n, t: (n, 0, 0))),
        compiler_params=_cparams(("parallel", "arbitrary")),
    )(x_cl, wt, b.reshape(1, Cout))


def project_pw(x_cl, scale, shift, w, b, *, relu6_prologue=True):
    """GN affine (+ReLU6) prologue + 1x1 conv, tiled (N, HW-tiles)."""
    N, HW, Cin = x_cl.shape
    Cout = w.shape[0]
    T = _pick_tile(HW)
    wt = jnp.transpose(w)
    kern = functools.partial(_pw_affine_stats_kernel, relu6=relu6_prologue)
    return pl.pallas_call(
        kern,
        out_shape=(jax.ShapeDtypeStruct((N, HW, Cout), x_cl.dtype),
                   jax.ShapeDtypeStruct((N, 1, Cout), jnp.float32),
                   jax.ShapeDtypeStruct((N, 1, Cout), jnp.float32)),
        grid=(N, HW // T),
        in_specs=[pl.BlockSpec((1, T, Cin), lambda n, t: (n, t, 0)),
                  pl.BlockSpec((1, 1, Cin), lambda n, t: (n, 0, 0)),
                  pl.BlockSpec((1, 1, Cin), lambda n, t: (n, 0, 0)),
                  pl.BlockSpec((Cin, Cout), lambda n, t: (0, 0)),
                  pl.BlockSpec((1, Cout), lambda n, t: (0, 0))],
        out_specs=(pl.BlockSpec((1, T, Cout), lambda n, t: (n, t, 0)),
                   pl.BlockSpec((1, 1, Cout), lambda n, t: (n, 0, 0)),
                   pl.BlockSpec((1, 1, Cout), lambda n, t: (n, 0, 0))),
        compiler_params=_cparams(("parallel", "arbitrary")),
    )(x_cl, scale.reshape(N, 1, Cin), shift.reshape(N, 1, Cin), wt, b.reshape(1, Cout))


def dwconv3x3(y1_raw, scale1, shift1, w, b, *, stride):
    """GN1 affine + ReLU6 + depthwise 3x3 (pad 1, H-stride fused) + GN2 stats.

    y1_raw: (N, H, W, C); returns ((N, Ho, W, C) conv output, sum, sumsq).
    """
    N, H, W, C = y1_raw.shape
    Ho = (H - 1) // stride + 1
    w33c = jnp.transpose(w.reshape(C, 3, 3), (1, 2, 0))       # (3, 3, C), tiny
    kern = functools.partial(_dw_kernel, stride=stride)
    return pl.pallas_call(
        kern,
        out_shape=(jax.ShapeDtypeStruct((N, Ho, W, C), y1_raw.dtype),
                   jax.ShapeDtypeStruct((N, 1, C), jnp.float32),
                   jax.ShapeDtypeStruct((N, 1, C), jnp.float32)),
        grid=(N,),
        in_specs=[pl.BlockSpec((1, H, W, C), lambda n: (n, 0, 0, 0)),
                  pl.BlockSpec((1, 1, C), lambda n: (n, 0, 0)),
                  pl.BlockSpec((1, 1, C), lambda n: (n, 0, 0)),
                  pl.BlockSpec((3, 3, C), lambda n: (0, 0, 0)),
                  pl.BlockSpec((1, 1, C), lambda n: (0, 0, 0))],
        out_specs=(pl.BlockSpec((1, Ho, W, C), lambda n: (n, 0, 0, 0)),
                   pl.BlockSpec((1, 1, C), lambda n: (n, 0, 0)),
                   pl.BlockSpec((1, 1, C), lambda n: (n, 0, 0))),
        scratch_shapes=[pltpu.VMEM((H + 2, W + 16, C), y1_raw.dtype)],
        compiler_params=_cparams(("parallel",)),
    )(y1_raw, scale1.reshape(N, 1, C), shift1.reshape(N, 1, C),
      w33c, b.reshape(1, 1, C))


def gn_affine(y_raw, scale, shift, *, residual=None, out_dtype=None):
    """Final GN affine (+ optional residual add), tiled (N, HW-tiles)."""
    N, HW, C = y_raw.shape
    T = _pick_tile(HW)
    out_dtype = out_dtype or y_raw.dtype
    sc = scale.reshape(N, 1, C)
    sh = shift.reshape(N, 1, C)
    vspec = pl.BlockSpec((1, T, C), lambda n, t: (n, t, 0))
    pspec = pl.BlockSpec((1, 1, C), lambda n, t: (n, 0, 0))
    if residual is None:
        return pl.pallas_call(
            _affine_kernel,
            out_shape=jax.ShapeDtypeStruct((N, HW, C), out_dtype),
            grid=(N, HW // T),
            in_specs=[vspec, pspec, pspec],
            out_specs=vspec,
            compiler_params=_cparams(("parallel", "parallel")),
        )(y_raw, sc, sh)
    return pl.pallas_call(
        _affine_res_kernel,
        out_shape=jax.ShapeDtypeStruct((N, HW, C), out_dtype),
        grid=(N, HW // T),
        in_specs=[vspec, pspec, pspec, vspec],
        out_specs=vspec,
        compiler_params=_cparams(("parallel", "parallel")),
    )(y_raw, sc, sh, residual)


# --------------------------- LinearBottleNeck module ------------------------- #

def init_params(key, in_channels, out_channels, t=6):
    hid = in_channels * t
    k = jax.random.split(key, 12)
    return {
        "w1": 0.1 * jax.random.normal(k[0], (hid, in_channels), jnp.float32),
        "b1": 0.1 * jax.random.normal(k[1], (hid,), jnp.float32),
        "gn1_g": 1.0 + 0.1 * jax.random.normal(k[2], (hid,), jnp.float32),
        "gn1_b": 0.1 * jax.random.normal(k[3], (hid,), jnp.float32),
        "w2": 0.1 * jax.random.normal(k[4], (hid, 1, 3, 3), jnp.float32),
        "b2": 0.1 * jax.random.normal(k[5], (hid,), jnp.float32),
        "gn2_g": 1.0 + 0.1 * jax.random.normal(k[6], (hid,), jnp.float32),
        "gn2_b": 0.1 * jax.random.normal(k[7], (hid,), jnp.float32),
        "w3": 0.1 * jax.random.normal(k[8], (out_channels, hid), jnp.float32),
        "b3": 0.1 * jax.random.normal(k[9], (out_channels,), jnp.float32),
        "gn3_g": 1.0 + 0.1 * jax.random.normal(k[10], (out_channels,), jnp.float32),
        "gn3_b": 0.1 * jax.random.normal(k[11], (out_channels,), jnp.float32),
    }


def linear_bottleneck_forward(params, x, in_channels, out_channels, stride, t=6, eps=1e-5):
    N, C, H, W = x.shape
    hid = in_channels * t
    # NCHW -> channels-last (touches only the small block input).
    x_cl = jnp.transpose(x, (0, 2, 3, 1)).reshape(N, H * W, C)

    # stage 1: 1x1 expand (raw) + GN1 stats
    y1, s1, q1 = expand_pw(x_cl, params["w1"], params["b1"])
    sc1, sh1 = _gn_scale_shift(s1, q1, params["gn1_g"], params["gn1_b"],
                               float(H * W * (hid // 2)), 2, eps)

    # stage 2: GN1 affine + ReLU6 + depthwise 3x3 (H-stride fused) + GN2 stats
    y2_full, s2, q2 = dwconv3x3(y1.reshape(N, H, W, hid), sc1, sh1,
                                params["w2"], params["b2"], stride=stride)
    Ho = y2_full.shape[1]
    y2 = y2_full if stride == 1 else y2_full[:, :, ::stride, :]   # cheap W subsample
    Wo = y2.shape[2]
    y2 = y2.reshape(N, Ho * Wo, hid)
    sc2, sh2 = _gn_scale_shift(s2, q2, params["gn2_g"], params["gn2_b"],
                               float(Ho * Wo * (hid // 2)), 2, eps)

    # stage 3: GN2 affine + ReLU6 + 1x1 project + GN3 stats
    y3, s3, q3 = project_pw(y2, sc2, sh2, params["w3"], params["b3"])
    sc3, sh3 = _gn_scale_shift(s3, q3, params["gn3_g"], params["gn3_b"],
                               float(Ho * Wo * (out_channels // 2)), 2, eps)

    # stage 4: GN3 affine (+ residual add of the block input)
    res = x_cl if (stride == 1 and in_channels == out_channels) else None
    out = gn_affine(y3, sc3, sh3, residual=res, out_dtype=x.dtype)

    # channels-last -> NCHW (touches only the small block output).
    return jnp.transpose(out.reshape(N, Ho, Wo, out_channels), (0, 3, 1, 2))


# ----------------------------- pure-JAX reference ----------------------------- #

def _ref_forward(params, x, in_c, out_c, stride, t=6, eps=1e-5):
    def gn(z, g, b):
        N, C, H, W = z.shape
        zg = z.reshape(N, 2, C // 2, H, W)
        m = zg.mean(axis=(2, 3, 4), keepdims=True)
        v = ((zg - m) ** 2).mean(axis=(2, 3, 4), keepdims=True)
        zn = ((zg - m) / jnp.sqrt(v + eps)).reshape(N, C, H, W)
        return zn * g.reshape(1, C, 1, 1) + b.reshape(1, C, 1, 1)

    hid = in_c * t
    y = lax.conv_general_dilated(x, params["w1"].reshape(hid, in_c, 1, 1),
                                 (1, 1), "VALID") + params["b1"].reshape(1, hid, 1, 1)
    y = jnp.clip(gn(y, params["gn1_g"], params["gn1_b"]), 0.0, 6.0)
    y = lax.conv_general_dilated(y, params["w2"], (stride, stride),
                                 ((1, 1), (1, 1)), feature_group_count=hid)
    y = y + params["b2"].reshape(1, hid, 1, 1)
    y = jnp.clip(gn(y, params["gn2_g"], params["gn2_b"]), 0.0, 6.0)
    y = lax.conv_general_dilated(y, params["w3"].reshape(out_c, hid, 1, 1),
                                 (1, 1), "VALID") + params["b3"].reshape(1, out_c, 1, 1)
    y = gn(y, params["gn3_g"], params["gn3_b"])
    if stride == 1 and in_c == out_c:
        y = y + x
    return y


if __name__ == "__main__":
    key = jax.random.PRNGKey(0)
    kx1, kx2, kp1, kp2 = jax.random.split(key, 4)

    fwd = jax.jit(linear_bottleneck_forward, static_argnums=(2, 3, 4, 5))

    # case 1: stride 1, in == out  -> residual path, fully fused
    N, in_c, H, W, out_c, stride, t = 2, 4, 16, 16, 4, 1, 6
    x1 = jax.random.normal(kx1, (N, in_c, H, W), jnp.float32)
    p1 = init_params(kp1, in_c, out_c, t)
    y1 = jax.block_until_ready(fwd(p1, x1, in_c, out_c, stride, t))
    y1_ref = _ref_forward(p1, x1, in_c, out_c, stride, t)
    assert y1.shape == y1_ref.shape == (N, out_c, H, W)
    err1 = float(jnp.max(jnp.abs(y1 - y1_ref)))

    # case 2: stride 2, in != out  -> strided path (H-stride fused in-kernel)
    out_c2, stride2 = 8, 2
    x2 = jax.random.normal(kx2, (N, in_c, H, W), jnp.float32)
    p2 = init_params(kp2, in_c, out_c2, t)
    y2 = jax.block_until_ready(fwd(p2, x2, in_c, out_c2, stride2, t))
    y2_ref = _ref_forward(p2, x2, in_c, out_c2, stride2, t)
    assert y2.shape == y2_ref.shape == (N, out_c2, H // 2, W // 2)
    err2 = float(jnp.max(jnp.abs(y2 - y2_ref)))

    if err1 > 2e-3 or err2 > 2e-3:
        raise SystemExit(f"mismatch vs reference: stride1 err={err1}, stride2 err={err2}")

    # bf16 smoke test: native bf16 MXU operands + bf16 hid-channel intermediates.
    p1_bf16 = jax.tree_util.tree_map(lambda a: a.astype(jnp.bfloat16), p1)
    yb = jax.block_until_ready(fwd(p1_bf16, x1.astype(jnp.bfloat16), in_c, out_c, stride, t))
    assert yb.shape == (N, out_c, H, W)
    assert bool(jnp.all(jnp.isfinite(yb.astype(jnp.float32))))

    print("KERNEL_OK")
</pallas_src>

<mosaic_0001>
module attributes {stable_mosaic.version = 11 : i64} {
  func.func @_pw_stats_kernel(%arg0: i32, %arg1: i32, %arg2: memref<1x256x4xf32, #tpu.memory_space<vmem>>, %arg3: memref<4x24xf32, #tpu.memory_space<vmem>>, %arg4: memref<1x24xf32, #tpu.memory_space<vmem>>, %arg5: memref<1x256x24xf32, #tpu.memory_space<vmem>>, %arg6: memref<1x1x24xf32, #tpu.memory_space<vmem>>, %arg7: memref<1x1x24xf32, #tpu.memory_space<vmem>>) attributes {dimension_semantics = [#tpu.dimension_semantics<parallel>, #tpu.dimension_semantics<arbitrary>], iteration_bounds = array<i64: 2, 1>, scalar_prefetch = 0 : i64, scratch_operands = 0 : i64, tpu.core_type = #tpu.core_type<tc>, window_params = [{transform_indices = @transform_0, window_bounds = array<i64: 1, 256, 4>}, {pipeline_mode = #tpu.pipeline_mode<synchronous>, transform_indices = @transform_1, window_bounds = array<i64: 4, 24>}, {pipeline_mode = #tpu.pipeline_mode<synchronous>, transform_indices = @transform_2, window_bounds = array<i64: 1, 24>}, {transform_indices = @transform_3, window_bounds = array<i64: 1, 256, 24>}, {transform_indices = @transform_4, window_bounds = array<i64: 1, 1, 24>}, {transform_indices = @transform_5, window_bounds = array<i64: 1, 1, 24>}]} {
    %c0 = arith.constant 0 : index
    %c0_0 = arith.constant 0 : index
    %c0_1 = arith.constant 0 : index
    %0 = vector.load %arg2[%c0, %c0_0, %c0_1] : memref<1x256x4xf32, #tpu.memory_space<vmem>>, vector<1x256x4xf32>
    %1 = vector.shape_cast %0 : vector<1x256x4xf32> to vector<256x4xf32>
    %c0_2 = arith.constant 0 : index
    %c0_3 = arith.constant 0 : index
    %2 = vector.load %arg3[%c0_2, %c0_3] : memref<4x24xf32, #tpu.memory_space<vmem>>, vector<4x24xf32>
    %cst = arith.constant dense<0.000000e+00> : vector<256x24xf32>
    %3 = tpu.matmul %1, %2, %cst {dimension_numbers = #tpu.dot_dimension_numbers<[1], [0], [0], [1], [0, 0, 1, 1], [], []>} : vector<256x4xf32>, vector<4x24xf32>, vector<256x24xf32> -> vector<256x24xf32>
    %c0_4 = arith.constant 0 : index
    %c0_5 = arith.constant 0 : index
    %4 = vector.load %arg4[%c0_4, %c0_5] : memref<1x24xf32, #tpu.memory_space<vmem>>, vector<1x24xf32>
    %5 = vector.broadcast %4 : vector<1x24xf32> to vector<256x24xf32>
    %6 = arith.addf %3, %5 : vector<256x24xf32>
    %c0_6 = arith.constant 0 : index
    %c0_7 = arith.constant 0 : index
    %c0_8 = arith.constant 0 : index
    %7 = vector.load %arg5[%c0_6, %c0_7, %c0_8] : memref<1x256x24xf32, #tpu.memory_space<vmem>>, vector<1x256x24xf32>
    %8 = vector.shape_cast %7 : vector<1x256x24xf32> to vector<256x24xf32>
    %9 = vector.shape_cast %6 : vector<256x24xf32> to vector<1x256x24xf32>
    tpu.vector_store %arg5[%c0_6, %c0_7, %c0_8], %9 {strides = array<i32>} : memref<1x256x24xf32, #tpu.memory_space<vmem>>, vector<1x256x24xf32>,
    %c0_i32 = arith.constant 0 : i32
    %10 = arith.cmpi eq, %arg1, %c0_i32 : i32
    %11 = arith.extui %10 : i1 to i32
    %c0_i32_9 = arith.constant 0 : i32
    %12 = arith.cmpi ne, %11, %c0_i32_9 : i32
    scf.if %12 {
      %cst_24 = arith.constant 0.000000e+00 : f32
      %30 = vector.broadcast %cst_24 : f32 to vector<1x1x24xf32>
      %c0_25 = arith.constant 0 : index
      %c0_26 = arith.constant 0 : index
      %c0_27 = arith.constant 0 : index
      %31 = vector.load %arg6[%c0_25, %c0_26, %c0_27] : memref<1x1x24xf32, #tpu.memory_space<vmem>>, vector<1x1x24xf32>
      tpu.vector_store %arg6[%c0_25, %c0_26, %c0_27], %30 {strides = array<i32>} : memref<1x1x24xf32, #tpu.memory_space<vmem>>, vector<1x1x24xf32>,
      %cst_28 = arith.constant 0.000000e+00 : f32
      %32 = vector.broadcast %cst_28 : f32 to vector<1x1x24xf32>
      %c0_29 = arith.constant 0 : index
      %c0_30 = arith.constant 0 : index
      %c0_31 = arith.constant 0 : index
      %33 = vector.load %arg7[%c0_29, %c0_30, %c0_31] : memref<1x1x24xf32, #tpu.memory_space<vmem>>, vector<1x1x24xf32>
      tpu.vector_store %arg7[%c0_29, %c0_30, %c0_31], %32 {strides = array<i32>} : memref<1x1x24xf32, #tpu.memory_space<vmem>>, vector<1x1x24xf32>,
    } else {
    }
    %c0_10 = arith.constant 0 : index
    %c0_11 = arith.constant 0 : index
    %c0_12 = arith.constant 0 : index
    %13 = vector.load %arg6[%c0_10, %c0_11, %c0_12] : memref<1x1x24xf32, #tpu.memory_space<vmem>>, vector<1x1x24xf32>
    %14 = vector.shape_cast %13 : vector<1x1x24xf32> to vector<1x24xf32>
    %cst_13 = arith.constant dense<0.000000e+00> : vector<24xf32>
    %15 = vector.multi_reduction <add>, %6, %cst_13 [0] : vector<256x24xf32> to vector<24xf32>
    %16 = vector.shape_cast %15 : vector<24xf32> to vector<1x24xf32>
    %17 = arith.addf %14, %16 : vector<1x24xf32>
    %c0_14 = arith.constant 0 : index
    %c0_15 = arith.constant 0 : index
    %c0_16 = arith.constant 0 : index
    %18 = vector.load %arg6[%c0_14, %c0_15, %c0_16] : memref<1x1x24xf32, #tpu.memory_space<vmem>>, vector<1x1x24xf32>
    %19 = vector.shape_cast %18 : vector<1x1x24xf32> to vector<1x24xf32>
    %20 = vector.shape_cast %17 : vector<1x24xf32> to vector<1x1x24xf32>
    tpu.vector_store %arg6[%c0_14, %c0_15, %c0_16], %20 {strides = array<i32>} : memref<1x1x24xf32, #tpu.memory_space<vmem>>, vector<1x1x24xf32>,
    %c0_17 = arith.constant 0 : index
    %c0_18 = arith.constant 0 : index
    %c0_19 = arith.constant 0 : index
    %21 = vector.load %arg7[%c0_17, %c0_18, %c0_19] : memref<1x1x24xf32, #tpu.memory_space<vmem>>, vector<1x1x24xf32>
    %22 = vector.shape_cast %21 : vector<1x1x24xf32> to vector<1x24xf32>
    %23 = arith.mulf %6, %6 : vector<256x24xf32>
    %cst_20 = arith.constant dense<0.000000e+00> : vector<24xf32>
    %24 = vector.multi_reduction <add>, %23, %cst_20 [0] : vector<256x24xf32> to vector<24xf32>
    %25 = vector.shape_cast %24 : vector<24xf32> to vector<1x24xf32>
    %26 = arith.addf %22, %25 : vector<1x24xf32>
    %c0_21 = arith.constant 0 : index
    %c0_22 = arith.constant 0 : index
    %c0_23 = arith.constant 0 : index
    %27 = vector.load %arg7[%c0_21, %c0_22, %c0_23] : memref<1x1x24xf32, #tpu.memory_space<vmem>>, vector<1x1x24xf32>
    %28 = vector.shape_cast %27 : vector<1x1x24xf32> to vector<1x24xf32>
    %29 = vector.shape_cast %26 : vector<1x24xf32> to vector<1x1x24xf32>
    tpu.vector_store %arg7[%c0_21, %c0_22, %c0_23], %29 {strides = array<i32>} : memref<1x1x24xf32, #tpu.memory_space<vmem>>, vector<1x1x24xf32>,
    return
  }
  func.func @transform_0(%arg0: i32, %arg1: i32) -> (i32, i32, i32) {
    %c0_i32 = arith.constant 0 : i32
    %c0_i32_0 = arith.constant 0 : i32
    return %arg0, %arg1, %c0_i32 : i32, i32, i32
  }
  func.func @transform_1(%arg0: i32, %arg1: i32) -> (i32, i32) {
    %c0_i32 = arith.constant 0 : i32
    %c0_i32_0 = arith.constant 0 : i32
    %c0_i32_1 = arith.constant 0 : i32
    return %c0_i32, %c0_i32_0 : i32, i32
  }
  func.func @transform_2(%arg0: i32, %arg1: i32) -> (i32, i32) {
    %c0_i32 = arith.constant 0 : i32
    %c0_i32_0 = arith.constant 0 : i32
    %c0_i32_1 = arith.constant 0 : i32
    return %c0_i32, %c0_i32_0 : i32, i32
  }
  func.func @transform_3(%arg0: i32, %arg1: i32) -> (i32, i32, i32) {
    %c0_i32 = arith.constant 0 : i32
    %c0_i32_0 = arith.constant 0 : i32
    return %arg0, %arg1, %c0_i32 : i32, i32, i32
  }
  func.func @transform_4(%arg0: i32, %arg1: i32) -> (i32, i32, i32) {
    %c0_i32 = arith.constant 0 : i32
    %c0_i32_0 = arith.constant 0 : i32
    %c0_i32_1 = arith.constant 0 : i32
    return %arg0, %c0_i32, %c0_i32_0 : i32, i32, i32
  }
  func.func @transform_5(%arg0: i32, %arg1: i32) -> (i32, i32, i32) {
    %c0_i32 = arith.constant 0 : i32
    %c0_i32_0 = arith.constant 0 : i32
    %c0_i32_1 = arith.constant 0 : i32
    return %arg0, %c0_i32, %c0_i32_0 : i32, i32, i32
  }
}

module attributes {stable_mosaic.version = 11 : i64} {
  func.func @_pw_affine_stats_kernel(%arg0: i32, %arg1: i32, %arg2: memref<1x256x24xf32, #tpu.memory_space<vmem>>, %arg3: memref<1x1x24xf32, #tpu.memory_space<vmem>>, %arg4: memref<1x1x24xf32, #tpu.memory_space<vmem>>, %arg5: memref<24x4xf32, #tpu.memory_space<vmem>>, %arg6: memref<1x4xf32, #tpu.memory_space<vmem>>, %arg7: memref<1x256x4xf32, #tpu.memory_space<vmem>>, %arg8: memref<1x1x4xf32, #tpu.memory_space<vmem>>, %arg9: memref<1x1x4xf32, #tpu.memory_space<vmem>>) attributes {dimension_semantics = [#tpu.dimension_semantics<parallel>, #tpu.dimension_semantics<arbitrary>], iteration_bounds = array<i64: 2, 1>, scalar_prefetch = 0 : i64, scratch_operands = 0 : i64, tpu.core_type = #tpu.core_type<tc>, window_params = [{transform_indices = @transform_0, window_bounds = array<i64: 1, 256, 24>}, {transform_indices = @transform_1, window_bounds = array<i64: 1, 1, 24>}, {transform_indices = @transform_2, window_bounds = array<i64: 1, 1, 24>}, {pipeline_mode = #tpu.pipeline_mode<synchronous>, transform_indices = @transform_3, window_bounds = array<i64: 24, 4>}, {pipeline_mode = #tpu.pipeline_mode<synchronous>, transform_indices = @transform_4, window_bounds = array<i64: 1, 4>}, {transform_indices = @transform_5, window_bounds = array<i64: 1, 256, 4>}, {transform_indices = @transform_6, window_bounds = array<i64: 1, 1, 4>}, {transform_indices = @transform_7, window_bounds = array<i64: 1, 1, 4>}]} {
    %c0 = arith.constant 0 : index
    %c0_0 = arith.constant 0 : index
    %c0_1 = arith.constant 0 : index
    %0 = vector.load %arg2[%c0, %c0_0, %c0_1] : memref<1x256x24xf32, #tpu.memory_space<vmem>>, vector<1x256x24xf32>
    %1 = vector.shape_cast %0 : vector<1x256x24xf32> to vector<256x24xf32>
    %c0_2 = arith.constant 0 : index
    %c0_3 = arith.constant 0 : index
    %c0_4 = arith.constant 0 : index
    %2 = vector.load %arg3[%c0_2, %c0_3, %c0_4] : memref<1x1x24xf32, #tpu.memory_space<vmem>>, vector<1x1x24xf32>
    %3 = vector.shape_cast %2 : vector<1x1x24xf32> to vector<1x24xf32>
    %4 = vector.broadcast %3 : vector<1x24xf32> to vector<256x24xf32>
    %5 = arith.mulf %1, %4 : vector<256x24xf32>
    %c0_5 = arith.constant 0 : index
    %c0_6 = arith.constant 0 : index
    %c0_7 = arith.constant 0 : index
    %6 = vector.load %arg4[%c0_5, %c0_6, %c0_7] : memref<1x1x24xf32, #tpu.memory_space<vmem>>, vector<1x1x24xf32>
    %7 = vector.shape_cast %6 : vector<1x1x24xf32> to vector<1x24xf32>
    %8 = vector.broadcast %7 : vector<1x24xf32> to vector<256x24xf32>
    %9 = arith.addf %5, %8 : vector<256x24xf32>
    %cst = arith.constant 0.000000e+00 : f32
    %cst_8 = arith.constant 6.000000e+00 : f32
    %10 = vector.broadcast %cst : f32 to vector<256x24xf32>
    %11 = arith.maximumf %10, %9 : vector<256x24xf32>
    %12 = vector.broadcast %cst_8 : f32 to vector<256x24xf32>
    %13 = arith.minimumf %12, %11 : vector<256x24xf32>
    %c0_9 = arith.constant 0 : index
    %c0_10 = arith.constant 0 : index
    %14 = vector.load %arg5[%c0_9, %c0_10] : memref<24x4xf32, #tpu.memory_space<vmem>>, vector<24x4xf32>
    %cst_11 = arith.constant dense<0.000000e+00> : vector<256x4xf32>
    %15 = tpu.matmul %13, %14, %cst_11 {dimension_numbers = #tpu.dot_dimension_numbers<[1], [0], [0], [1], [0, 0, 1, 1], [], []>} : vector<256x24xf32>, vector<24x4xf32>, vector<256x4xf32> -> vector<256x4xf32>
    %c0_12 = arith.constant 0 : index
    %c0_13 = arith.constant 0 : index
    %16 = vector.load %arg6[%c0_12, %c0_13] : memref<1x4xf32, #tpu.memory_space<vmem>>, vector<1x4xf32>
    %17 = vector.broadcast %16 : vector<1x4xf32> to vector<256x4xf32>
    %18 = arith.addf %15, %17 : vector<256x4xf32>
    %c0_14 = arith.constant 0 : index
    %c0_15 = arith.constant 0 : index
    %c0_16 = arith.constant 0 : index
    %19 = vector.load %arg7[%c0_14, %c0_15, %c0_16] : memref<1x256x4xf32, #tpu.memory_space<vmem>>, vector<1x256x4xf32>
    %20 = vector.shape_cast %19 : vector<1x256x4xf32> to vector<256x4xf32>
    %21 = vector.shape_cast %18 : vector<256x4xf32> to vector<1x256x4xf32>
    tpu.vector_store %arg7[%c0_14, %c0_15, %c0_16], %21 {strides = array<i32>} : memref<1x256x4xf32, #tpu.memory_space<vmem>>, vector<1x256x4xf32>,
    %c0_i32 = arith.constant 0 : i32
    %22 = arith.cmpi eq, %arg1, %c0_i32 : i32
    %23 = arith.extui %22 : i1 to i32
    %c0_i32_17 = arith.constant 0 : i32
    %24 = arith.cmpi ne, %23, %c0_i32_17 : i32
    scf.if %24 {
      %cst_32 = arith.constant 0.000000e+00 : f32
      %42 = vector.broadcast %cst_32 : f32 to vector<1x1x4xf32>
      %c0_33 = arith.constant 0 : index
      %c0_34 = arith.constant 0 : index
      %c0_35 = arith.constant 0 : index
      %43 = vector.load %arg8[%c0_33, %c0_34, %c0_35] : memref<1x1x4xf32, #tpu.memory_space<vmem>>, vector<1x1x4xf32>
      tpu.vector_store %arg8[%c0_33, %c0_34, %c0_35], %42 {strides = array<i32>} : memref<1x1x4xf32, #tpu.memory_space<vmem>>, vector<1x1x4xf32>,
      %cst_36 = arith.constant 0.000000e+00 : f32
      %44 = vector.broadcast %cst_36 : f32 to vector<1x1x4xf32>
      %c0_37 = arith.constant 0 : index
      %c0_38 = arith.constant 0 : index
      %c0_39 = arith.constant 0 : index
      %45 = vector.load %arg9[%c0_37, %c0_38, %c0_39] : memref<1x1x4xf32, #tpu.memory_space<vmem>>, vector<1x1x4xf32>
      tpu.vector_store %arg9[%c0_37, %c0_38, %c0_39], %44 {strides = array<i32>} : memref<1x1x4xf32, #tpu.memory_space<vmem>>, vector<1x1x4xf32>,
    } else {
    }
    %c0_18 = arith.constant 0 : index
    %c0_19 = arith.constant 0 : index
    %c0_20 = arith.constant 0 : index
    %25 = vector.load %arg8[%c0_18, %c0_19, %c0_20] : memref<1x1x4xf32, #tpu.memory_space<vmem>>, vector<1x1x4xf32>
    %26 = vector.shape_cast %25 : vector<1x1x4xf32> to vector<1x4xf32>
    %cst_21 = arith.constant dense<0.000000e+00> : vector<4xf32>
    %27 = vector.multi_reduction <add>, %18, %cst_21 [0] : vector<256x4xf32> to vector<4xf32>
    %28 = vector.shape_cast %27 : vector<4xf32> to vector<1x4xf32>
    %29 = arith.addf %26, %28 : vector<1x4xf32>
    %c0_22 = arith.constant 0 : index
    %c0_23 = arith.constant 0 : index
    %c0_24 = arith.constant 0 : index
    %30 = vector.load %arg8[%c0_22, %c0_23, %c0_24] : memref<1x1x4xf32, #tpu.memory_space<vmem>>, vector<1x1x4xf32>
    %31 = vector.shape_cast %30 : vector<1x1x4xf32> to vector<1x4xf32>
    %32 = vector.shape_cast %29 : vector<1x4xf32> to vector<1x1x4xf32>
    tpu.vector_store %arg8[%c0_22, %c0_23, %c0_24], %32 {strides = array<i32>} : memref<1x1x4xf32, #tpu.memory_space<vmem>>, vector<1x1x4xf32>,
    %c0_25 = arith.constant 0 : index
    %c0_26 = arith.constant 0 : index
    %c0_27 = arith.constant 0 : index
    %33 = vector.load %arg9[%c0_25, %c0_26, %c0_27] : memref<1x1x4xf32, #tpu.memory_space<vmem>>, vector<1x1x4xf32>
    %34 = vector.shape_cast %33 : vector<1x1x4xf32> to vector<1x4xf32>
    %35 = arith.mulf %18, %18 : vector<256x4xf32>
    %cst_28 = arith.constant dense<0.000000e+00> : vector<4xf32>
    %36 = vector.multi_reduction <add>, %35, %cst_28 [0] : vector<256x4xf32> to vector<4xf32>
    %37 = vector.shape_cast %36 : vector<4xf32> to vector<1x4xf32>
    %38 = arith.addf %34, %37 : vector<1x4xf32>
    %c0_29 = arith.constant 0 : index
    %c0_30 = arith.constant 0 : index
    %c0_31 = arith.constant 0 : index
    %39 = vector.load %arg9[%c0_29, %c0_30, %c0_31] : memref<1x1x4xf32, #tpu.memory_space<vmem>>, vector<1x1x4xf32>
    %40 = vector.shape_cast %39 : vector<1x1x4xf32> to vector<1x4xf32>
    %41 = vector.shape_cast %38 : vector<1x4xf32> to vector<1x1x4xf32>
    tpu.vector_store %arg9[%c0_29, %c0_30, %c0_31], %41 {strides = array<i32>} : memref<1x1x4xf32, #tpu.memory_space<vmem>>, vector<1x1x4xf32>,
    return
  }
  func.func @transform_0(%arg0: i32, %arg1: i32) -> (i32, i32, i32) {
    %c0_i32 = arith.constant 0 : i32
    %c0_i32_0 = arith.constant 0 : i32
    return %arg0, %arg1, %c0_i32 : i32, i32, i32
  }
  func.func @transform_1(%arg0: i32, %arg1: i32) -> (i32, i32, i32) {
    %c0_i32 = arith.constant 0 : i32
    %c0_i32_0 = arith.constant 0 : i32
    %c0_i32_1 = arith.constant 0 : i32
    return %arg0, %c0_i32, %c0_i32_0 : i32, i32, i32
  }
  func.func @transform_2(%arg0: i32, %arg1: i32) -> (i32, i32, i32) {
    %c0_i32 = arith.constant 0 : i32
    %c0_i32_0 = arith.constant 0 : i32
    %c0_i32_1 = arith.constant 0 : i32
    return %arg0, %c0_i32, %c0_i32_0 : i32, i32, i32
  }
  func.func @transform_3(%arg0: i32, %arg1: i32) -> (i32, i32) {
    %c0_i32 = arith.constant 0 : i32
    %c0_i32_0 = arith.constant 0 : i32
    %c0_i32_1 = arith.constant 0 : i32
    return %c0_i32, %c0_i32_0 : i32, i32
  }
  func.func @transform_4(%arg0: i32, %arg1: i32) -> (i32, i32) {
    %c0_i32 = arith.constant 0 : i32
    %c0_i32_0 = arith.constant 0 : i32
    %c0_i32_1 = arith.constant 0 : i32
    return %c0_i32, %c0_i32_0 : i32, i32
  }
  func.func @transform_5(%arg0: i32, %arg1: i32) -> (i32, i32, i32) {
    %c0_i32 = arith.constant 0 : i32
    %c0_i32_0 = arith.constant 0 : i32
    return %arg0, %arg1, %c0_i32 : i32, i32, i32
  }
  func.func @transform_6(%arg0: i32, %arg1: i32) -> (i32, i32, i32) {
    %c0_i32 = arith.constant 0 : i32
    %c0_i32_0 = arith.constant 0 : i32
    %c0_i32_1 = arith.constant 0 : i32
    return %arg0, %c0_i32, %c0_i32_0 : i32, i32, i32
  }
  func.func @transform_7(%arg0: i32, %arg1: i32) -> (i32, i32, i32) {
    %c0_i32 = arith.constant 0 : i32
    %c0_i32_0 = arith.constant 0 : i32
    %c0_i32_1 = arith.constant 0 : i32
    return %arg0, %c0_i32, %c0_i32_0 : i32, i32, i32
  }
}

module attributes {stable_mosaic.version = 11 : i64} {
  func.func @_dw_kernel(%arg0: i32, %arg1: memref<1x16x16x24xf32, #tpu.memory_space<vmem>>, %arg2: memref<1x1x24xf32, #tpu.memory_space<vmem>>, %arg3: memref<1x1x24xf32, #tpu.memory_space<vmem>>, %arg4: memref<3x3x24xf32, #tpu.memory_space<vmem>>, %arg5: memref<1x1x24xf32, #tpu.memory_space<vmem>>, %arg6: memref<1x16x16x24xf32, #tpu.memory_space<vmem>>, %arg7: memref<1x1x24xf32, #tpu.memory_space<vmem>>, %arg8: memref<1x1x24xf32, #tpu.memory_space<vmem>>, %arg9: memref<18x32x24xf32, #tpu.memory_space<vmem>>) attributes {dimension_semantics = [#tpu.dimension_semantics<parallel>], iteration_bounds = array<i64: 2>, scalar_prefetch = 0 : i64, scratch_operands = 1 : i64, tpu.core_type = #tpu.core_type<tc>, window_params = [{transform_indices = @transform_0, window_bounds = array<i64: 1, 16, 16, 24>}, {transform_indices = @transform_1, window_bounds = array<i64: 1, 1, 24>}, {transform_indices = @transform_2, window_bounds = array<i64: 1, 1, 24>}, {pipeline_mode = #tpu.pipeline_mode<synchronous>, transform_indices = @transform_3, window_bounds = array<i64: 3, 3, 24>}, {pipeline_mode = #tpu.pipeline_mode<synchronous>, transform_indices = @transform_4, window_bounds = array<i64: 1, 1, 24>}, {transform_indices = @transform_5, window_bounds = array<i64: 1, 16, 16, 24>}, {transform_indices = @transform_6, window_bounds = array<i64: 1, 1, 24>}, {transform_indices = @transform_7, window_bounds = array<i64: 1, 1, 24>}]} {
    %c0 = arith.constant 0 : index
    %c0_0 = arith.constant 0 : index
    %c0_1 = arith.constant 0 : index
    %c0_2 = arith.constant 0 : index
    %0 = vector.load %arg1[%c0, %c0_0, %c0_1, %c0_2] : memref<1x16x16x24xf32, #tpu.memory_space<vmem>>, vector<1x16x16x24xf32>
    %1 = vector.shape_cast %0 : vector<1x16x16x24xf32> to vector<16x16x24xf32>
    %c0_3 = arith.constant 0 : index
    %c0_4 = arith.constant 0 : index
    %c0_5 = arith.constant 0 : index
    %2 = vector.load %arg2[%c0_3, %c0_4, %c0_5] : memref<1x1x24xf32, #tpu.memory_space<vmem>>, vector<1x1x24xf32>
    %3 = vector.shape_cast %2 : vector<1x1x24xf32> to vector<1x24xf32>
    %4 = vector.shape_cast %3 : vector<1x24xf32> to vector<1x1x24xf32>
    %5 = vector.broadcast %4 : vector<1x1x24xf32> to vector<16x16x24xf32>
    %6 = arith.mulf %1, %5 : vector<16x16x24xf32>
    %c0_6 = arith.constant 0 : index
    %c0_7 = arith.constant 0 : index
    %c0_8 = arith.constant 0 : index
    %7 = vector.load %arg3[%c0_6, %c0_7, %c0_8] : memref<1x1x24xf32, #tpu.memory_space<vmem>>, vector<1x1x24xf32>
    %8 = vector.shape_cast %7 : vector<1x1x24xf32> to vector<1x24xf32>
    %9 = vector.shape_cast %8 : vector<1x24xf32> to vector<1x1x24xf32>
    %10 = vector.broadcast %9 : vector<1x1x24xf32> to vector<16x16x24xf32>
    %11 = arith.addf %6, %10 : vector<16x16x24xf32>
    %cst = arith.constant 0.000000e+00 : f32
    %cst_9 = arith.constant 6.000000e+00 : f32
    %12 = vector.broadcast %cst : f32 to vector<16x16x24xf32>
    %13 = arith.maximumf %12, %11 : vector<16x16x24xf32>
    %14 = vector.broadcast %cst_9 : f32 to vector<16x16x24xf32>
    %15 = arith.minimumf %14, %13 : vector<16x16x24xf32>
    %cst_10 = arith.constant 0.000000e+00 : f32
    %16 = vector.broadcast %cst_10 : f32 to vector<1x32x24xf32>
    %cst_11 = arith.constant 0.000000e+00 : f32
    %17 = vector.broadcast %cst_11 : f32 to vector<16x1x24xf32>
    %c0_12 = arith.constant 0 : index
    %c0_13 = arith.constant 0 : index
    %c0_14 = arith.constant 0 : index
    %18 = vector.load %arg9[%c0_12, %c0_13, %c0_14] : memref<18x32x24xf32, #tpu.memory_space<vmem>>, vector<1x32x24xf32>
    tpu.vector_store %arg9[%c0_12, %c0_13, %c0_14], %16 {strides = array<i32>} : memref<18x32x24xf32, #tpu.memory_space<vmem>>, vector<1x32x24xf32>,
    %c17 = arith.constant 17 : index
    %c0_15 = arith.constant 0 : index
    %c0_16 = arith.constant 0 : index
    %19 = vector.load %arg9[%c17, %c0_15, %c0_16] : memref<18x32x24xf32, #tpu.memory_space<vmem>>, vector<1x32x24xf32>
    tpu.vector_store %arg9[%c17, %c0_15, %c0_16], %16 {strides = array<i32>} : memref<18x32x24xf32, #tpu.memory_space<vmem>>, vector<1x32x24xf32>,
    %c1 = arith.constant 1 : index
    %c7 = arith.constant 7 : index
    %c0_17 = arith.constant 0 : index
    %20 = vector.load %arg9[%c1, %c7, %c0_17] : memref<18x32x24xf32, #tpu.memory_space<vmem>>, vector<16x1x24xf32>
    tpu.vector_store %arg9[%c1, %c7, %c0_17], %17 {strides = array<i32>} : memref<18x32x24xf32, #tpu.memory_space<vmem>>, vector<16x1x24xf32>,
    %c1_18 = arith.constant 1 : index
    %c24 = arith.constant 24 : index
    %c0_19 = arith.constant 0 : index
    %21 = vector.load %arg9[%c1_18, %c24, %c0_19] : memref<18x32x24xf32, #tpu.memory_space<vmem>>, vector<16x1x24xf32>
    tpu.vector_store %arg9[%c1_18, %c24, %c0_19], %17 {strides = array<i32>} : memref<18x32x24xf32, #tpu.memory_space<vmem>>, vector<16x1x24xf32>,
    %c1_20 = arith.constant 1 : index
    %c8 = arith.constant 8 : index
    %c0_21 = arith.constant 0 : index
    %22 = vector.load %arg9[%c1_20, %c8, %c0_21] : memref<18x32x24xf32, #tpu.memory_space<vmem>>, vector<16x16x24xf32>
    tpu.vector_store %arg9[%c1_20, %c8, %c0_21], %15 {strides = array<i32>} : memref<18x32x24xf32, #tpu.memory_space<vmem>>, vector<16x16x24xf32>,
    %c0_22 = arith.constant 0 : index
    %c0_23 = arith.constant 0 : index
    %c0_24 = arith.constant 0 : index
    %23 = vector.load %arg4[%c0_22, %c0_23, %c0_24] : memref<3x3x24xf32, #tpu.memory_space<vmem>>, vector<3x3x24xf32>
    %cst_25 = arith.constant 0.000000e+00 : f32
    %24 = vector.broadcast %cst_25 : f32 to vector<16x16x24xf32>
    %c0_26 = arith.constant 0 : index
    %c7_27 = arith.constant 7 : index
    %c0_28 = arith.constant 0 : index
    %25 = vector.load %arg9[%c0_26, %c7_27, %c0_28] : memref<18x32x24xf32, #tpu.memory_space<vmem>>, vector<18x16x24xf32>
    %26 = vector.extract_strided_slice %23 {offsets = [0, 0, 0], sizes = [1, 1, 24], strides = [1, 1, 1]} : vector<3x3x24xf32> to vector<1x1x24xf32>
    %27 = vector.extract_strided_slice %25 {offsets = [0, 0, 0], sizes = [16, 16, 24], strides = [1, 1, 1]} : vector<18x16x24xf32> to vector<16x16x24xf32>
    %28 = vector.broadcast %26 : vector<1x1x24xf32> to vector<16x16x24xf32>
    %29 = arith.mulf %28, %27 : vector<16x16x24xf32>
    %30 = arith.addf %24, %29 : vector<16x16x24xf32>
    %31 = vector.extract_strided_slice %23 {offsets = [1, 0, 0], sizes = [1, 1, 24], strides = [1, 1, 1]} : vector<3x3x24xf32> to vector<1x1x24xf32>
    %32 = vector.extract_strided_slice %25 {offsets = [1, 0, 0], sizes = [16, 16, 24], strides = [1, 1, 1]} : vector<18x16x24xf32> to vector<16x16x24xf32>
    %33 = vector.broadcast %31 : vector<1x1x24xf32> to vector<16x16x24xf32>
    %34 = arith.mulf %33, %32 : vector<16x16x24xf32>
    %35 = arith.addf %30, %34 : vector<16x16x24xf32>
    %36 = vector.extract_strided_slice %23 {offsets = [2, 0, 0], sizes = [1, 1, 24], strides = [1, 1, 1]} : vector<3x3x24xf32> to vector<1x1x24xf32>
    %37 = vector.extract_strided_slice %25 {offsets = [2, 0, 0], sizes = [16, 16, 24], strides = [1, 1, 1]} : vector<18x16x24xf32> to vector<16x16x24xf32>
    %38 = vector.broadcast %36 : vector<1x1x24xf32> to vector<16x16x24xf32>
    %39 = arith.mulf %38, %37 : vector<16x16x24xf32>
    %40 = arith.addf %35, %39 : vector<16x16x24xf32>
    %c0_29 = arith.constant 0 : index
    %c8_30 = arith.constant 8 : index
    %c0_31 = arith.constant 0 : index
    %41 = vector.load %arg9[%c0_29, %c8_30, %c0_31] : memref<18x32x24xf32, #tpu.memory_space<vmem>>, vector<18x16x24xf32>
    %42 = vector.extract_strided_slice %23 {offsets = [0, 1, 0], sizes = [1, 1, 24], strides = [1, 1, 1]} : vector<3x3x24xf32> to vector<1x1x24xf32>
    %43 = vector.extract_strided_slice %41 {offsets = [0, 0, 0], sizes = [16, 16, 24], strides = [1, 1, 1]} : vector<18x16x24xf32> to vector<16x16x24xf32>
    %44 = vector.broadcast %42 : vector<1x1x24xf32> to vector<16x16x24xf32>
    %45 = arith.mulf %44, %43 : vector<16x16x24xf32>
    %46 = arith.addf %40, %45 : vector<16x16x24xf32>
    %47 = vector.extract_strided_slice %23 {offsets = [1, 1, 0], sizes = [1, 1, 24], strides = [1, 1, 1]} : vector<3x3x24xf32> to vector<1x1x24xf32>
    %48 = vector.extract_strided_slice %41 {offsets = [1, 0, 0], sizes = [16, 16, 24], strides = [1, 1, 1]} : vector<18x16x24xf32> to vector<16x16x24xf32>
    %49 = vector.broadcast %47 : vector<1x1x24xf32> to vector<16x16x24xf32>
    %50 = arith.mulf %49, %48 : vector<16x16x24xf32>
    %51 = arith.addf %46, %50 : vector<16x16x24xf32>
    %52 = vector.extract_strided_slice %23 {offsets = [2, 1, 0], sizes = [1, 1, 24], strides = [1, 1, 1]} : vector<3x3x24xf32> to vector<1x1x24xf32>
    %53 = vector.extract_strided_slice %41 {offsets = [2, 0, 0], sizes = [16, 16, 24], strides = [1, 1, 1]} : vector<18x16x24xf32> to vector<16x16x24xf32>
    %54 = vector.broadcast %52 : vector<1x1x24xf32> to vector<16x16x24xf32>
    %55 = arith.mulf %54, %53 : vector<16x16x24xf32>
    %56 = arith.addf %51, %55 : vector<16x16x24xf32>
    %c0_32 = arith.constant 0 : index
    %c9 = arith.constant 9 : index
    %c0_33 = arith.constant 0 : index
    %57 = vector.load %arg9[%c0_32, %c9, %c0_33] : memref<18x32x24xf32, #tpu.memory_space<vmem>>, vector<18x16x24xf32>
    %58 = vector.extract_strided_slice %23 {offsets = [0, 2, 0], sizes = [1, 1, 24], strides = [1, 1, 1]} : vector<3x3x24xf32> to vector<1x1x24xf32>
    %59 = vector.extract_strided_slice %57 {offsets = [0, 0, 0], sizes = [16, 16, 24], strides = [1, 1, 1]} : vector<18x16x24xf32> to vector<16x16x24xf32>
    %60 = vector.broadcast %58 : vector<1x1x24xf32> to vector<16x16x24xf32>
    %61 = arith.mulf %60, %59 : vector<16x16x24xf32>
    %62 = arith.addf %56, %61 : vector<16x16x24xf32>
    %63 = vector.extract_strided_slice %23 {offsets = [1, 2, 0], sizes = [1, 1, 24], strides = [1, 1, 1]} : vector<3x3x24xf32> to vector<1x1x24xf32>
    %64 = vector.extract_strided_slice %57 {offsets = [1, 0, 0], sizes = [16, 16, 24], strides = [1, 1, 1]} : vector<18x16x24xf32> to vector<16x16x24xf32>
    %65 = vector.broadcast %63 : vector<1x1x24xf32> to vector<16x16x24xf32>
    %66 = arith.mulf %65, %64 : vector<16x16x24xf32>
    %67 = arith.addf %62, %66 : vector<16x16x24xf32>
    %68 = vector.extract_strided_slice %23 {offsets = [2, 2, 0], sizes = [1, 1, 24], strides = [1, 1, 1]} : vector<3x3x24xf32> to vector<1x1x24xf32>
    %69 = vector.extract_strided_slice %57 {offsets = [2, 0, 0], sizes = [16, 16, 24], strides = [1, 1, 1]} : vector<18x16x24xf32> to vector<16x16x24xf32>
    %70 = vector.broadcast %68 : vector<1x1x24xf32> to vector<16x16x24xf32>
    %71 = arith.mulf %70, %69 : vector<16x16x24xf32>
    %72 = arith.addf %67, %71 : vector<16x16x24xf32>
    %c0_34 = arith.constant 0 : index
    %c0_35 = arith.constant 0 : index
    %c0_36 = arith.constant 0 : index
    %73 = vector.load %arg5[%c0_34, %c0_35, %c0_36] : memref<1x1x24xf32, #tpu.memory_space<vmem>>, vector<1x1x24xf32>
    %74 = vector.broadcast %73 : vector<1x1x24xf32> to vector<16x16x24xf32>
    %75 = arith.addf %72, %74 : vector<16x16x24xf32>
    %c0_37 = arith.constant 0 : index
    %c0_38 = arith.constant 0 : index
    %c0_39 = arith.constant 0 : index
    %c0_40 = arith.constant 0 : index
    %76 = vector.load %arg6[%c0_37, %c0_38, %c0_39, %c0_40] : memref<1x16x16x24xf32, #tpu.memory_space<vmem>>, vector<1x16x16x24xf32>
    %77 = vector.shape_cast %76 : vector<1x16x16x24xf32> to vector<16x16x24xf32>
    %78 = vector.shape_cast %75 : vector<16x16x24xf32> to vector<1x16x16x24xf32>
    tpu.vector_store %arg6[%c0_37, %c0_38, %c0_39, %c0_40], %78 {strides = array<i32>} : memref<1x16x16x24xf32, #tpu.memory_space<vmem>>, vector<1x16x16x24xf32>,
    %79 = arith.mulf %75, %75 : vector<16x16x24xf32>
    %cst_41 = arith.constant dense<0.000000e+00> : vector<16x24xf32>
    %80 = vector.multi_reduction <add>, %75, %cst_41 [1] : vector<16x16x24xf32> to vector<16x24xf32>
    %81 = vector.shape_cast %80 : vector<16x24xf32> to vector<16x1x24xf32>
    %cst_42 = arith.constant dense<0.000000e+00> : vector<1x24xf32>
    %82 = vector.multi_reduction <add>, %81, %cst_42 [0] : vector<16x1x24xf32> to vector<1x24xf32>
    %83 = vector.shape_cast %82 : vector<1x24xf32> to vector<1x1x24xf32>
    %cst_43 = arith.constant dense<0.000000e+00> : vector<16x24xf32>
    %84 = vector.multi_reduction <add>, %79, %cst_43 [1] : vector<16x16x24xf32> to vector<16x24xf32>
    %85 = vector.shape_cast %84 : vector<16x24xf32> to vector<16x1x24xf32>
    %cst_44 = arith.constant dense<0.000000e+00> : vector<1x24xf32>
    %86 = vector.multi_reduction <add>, %85, %cst_44 [0] : vector<16x1x24xf32> to vector<1x24xf32>
    %87 = vector.shape_cast %86 : vector<1x24xf32> to vector<1x1x24xf32>
    %88 = vector.shape_cast %83 : vector<1x1x24xf32> to vector<1x24xf32>
    %c0_45 = arith.constant 0 : index
    %c0_46 = arith.constant 0 : index
    %c0_47 = arith.constant 0 : index
    %89 = vector.load %arg7[%c0_45, %c0_46, %c0_47] : memref<1x1x24xf32, #tpu.memory_space<vmem>>, vector<1x1x24xf32>
    %90 = vector.shape_cast %89 : vector<1x1x24xf32> to vector<1x24xf32>
    %91 = vector.shape_cast %88 : vector<1x24xf32> to vector<1x1x24xf32>
    tpu.vector_store %arg7[%c0_45, %c0_46, %c0_47], %91 {strides = array<i32>} : memref<1x1x24xf32, #tpu.memory_space<vmem>>, vector<1x1x24xf32>,
    %92 = vector.shape_cast %87 : vector<1x1x24xf32> to vector<1x24xf32>
    %c0_48 = arith.constant 0 : index
    %c0_49 = arith.constant 0 : index
    %c0_50 = arith.constant 0 : index
    %93 = vector.load %arg8[%c0_48, %c0_49, %c0_50] : memref<1x1x24xf32, #tpu.memory_space<vmem>>, vector<1x1x24xf32>
    %94 = vector.shape_cast %93 : vector<1x1x24xf32> to vector<1x24xf32>
    %95 = vector.shape_cast %92 : vector<1x24xf32> to vector<1x1x24xf32>
    tpu.vector_store %arg8[%c0_48, %c0_49, %c0_50], %95 {strides = array<i32>} : memref<1x1x24xf32, #tpu.memory_space<vmem>>, vector<1x1x24xf32>,
    return
  }
  func.func @transform_0(%arg0: i32) -> (i32, i32, i32, i32) {
    %c0_i32 = arith.constant 0 : i32
    %c0_i32_0 = arith.constant 0 : i32
    %c0_i32_1 = arith.constant 0 : i32
    %c0_i32_2 = arith.constant 0 : i32
    return %arg0, %c0_i32, %c0_i32_0, %c0_i32_1 : i32, i32, i32, i32
  }
  func.func @transform_1(%arg0: i32) -> (i32, i32, i32) {
    %c0_i32 = arith.constant 0 : i32
    %c0_i32_0 = arith.constant 0 : i32
    %c0_i32_1 = arith.constant 0 : i32
    return %arg0, %c0_i32, %c0_i32_0 : i32, i32, i32
  }
  func.func @transform_2(%arg0: i32) -> (i32, i32, i32) {
    %c0_i32 = arith.constant 0 : i32
    %c0_i32_0 = arith.constant 0 : i32
    %c0_i32_1 = arith.constant 0 : i32
    return %arg0, %c0_i32, %c0_i32_0 : i32, i32, i32
  }
  func.func @transform_3(%arg0: i32) -> (i32, i32, i32) {
    %c0_i32 = arith.constant 0 : i32
    %c0_i32_0 = arith.constant 0 : i32
    %c0_i32_1 = arith.constant 0 : i32
    %c0_i32_2 = arith.constant 0 : i32
    return %c0_i32, %c0_i32_0, %c0_i32_1 : i32, i32, i32
  }
  func.func @transform_4(%arg0: i32) -> (i32, i32, i32) {
    %c0_i32 = arith.constant 0 : i32
    %c0_i32_0 = arith.constant 0 : i32
    %c0_i32_1 = arith.constant 0 : i32
    %c0_i32_2 = arith.constant 0 : i32
    return %c0_i32, %c0_i32_0, %c0_i32_1 : i32, i32, i32
  }
  func.func @transform_5(%arg0: i32) -> (i32, i32, i32, i32) {
    %c0_i32 = arith.constant 0 : i32
    %c0_i32_0 = arith.constant 0 : i32
    %c0_i32_1 = arith.constant 0 : i32
    %c0_i32_2 = arith.constant 0 : i32
    return %arg0, %c0_i32, %c0_i32_0, %c0_i32_1 : i32, i32, i32, i32
  }
  func.func @transform_6(%arg0: i32) -> (i32, i32, i32) {
    %c0_i32 = arith.constant 0 : i32
    %c0_i32_0 = arith.constant 0 : i32
    %c0_i32_1 = arith.constant 0 : i32
    return %arg0, %c0_i32, %c0_i32_0 : i32, i32, i32
  }
  func.func @transform_7(%arg0: i32) -> (i32, i32, i32) {
    %c0_i32 = arith.constant 0 : i32
    %c0_i32_0 = arith.constant 0 : i32
    %c0_i32_1 = arith.constant 0 : i32
    return %arg0, %c0_i32, %c0_i32_0 : i32, i32, i32
  }
}

module attributes {stable_mosaic.version = 11 : i64} {
  func.func @_affine_res_kernel(%arg0: i32, %arg1: i32, %arg2: memref<1x256x4xf32, #tpu.memory_space<vmem>>, %arg3: memref<1x1x4xf32, #tpu.memory_space<vmem>>, %arg4: memref<1x1x4xf32, #tpu.memory_space<vmem>>, %arg5: memref<1x256x4xf32, #tpu.memory_space<vmem>>, %arg6: memref<1x256x4xf32, #tpu.memory_space<vmem>>) attributes {dimension_semantics = [#tpu.dimension_semantics<parallel>, #tpu.dimension_semantics<parallel>], iteration_bounds = array<i64: 2, 1>, scalar_prefetch = 0 : i64, scratch_operands = 0 : i64, tpu.core_type = #tpu.core_type<tc>, window_params = [{transform_indices = @transform_0, window_bounds = array<i64: 1, 256, 4>}, {transform_indices = @transform_1, window_bounds = array<i64: 1, 1, 4>}, {transform_indices = @transform_2, window_bounds = array<i64: 1, 1, 4>}, {transform_indices = @transform_3, window_bounds = array<i64: 1, 256, 4>}, {transform_indices = @transform_4, window_bounds = array<i64: 1, 256, 4>}]} {
    %c0 = arith.constant 0 : index
    %c0_0 = arith.constant 0 : index
    %c0_1 = arith.constant 0 : index
    %0 = vector.load %arg2[%c0, %c0_0, %c0_1] : memref<1x256x4xf32, #tpu.memory_space<vmem>>, vector<1x256x4xf32>
    %1 = vector.shape_cast %0 : vector<1x256x4xf32> to vector<256x4xf32>
    %c0_2 = arith.constant 0 : index
    %c0_3 = arith.constant 0 : index
    %c0_4 = arith.constant 0 : index
    %2 = vector.load %arg3[%c0_2, %c0_3, %c0_4] : memref<1x1x4xf32, #tpu.memory_space<vmem>>, vector<1x1x4xf32>
    %3 = vector.shape_cast %2 : vector<1x1x4xf32> to vector<1x4xf32>
    %4 = vector.broadcast %3 : vector<1x4xf32> to vector<256x4xf32>
    %5 = arith.mulf %1, %4 : vector<256x4xf32>
    %c0_5 = arith.constant 0 : index
    %c0_6 = arith.constant 0 : index
    %c0_7 = arith.constant 0 : index
    %6 = vector.load %arg4[%c0_5, %c0_6, %c0_7] : memref<1x1x4xf32, #tpu.memory_space<vmem>>, vector<1x1x4xf32>
    %7 = vector.shape_cast %6 : vector<1x1x4xf32> to vector<1x4xf32>
    %8 = vector.broadcast %7 : vector<1x4xf32> to vector<256x4xf32>
    %9 = arith.addf %5, %8 : vector<256x4xf32>
    %c0_8 = arith.constant 0 : index
    %c0_9 = arith.constant 0 : index
    %c0_10 = arith.constant 0 : index
    %10 = vector.load %arg5[%c0_8, %c0_9, %c0_10] : memref<1x256x4xf32, #tpu.memory_space<vmem>>, vector<1x256x4xf32>
    %11 = vector.shape_cast %10 : vector<1x256x4xf32> to vector<256x4xf32>
    %12 = arith.addf %9, %11 : vector<256x4xf32>
    %c0_11 = arith.constant 0 : index
    %c0_12 = arith.constant 0 : index
    %c0_13 = arith.constant 0 : index
    %13 = vector.load %arg6[%c0_11, %c0_12, %c0_13] : memref<1x256x4xf32, #tpu.memory_space<vmem>>, vector<1x256x4xf32>
    %14 = vector.shape_cast %13 : vector<1x256x4xf32> to vector<256x4xf32>
    %15 = vector.shape_cast %12 : vector<256x4xf32> to vector<1x256x4xf32>
    tpu.vector_store %arg6[%c0_11, %c0_12, %c0_13], %15 {strides = array<i32>} : memref<1x256x4xf32, #tpu.memory_space<vmem>>, vector<1x256x4xf32>,
    return
  }
  func.func @transform_0(%arg0: i32, %arg1: i32) -> (i32, i32, i32) {
    %c0_i32 = arith.constant 0 : i32
    %c0_i32_0 = arith.constant 0 : i32
    return %arg0, %arg1, %c0_i32 : i32, i32, i32
  }
  func.func @transform_1(%arg0: i32, %arg1: i32) -> (i32, i32, i32) {
    %c0_i32 = arith.constant 0 : i32
    %c0_i32_0 = arith.constant 0 : i32
    %c0_i32_1 = arith.constant 0 : i32
    return %arg0, %c0_i32, %c0_i32_0 : i32, i32, i32
  }
  func.func @transform_2(%arg0: i32, %arg1: i32) -> (i32, i32, i32) {
    %c0_i32 = arith.constant 0 : i32
    %c0_i32_0 = arith.constant 0 : i32
    %c0_i32_1 = arith.constant 0 : i32
    return %arg0, %c0_i32, %c0_i32_0 : i32, i32, i32
  }
  func.func @transform_3(%arg0: i32, %arg1: i32) -> (i32, i32, i32) {
    %c0_i32 = arith.constant 0 : i32
    %c0_i32_0 = arith.constant 0 : i32
    return %arg0, %arg1, %c0_i32 : i32, i32, i32
  }
  func.func @transform_4(%arg0: i32, %arg1: i32) -> (i32, i32, i32) {
    %c0_i32 = arith.constant 0 : i32
    %c0_i32_0 = arith.constant 0 : i32
    return %arg0, %arg1, %c0_i32 : i32, i32, i32
  }
}

</mosaic_0001>

<llo_original>
// kernel: linear_bottleneck_forward.4
$region0: #{linear_bottleneck_forward.4}
  #allocation0 [shape = 'u32[]', space=smem, size = 0x4, offset = 0x4, fixed_abs, tag = 'smem constant byte address 0x4 - core index']
  #allocation1 [shape = 'u32[144,128]{1,0:T(1,128)}', space=vmem, size = 0x12000, scoped, tag = 'internal scratch']
  %s0 = inlined_call_operand.vmem [shape: f32[2,256,4], index: 0, kind: input, shape index: {}]
  %s1 = inlined_call_operand.vmem [shape: f32[4,24], index: 1, kind: input, shape index: {}]
  %s2 = inlined_call_operand.vmem [shape: f32[1,24], index: 2, kind: input, shape index: {}]
  %s3 = inlined_call_operand.vmem [shape: f32[2,256,24], index: 3, kind: output, shape index: {0}]
  %s4 = inlined_call_operand.vmem [shape: f32[2,1,24], index: 4, kind: output, shape index: {1}]
  %s5 = inlined_call_operand.vmem [shape: f32[2,1,24], index: 5, kind: output, shape index: {2}]
  %6 = xla_tuple %s3, %s4, %s5
  %s7 = sld [smem:[#allocation0]]
  $region65: #{linear_bottleneck_forward.4} parent=0
    _
  %s9 = ssub.s32 1, %s7
  %s10 = scalar_select 0, %s9, %s7
  loop: start=0, step=1, limit=4
  $region2: #{linear_bottleneck_forward.4} parent=0 // loop_pre_header
    _
  $region3: #{linear_bottleneck_forward.4} parent=0 // loop_header
    %s12 = sphi 0, %s16
    %p13 = scmp.ge.s32.totalorder %s12, 4
    %s19 = sphi 0, %s31
    %s20 = sphi 0, %s27
    %s21 = sphi 0, %s19
    %s22 = sphi 0, %s20
    %s23 = sphi 0, %s21
    %s24 = sphi 0, %s22
    %s36 = sphi 0, %s38
    %s39 = sphi 0, %s36
    %s40 = sphi 0, %s39
    %s56 = sphi 0, %s40
    %s60 = sphi 0, %s60
    %s62 = sphi 0, %s60
    %s63 = sphi 0, %s62
    %s77 = sphi 0, %s63
    %s81 = sphi 0, %s81
    %s83 = sphi 0, %s81
    %s84 = sphi 0, %s83
    %s98 = sphi 0, %s84
    %s106 = sphi 0, %s108
    %s109 = sphi 0, %s106
    %s110 = sphi 0, %s109
    %s126 = sphi 0, %s110
    %s132 = sphi 0, %s134
    %s135 = sphi 0, %s132
    %s136 = sphi 0, %s135
    %s152 = sphi 0, %s136
    %s158 = sphi 0, %s160
    %s161 = sphi 0, %s158
    %s162 = sphi 0, %s161
    %s178 = sphi 0, %s162
  $region4: #{linear_bottleneck_forward.4} parent=0 // loop_header_branch
    %15 = sbr.rel (%p13) target = $region8
  $region5: #{linear_bottleneck_forward.4} parent=0 // loop_body
    %s17 = ssub.s32 %s12, 1
    %s18 = ssub.s32 %s12, 2
    %s25 = sadd.s32 1, %s20
    %p26 = scmp.ge.s32.totalorder %s25, 1
    %s27 = scalar_select %p26, 0, %s25
    %s28 = sadd.s32 1, %s19
    %s29 = scalar_select %p26, %s28, %s19
    %p30 = scmp.ge.s32.totalorder %s29, 2
    %s31 = scalar_select %p30, 0, %s29
    %s32 = ssub.s32 %s19, %s31
    %s33 = ssub.s32 %s20, %s27
    %s34 = sor.u32 %s32, %s33
    %p35 = scmp.eq.s32.totalorder %s34, 0
    %s37 = sadd.s32 %s36, 1
    %s38 = scalar_select %p35, %s36, %s37
    %p41 = pneg %p35
    %p42 = scmp.eq.s32.totalorder %s12, 1
    %p43 = por %p41, %p42
    %p44 = scmp.ne.s32.totalorder %s36, %s39
    %p45 = scmp.eq.s32.totalorder %s12, 0
    %p46 = por %p44, %p45
    %p47 = scmp.ne.s32.totalorder %s36, %s39
    %p48 = scmp.eq.s32.totalorder %s17, 1
    %p49 = por %p47, %p48
    %p50 = scmp.ne.s32.totalorder %s39, %s40
    %p51 = scmp.eq.s32.totalorder %s17, 0
    %p52 = por %p50, %p51
    %p53 = scmp.ne.s32.totalorder %s39, %s40
    %p54 = scmp.eq.s32.totalorder %s18, 1
    %p55 = por %p53, %p54
    %p57 = scmp.ne.s32.totalorder %s40, %s56
    %p58 = scmp.eq.s32.totalorder %s18, 0
    %p59 = por %p57, %p58
    %s61 = sadd.s32 %s60, 1
    %p64 = scmp.eq.s32.totalorder %s12, 1
    %p65 = scmp.ne.s32.totalorder %s60, %s62
    %p66 = scmp.eq.s32.totalorder %s12, 0
    %p67 = por %p65, %p66
    %p68 = scmp.ne.s32.totalorder %s60, %s62
    %p69 = scmp.eq.s32.totalorder %s17, 1
    %p70 = por %p68, %p69
    %p71 = scmp.ne.s32.totalorder %s62, %s63
    %p72 = scmp.eq.s32.totalorder %s17, 0
    %p73 = por %p71, %p72
    %p74 = scmp.ne.s32.totalorder %s62, %s63
    %p75 = scmp.eq.s32.totalorder %s18, 1
    %p76 = por %p74, %p75
    %p78 = scmp.ne.s32.totalorder %s63, %s77
    %p79 = scmp.eq.s32.totalorder %s18, 0
    %p80 = por %p78, %p79
    %s82 = sadd.s32 %s81, 1
    %p85 = scmp.eq.s32.totalorder %s12, 1
    %p86 = scmp.ne.s32.totalorder %s81, %s83
    %p87 = scmp.eq.s32.totalorder %s12, 0
    %p88 = por %p86, %p87
    %p89 = scmp.ne.s32.totalorder %s81, %s83
    %p90 = scmp.eq.s32.totalorder %s17, 1
    %p91 = por %p89, %p90
    %p92 = scmp.ne.s32.totalorder %s83, %s84
    %p93 = scmp.eq.s32.totalorder %s17, 0
    %p94 = por %p92, %p93
    %p95 = scmp.ne.s32.totalorder %s83, %s84
    %p96 = scmp.eq.s32.totalorder %s18, 1
    %p97 = por %p95, %p96
    %p99 = scmp.ne.s32.totalorder %s84, %s98
    %p100 = scmp.eq.s32.totalorder %s18, 0
    %p101 = por %p99, %p100
    %s102 = ssub.s32 %s19, %s31
    %s103 = ssub.s32 %s20, %s27
    %s104 = sor.u32 %s102, %s103
    %p105 = scmp.eq.s32.totalorder %s104, 0
    %s107 = sadd.s32 %s106, 1
    %s108 = scalar_select %p105, %s106, %s107
    %p111 = pneg %p105
    %p112 = scmp.eq.s32.totalorder %s12, 1
    %p113 = por %p111, %p112
    %p114 = scmp.ne.s32.totalorder %s106, %s109
    %p115 = scmp.eq.s32.totalorder %s12, 0
    %p116 = por %p114, %p115
    %p117 = scmp.ne.s32.totalorder %s106, %s109
    %p118 = scmp.eq.s32.totalorder %s17, 1
    %p119 = por %p117, %p118
    %p120 = scmp.ne.s32.totalorder %s109, %s110
    %p121 = scmp.eq.s32.totalorder %s17, 0
    %p122 = por %p120, %p121
    %p123 = scmp.ne.s32.totalorder %s109, %s110
    %p124 = scmp.eq.s32.totalorder %s18, 1
    %p125 = por %p123, %p124
    %p127 = scmp.ne.s32.totalorder %s110, %s126
    %p128 = scmp.eq.s32.totalorder %s18, 0
    %p129 = por %p127, %p128
    %s130 = ssub.s32 %s19, %s31
    %p131 = scmp.eq.s32.totalorder %s130, 0
    %s133 = sadd.s32 %s132, 1
    %s134 = scalar_select %p131, %s132, %s133
    %p137 = pneg %p131
    %p138 = scmp.eq.s32.totalorder %s12, 1
    %p139 = por %p137, %p138
    %p140 = scmp.ne.s32.totalorder %s132, %s135
    %p141 = scmp.eq.s32.totalorder %s12, 0
    %p142 = por %p140, %p141
    %p143 = scmp.ne.s32.totalorder %s132, %s135
    %p144 = scmp.eq.s32.totalorder %s17, 1
    %p145 = por %p143, %p144
    %p146 = scmp.ne.s32.totalorder %s135, %s136
    %p147 = scmp.eq.s32.totalorder %s17, 0
    %p148 = por %p146, %p147
    %p149 = scmp.ne.s32.totalorder %s135, %s136
    %p150 = scmp.eq.s32.totalorder %s18, 1
    %p151 = por %p149, %p150
    %p153 = scmp.ne.s32.totalorder %s136, %s152
    %p154 = scmp.eq.s32.totalorder %s18, 0
    %p155 = por %p153, %p154
    %s156 = ssub.s32 %s19, %s31
    %p157 = scmp.eq.s32.totalorder %s156, 0
    %s159 = sadd.s32 %s158, 1
    %s160 = scalar_select %p157, %s158, %s159
    %p163 = pneg %p157
    %p164 = scmp.eq.s32.totalorder %s12, 1
    %p165 = por %p163, %p164
    %p166 = scmp.ne.s32.totalorder %s158, %s161
    %p167 = scmp.eq.s32.totalorder %s12, 0
    %p168 = por %p166, %p167
    %p169 = scmp.ne.s32.totalorder %s158, %s161
    %p170 = scmp.eq.s32.totalorder %s17, 1
    %p171 = por %p169, %p170
    %p172 = scmp.ne.s32.totalorder %s161, %s162
    %p173 = scmp.eq.s32.totalorder %s17, 0
    %p174 = por %p172, %p173
    %p175 = scmp.ne.s32.totalorder %s161, %s162
    %p176 = scmp.eq.s32.totalorder %s18, 1
    %p177 = por %p175, %p176
    %p179 = scmp.ne.s32.totalorder %s162, %s178
    %p180 = scmp.eq.s32.totalorder %s18, 0
    %p181 = por %p179, %p180
    %p182 = scmp.le.s32.totalorder 1, %s12
    %p183 = scmp.lt.s32.totalorder %s12, 3
    %p184 = pnand %p182, %p183
    %p185 = pneg %p184
    // Predicated region
    $region9: #{linear_bottleneck_forward.4} parent=5 // pred_check
      _
    $region10: #{linear_bottleneck_forward.4} parent=5 // pred_check_branch
      %187 = sbr.rel (%p184) target = $region12
    $region11: #{linear_bottleneck_forward.4} parent=5 // pred_region
      %s188 = ssub.s32 %s12, 1
      // Predicated region
      $region13: #{linear_bottleneck_forward.4} parent=11 // pred_check
        %p189 = pneg %p73
      $region14: #{linear_bottleneck_forward.4} parent=11 // pred_check_branch
        %191 = sbr.rel (%p189) target = $region16
      $region15: #{linear_bottleneck_forward.4} parent=11 // pred_region
        _
      $region16: #{linear_bottleneck_forward.4} parent=11 // pred_fallthru
        _
      // Predicated region
      $region17: #{linear_bottleneck_forward.4} parent=11 // pred_check
        %p192 = pneg %p94
      $region18: #{linear_bottleneck_forward.4} parent=11 // pred_check_branch
        %194 = sbr.rel (%p192) target = $region20
      $region19: #{linear_bottleneck_forward.4} parent=11 // pred_region
        _
      $region20: #{linear_bottleneck_forward.4} parent=11 // pred_fallthru
        _
    $region12: #{linear_bottleneck_forward.4} parent=5 // pred_fallthru
      _
    %p195 = scmp.lt.s32.totalorder %s12, 2
    // Predicated region
    $region21: #{linear_bottleneck_forward.4} parent=5 // pred_check
      %p196 = pneg %p195
    $region22: #{linear_bottleneck_forward.4} parent=5 // pred_check_branch
      %198 = sbr.rel (%p196) target = $region24
    $region23: #{linear_bottleneck_forward.4} parent=5 // pred_region
      // Predicated region
      $region25: #{linear_bottleneck_forward.4} parent=23 // pred_check
        %p199 = pneg %p46
      $region26: #{linear_bottleneck_forward.4} parent=23 // pred_check_branch
        %201 = sbr.rel (%p199) target = $region28
      $region27: #{linear_bottleneck_forward.4} parent=23 // pred_region
        %s202 = smul.u32 32, %s20
        %p203 = scmp.lt.s32.totalorder %s19, 1
        %s204 = scalar_select %p203, %s19, 1
        %p205 = scmp.lt.s32.totalorder %s202, 31
        %s206 = scalar_select %p205, %s202, 31
        %s207 = smul.addr %s204, 32
        %s208 = sadd.s32 %s206, %s207
        %s209 = smul.addr %s208, 8
        %s210 = scalar_lea.vmem %s0, %s209
        %s211 = smul.u32 32, %s20
      $region28: #{linear_bottleneck_forward.4} parent=23 // pred_fallthru
        _
    $region24: #{linear_bottleneck_forward.4} parent=5 // pred_fallthru
      _
    %p212 = scmp.le.s32.totalorder 1, %s12
    %p213 = scmp.lt.s32.totalorder %s12, 3
    %p214 = pnand %p212, %p213
    %p215 = pneg %p214
    // Predicated region
    $region29: #{linear_bottleneck_forward.4} parent=5 // pred_check
      _
    $region30: #{linear_bottleneck_forward.4} parent=5 // pred_check_branch
      %217 = sbr.rel (%p214) target = $region32
    $region31: #{linear_bottleneck_forward.4} parent=5 // pred_region
      %s218 = ssub.s32 %s12, 1
      %s219 = smul.u32 32, %s22
      %p220 = scmp.lt.s32.totalorder %s21, 1
      %s221 = scalar_select %p220, %s21, 1
      %p222 = scmp.lt.s32.totalorder %s219, 31
      %s223 = scalar_select %p222, %s219, 31
      %s224 = smul.addr %s221, 32
      %s225 = sadd.s32 %s223, %s224
      %s226 = smul.addr %s225, 8
      %s227 = scalar_lea.vmem %s0, %s226
      %p228 = pneg %p52
      %p229 = pneg %p49
      %p230 = pneg %p73
      %p231 = pneg %p70
      %p232 = pneg %p94
      %p233 = pneg %p91
      %p234 = pneg %p122
      %p235 = pneg %p119
      %s236 = smul.u32 32, %s22
      %p237 = scmp.lt.s32.totalorder %s21, 1
      %s238 = scalar_select %p237, %s21, 1
      %p239 = scmp.lt.s32.totalorder %s236, 31
      %s240 = scalar_select %p239, %s236, 31
      %s241 = smul.addr %s238, 32
      %s242 = sadd.s32 %s240, %s241
      %s243 = smul.addr %s242, 8
      %s244 = scalar_lea.vmem %s3, %s243
      %p245 = pneg %p148
      %p246 = pneg %p145
      %p247 = scmp.lt.s32.totalorder %s21, 1
      %s248 = scalar_select %p247, %s21, 1
      %s249 = scalar_lea.vmem %s4, %s248
      %p250 = pneg %p174
      %p251 = pneg %p171
      %p252 = scmp.lt.s32.totalorder %s21, 1
      %s253 = scalar_select %p252, %s21, 1
      %s254 = scalar_lea.vmem %s5, %s253
      %s255 = smul.u32 32, %s22
      %p256 = scmp.lt.s32.totalorder %s21, 1
      %s257 = scalar_select %p256, %s21, 1
      %p258 = scmp.lt.s32.totalorder %s255, 31
      %s259 = scalar_select %p258, %s255, 31
      %s260 = smul.addr %s257, 32
      %s261 = sadd.s32 %s259, %s260
      %s262 = smul.addr %s261, 8
      %s263 = scalar_lea.vmem %s0, %s262
      %s264 = smul.u32 32, %s22
      %s265 = smul.u32 32, %s22
      %p266 = scmp.lt.s32.totalorder %s21, 1
      %s267 = scalar_select %p266, %s21, 1
      %p268 = scmp.lt.s32.totalorder %s265, 31
      %s269 = scalar_select %p268, %s265, 31
      %s270 = smul.addr %s267, 32
      %s271 = sadd.s32 %s269, %s270
      %s272 = smul.addr %s271, 8
      %s273 = scalar_lea.vmem %s3, %s272
      %s274 = smul.u32 32, %s22
      %p275 = scmp.lt.s32.totalorder %s21, 1
      %s276 = scalar_select %p275, %s21, 1
      %s277 = scalar_lea.vmem %s4, %s276
      %p278 = scmp.lt.s32.totalorder %s21, 1
      %s279 = scalar_select %p278, %s21, 1
      %s280 = scalar_lea.vmem %s5, %s279
      %v281 = vld [vmem:[%s263] sm:$0xff]
      %v282 = vld [vmem:[%s263 + $0x8] sm:$0xff]
      %v283 = vld [vmem:[%s263 + $0x10] sm:$0xff]
      %v284 = vld [vmem:[%s263 + $0x18] sm:$0xff]
      %v285 = vld [vmem:[%s263 + $0x20] sm:$0xff]
      %v286 = vld [vmem:[%s263 + $0x28] sm:$0xff]
      %v287 = vld [vmem:[%s263 + $0x30] sm:$0xff]
      %v288 = vld [vmem:[%s263 + $0x38] sm:$0xff]
      %v289 = vld [vmem:[%s263 + $0x40] sm:$0xff]
      %v290 = vld [vmem:[%s263 + $0x48] sm:$0xff]
      %v291 = vld [vmem:[%s263 + $0x50] sm:$0xff]
      %v292 = vld [vmem:[%s263 + $0x58] sm:$0xff]
      %v293 = vld [vmem:[%s263 + $0x60] sm:$0xff]
      %v294 = vld [vmem:[%s263 + $0x68] sm:$0xff]
      %v295 = vld [vmem:[%s263 + $0x70] sm:$0xff]
      %v296 = vld [vmem:[%s263 + $0x78] sm:$0xff]
      %v297 = vld [vmem:[%s263 + $0x80] sm:$0xff]
      %v298 = vld [vmem:[%s263 + $0x88] sm:$0xff]
      %v299 = vld [vmem:[%s263 + $0x90] sm:$0xff]
      %v300 = vld [vmem:[%s263 + $0x98] sm:$0xff]
      %v301 = vld [vmem:[%s263 + $0xa0] sm:$0xff]
      %v302 = vld [vmem:[%s263 + $0xa8] sm:$0xff]
      %v303 = vld [vmem:[%s263 + $0xb0] sm:$0xff]
      %v304 = vld [vmem:[%s263 + $0xb8] sm:$0xff]
      %v305 = vld [vmem:[%s263 + $0xc0] sm:$0xff]
      %v306 = vld [vmem:[%s263 + $0xc8] sm:$0xff]
      %v307 = vld [vmem:[%s263 + $0xd0] sm:$0xff]
      %v308 = vld [vmem:[%s263 + $0xd8] sm:$0xff]
      %v309 = vld [vmem:[%s263 + $0xe0] sm:$0xff]
      %v310 = vld [vmem:[%s263 + $0xe8] sm:$0xff]
      %v311 = vld [vmem:[%s263 + $0xf0] sm:$0xff]
      %v312 = vld [vmem:[%s263 + $0xf8] sm:$0xff]
      %v313 = vld [vmem:[%s1] sm:$0xf]
      %v314 = vld [vmem:[%s2] sm:$0x1]
      %v316 = vlaneseq
      %v317 = vshrl.u32 %v316, 7
      %v318 = vsub.s32 0, %v317
      %v319 = vrot.slane %v314, %v318
      %vm321 = vcmask 31744
      %v323 = vsel %vm321, %v281, 0
      %v326 = vsel %vm321, %v282, 0
      %v329 = vsel %vm321, %v283, 0
      %v332 = vsel %vm321, %v284, 0
      %v335 = vsel %vm321, %v285, 0
      %v338 = vsel %vm321, %v286, 0
      %v341 = vsel %vm321, %v287, 0
      %v344 = vsel %vm321, %v288, 0
      %v347 = vsel %vm321, %v289, 0
      %v350 = vsel %vm321, %v290, 0
      %v353 = vsel %vm321, %v291, 0
      %v356 = vsel %vm321, %v292, 0
      %v359 = vsel %vm321, %v293, 0
      %v362 = vsel %vm321, %v294, 0
      %v365 = vsel %vm321, %v295, 0
      %v368 = vsel %vm321, %v296, 0
      %v371 = vsel %vm321, %v297, 0
      %v374 = vsel %vm321, %v298, 0
      %v377 = vsel %vm321, %v299, 0
      %v380 = vsel %vm321, %v300, 0
      %v383 = vsel %vm321, %v301, 0
      %v386 = vsel %vm321, %v302, 0
      %v389 = vsel %vm321, %v303, 0
      %v392 = vsel %vm321, %v304, 0
      %v395 = vsel %vm321, %v305, 0
      %v398 = vsel %vm321, %v306, 0
      %v401 = vsel %vm321, %v307, 0
      %v404 = vsel %vm321, %v308, 0
      %v407 = vsel %vm321, %v309, 0
      %v410 = vsel %vm321, %v310, 0
      %v413 = vsel %vm321, %v311, 0
      %v416 = vsel %vm321, %v312, 0
      %vm418 = vcmask 1043456
      %v420 = vsel %vm418, %v313, 0
      %422 = vmatprep.subr.mxu0 0.0
      %423 = vmatpush1.msra.mxu0 0.0
      %424 = vmatprep.subr.mxu0 0.0
      %425 = vmatpush1.msra.mxu0 0.0
      %426 = vmatprep.subr.mxu0 0.0
      %427 = vmatpush1.msra.mxu0 0.0
      %428 = vmatprep.subr.mxu0 0.0
      %429 = vmatpush1.msra.mxu0 0.0
      %430 = vmatprep.subr.mxu0 0.0
      %431 = vmatpush1.msra.mxu0 0.0
      %432 = vmatprep.subr.mxu0 0.0
      %433 = vmatpush1.msra.mxu0 0.0
      %434 = vmatprep.subr.mxu0 0.0
      %435 = vmatpush1.msra.mxu0 0.0
      %436 = vmatprep.subr.mxu0 0.0
      %437 = vmatpush1.msra.mxu0 0.0
      %438 = vmatprep.subr.mxu0 0.0
      %439 = vmatpush1.msra.mxu0 0.0
      %440 = vmatprep.subr.mxu0 0.0
      %441 = vmatpush1.msra.mxu0 0.0
      %442 = vmatprep.subr.mxu0 0.0
      %443 = vmatpush1.msra.mxu0 0.0
      %444 = vmatprep.subr.mxu0 0.0
      %445 = vmatpush1.msra.mxu0 0.0
      %446 = vmatprep.subr.mxu0 0.0
      %447 = vmatpush1.msra.mxu0 0.0
      %448 = vmatprep.subr.mxu0 0.0
      %449 = vmatpush1.msra.mxu0 0.0
      %450 = vmatprep.subr.mxu0 0.0
      %451 = vmatpush1.msra.mxu0 0.0
      %452 = vmatprep.subr.mxu0 0.0
      %453 = vmatpush1.msra.mxu0 %v420
      %454 = vmatprep.subr.mxu0 0.0
      %455 = vmatpush2.msra.mxu0 0.0
      %456 = vmatprep.subr.mxu0 0.0
      %457 = vmatpush2.msra.mxu0 0.0
      %458 = vmatprep.subr.mxu0 0.0
      %459 = vmatpush2.msra.mxu0 0.0
      %460 = vmatprep.subr.mxu0 0.0
      %461 = vmatpush2.msra.mxu0 0.0
      %462 = vmatprep.subr.mxu0 0.0
      %463 = vmatpush2.msra.mxu0 0.0
      %464 = vmatprep.subr.mxu0 0.0
      %465 = vmatpush2.msra.mxu0 0.0
      %466 = vmatprep.subr.mxu0 0.0
      %467 = vmatpush2.msra.mxu0 0.0
      %468 = vmatprep.subr.mxu0 0.0
      %469 = vmatpush2.msra.mxu0 0.0
      %470 = vmatprep.subr.mxu0 0.0
      %471 = vmatpush2.msra.mxu0 0.0
      %472 = vmatprep.subr.mxu0 0.0
      %473 = vmatpush2.msra.mxu0 0.0
      %474 = vmatprep.subr.mxu0 0.0
      %475 = vmatpush2.msra.mxu0 0.0
      %476 = vmatprep.subr.mxu0 0.0
      %477 = vmatpush2.msra.mxu0 0.0
      %478 = vmatprep.subr.mxu0 0.0
      %479 = vmatpush2.msra.mxu0 0.0
      %480 = vmatprep.subr.mxu0 0.0
      %481 = vmatpush2.msra.mxu0 0.0
      %482 = vmatprep.subr.mxu0 0.0
      %483 = vmatpush2.msra.mxu0 0.0
      %484 = vmatprep.subr.mxu0 0.0
      %485 = vmatpush2.msra.mxu0 0.0
      %486 = vmatprep.mubr.f32.mxu0 0.0
      %487 = vmatmul.mubr.f32.gmra.mxu0 %v323
      %v488 = vpop.f32.mrf.mxu0
      %v489 = vadd.f32 %v319, %v488
      %v490 = vpop.f32.mrf.mxu0
      %491 = vmatprep.mubr.f32.mxu0 0.0
      %492 = vmatmul.mubr.f32.gmra.mxu0 %v326
      %v493 = vpop.f32.mrf.mxu0
      %v494 = vadd.f32 %v319, %v493
      %v495 = vpop.f32.mrf.mxu0
      %496 = vmatprep.mubr.f32.mxu0 0.0
      %497 = vmatmul.mubr.f32.gmra.mxu0 %v329
      %v498 = vpop.f32.mrf.mxu0
      %v499 = vadd.f32 %v319, %v498
      %v500 = vpop.f32.mrf.mxu0
      %501 = vmatprep.mubr.f32.mxu0 0.0
      %502 = vmatmul.mubr.f32.gmra.mxu0 %v332
      %v503 = vpop.f32.mrf.mxu0
      %v504 = vadd.f32 %v319, %v503
      %v505 = vpop.f32.mrf.mxu0
      %506 = vmatprep.mubr.f32.mxu0 0.0
      %507 = vmatmul.mubr.f32.gmra.mxu0 %v335
      %v508 = vpop.f32.mrf.mxu0
      %v509 = vadd.f32 %v319, %v508
      %v510 = vpop.f32.mrf.mxu0
      %511 = vmatprep.mubr.f32.mxu0 0.0
      %512 = vmatmul.mubr.f32.gmra.mxu0 %v338
      %v513 = vpop.f32.mrf.mxu0
      %v514 = vadd.f32 %v319, %v513
      %v515 = vpop.f32.mrf.mxu0
      %516 = vmatprep.mubr.f32.mxu0 0.0
      %517 = vmatmul.mubr.f32.gmra.mxu0 %v341
      %v518 = vpop.f32.mrf.mxu0
      %v519 = vadd.f32 %v319, %v518
      %v520 = vpop.f32.mrf.mxu0
      %521 = vmatprep.mubr.f32.mxu0 0.0
      %522 = vmatmul.mubr.f32.gmra.mxu0 %v344
      %v523 = vpop.f32.mrf.mxu0
      %v524 = vadd.f32 %v319, %v523
      %v525 = vpop.f32.mrf.mxu0
      %526 = vmatprep.mubr.f32.mxu0 0.0
      %527 = vmatmul.mubr.f32.gmra.mxu0 %v347
      %v528 = vpop.f32.mrf.mxu0
      %v529 = vadd.f32 %v319, %v528
      %v530 = vpop.f32.mrf.mxu0
      %531 = vmatprep.mubr.f32.mxu0 0.0
      %532 = vmatmul.mubr.f32.gmra.mxu0 %v350
      %v533 = vpop.f32.mrf.mxu0
      %v534 = vadd.f32 %v319, %v533
      %v535 = vpop.f32.mrf.mxu0
      %536 = vmatprep.mubr.f32.mxu0 0.0
      %537 = vmatmul.mubr.f32.gmra.mxu0 %v353
      %v538 = vpop.f32.mrf.mxu0
      %v539 = vadd.f32 %v319, %v538
      %v540 = vpop.f32.mrf.mxu0
      %541 = vmatprep.mubr.f32.mxu0 0.0
      %542 = vmatmul.mubr.f32.gmra.mxu0 %v356
      %v543 = vpop.f32.mrf.mxu0
      %v544 = vadd.f32 %v319, %v543
      %v545 = vpop.f32.mrf.mxu0
      %546 = vmatprep.mubr.f32.mxu0 0.0
      %547 = vmatmul.mubr.f32.gmra.mxu0 %v359
      %v548 = vpop.f32.mrf.mxu0
      %v549 = vadd.f32 %v319, %v548
      %v550 = vpop.f32.mrf.mxu0
      %551 = vmatprep.mubr.f32.mxu0 0.0
      %552 = vmatmul.mubr.f32.gmra.mxu0 %v362
      %v553 = vpop.f32.mrf.mxu0
      %v554 = vadd.f32 %v319, %v553
      %v555 = vpop.f32.mrf.mxu0
      %556 = vmatprep.mubr.f32.mxu0 0.0
      %557 = vmatmul.mubr.f32.gmra.mxu0 %v365
      %v558 = vpop.f32.mrf.mxu0
      %v559 = vadd.f32 %v319, %v558
      %v560 = vpop.f32.mrf.mxu0
      %561 = vmatprep.mubr.f32.mxu0 0.0
      %562 = vmatmul.mubr.f32.gmra.mxu0 %v368
      %v563 = vpop.f32.mrf.mxu0
      %v564 = vadd.f32 %v319, %v563
      %v565 = vpop.f32.mrf.mxu0
      %566 = vmatprep.mubr.f32.mxu0 0.0
      %567 = vmatmul.mubr.f32.gmra.mxu0 %v371
      %v568 = vpop.f32.mrf.mxu0
      %v569 = vadd.f32 %v319, %v568
      %v570 = vpop.f32.mrf.mxu0
      %571 = vmatprep.mubr.f32.mxu0 0.0
      %572 = vmatmul.mubr.f32.gmra.mxu0 %v374
      %v573 = vpop.f32.mrf.mxu0
      %v574 = vadd.f32 %v319, %v573
      %v575 = vpop.f32.mrf.mxu0
      %576 = vmatprep.mubr.f32.mxu0 0.0
      %577 = vmatmul.mubr.f32.gmra.mxu0 %v377
      %v578 = vpop.f32.mrf.mxu0
      %v579 = vadd.f32 %v319, %v578
      %v580 = vpop.f32.mrf.mxu0
      %581 = vmatprep.mubr.f32.mxu0 0.0
      %582 = vmatmul.mubr.f32.gmra.mxu0 %v380
      %v583 = vpop.f32.mrf.mxu0
      %v584 = vadd.f32 %v319, %v583
      %v585 = vpop.f32.mrf.mxu0
      %586 = vmatprep.mubr.f32.mxu0 0.0
      %587 = vmatmul.mubr.f32.gmra.mxu0 %v383
      %v588 = vpop.f32.mrf.mxu0
      %v589 = vadd.f32 %v319, %v588
      %v590 = vpop.f32.mrf.mxu0
      %591 = vmatprep.mubr.f32.mxu0 0.0
      %592 = vmatmul.mubr.f32.gmra.mxu0 %v386
      %v593 = vpop.f32.mrf.mxu0
      %v594 = vadd.f32 %v319, %v593
      %v595 = vpop.f32.mrf.mxu0
      %596 = vmatprep.mubr.f32.mxu0 0.0
      %597 = vmatmul.mubr.f32.gmra.mxu0 %v389
      %v598 = vpop.f32.mrf.mxu0
      %v599 = vadd.f32 %v319, %v598
      %v600 = vpop.f32.mrf.mxu0
      %601 = vmatprep.mubr.f32.mxu0 0.0
      %602 = vmatmul.mubr.f32.gmra.mxu0 %v392
      %v603 = vpop.f32.mrf.mxu0
      %v604 = vadd.f32 %v319, %v603
      %v605 = vpop.f32.mrf.mxu0
      %606 = vmatprep.mubr.f32.mxu0 0.0
      %607 = vmatmul.mubr.f32.gmra.mxu0 %v395
      %v608 = vpop.f32.mrf.mxu0
      %v609 = vadd.f32 %v319, %v608
      %v610 = vpop.f32.mrf.mxu0
      %611 = vmatprep.mubr.f32.mxu0 0.0
      %612 = vmatmul.mubr.f32.gmra.mxu0 %v398
      %v613 = vpop.f32.mrf.mxu0
      %v614 = vadd.f32 %v319, %v613
      %v615 = vpop.f32.mrf.mxu0
      %616 = vmatprep.mubr.f32.mxu0 0.0
      %617 = vmatmul.mubr.f32.gmra.mxu0 %v401
      %v618 = vpop.f32.mrf.mxu0
      %v619 = vadd.f32 %v319, %v618
      %v620 = vpop.f32.mrf.mxu0
      %621 = vmatprep.mubr.f32.mxu0 0.0
      %622 = vmatmul.mubr.f32.gmra.mxu0 %v404
      %v623 = vpop.f32.mrf.mxu0
      %v624 = vadd.f32 %v319, %v623
      %v625 = vpop.f32.mrf.mxu0
      %626 = vmatprep.mubr.f32.mxu0 0.0
      %627 = vmatmul.mubr.f32.gmra.mxu0 %v407
      %v628 = vpop.f32.mrf.mxu0
      %v629 = vadd.f32 %v319, %v628
      %v630 = vpop.f32.mrf.mxu0
      %631 = vmatprep.mubr.f32.mxu0 0.0
      %632 = vmatmul.mubr.f32.gmra.mxu0 %v410
      %v633 = vpop.f32.mrf.mxu0
      %v634 = vadd.f32 %v319, %v633
      %v635 = vpop.f32.mrf.mxu0
      %636 = vmatprep.mubr.f32.mxu0 0.0
      %637 = vmatmul.mubr.f32.gmra.mxu0 %v413
      %v638 = vpop.f32.mrf.mxu0
      %v639 = vadd.f32 %v319, %v638
      %v640 = vpop.f32.mrf.mxu0
      %641 = vmatprep.mubr.f32.mxu0 0.0
      %642 = vmatmul.mubr.f32.gmra.mxu0 %v416
      %v643 = vpop.f32.mrf.mxu0
      %v644 = vadd.f32 %v319, %v643
      %v645 = vpop.f32.mrf.mxu0
      %646 = vdwg.mxu0
      %vm647 = vcmask 195584
      %648 = vst.msk [vmem:[%s273] sm:$0xff] %vm647, %v489
      %649 = vst.msk [vmem:[%s273 + $0x8] sm:$0xff] %vm647, %v494
      %650 = vst.msk [vmem:[%s273 + $0x10] sm:$0xff] %vm647, %v499
      %651 = vst.msk [vmem:[%s273 + $0x18] sm:$0xff] %vm647, %v504
      %652 = vst.msk [vmem:[%s273 + $0x20] sm:$0xff] %vm647, %v509
      %653 = vst.msk [vmem:[%s273 + $0x28] sm:$0xff] %vm647, %v514
      %654 = vst.msk [vmem:[%s273 + $0x30] sm:$0xff] %vm647, %v519
      %655 = vst.msk [vmem:[%s273 + $0x38] sm:$0xff] %vm647, %v524
      %656 = vst.msk [vmem:[%s273 + $0x40] sm:$0xff] %vm647, %v529
      %657 = vst.msk [vmem:[%s273 + $0x48] sm:$0xff] %vm647, %v534
      %658 = vst.msk [vmem:[%s273 + $0x50] sm:$0xff] %vm647, %v539
      %659 = vst.msk [vmem:[%s273 + $0x58] sm:$0xff] %vm647, %v544
      %660 = vst.msk [vmem:[%s273 + $0x60] sm:$0xff] %vm647, %v549
      %661 = vst.msk [vmem:[%s273 + $0x68] sm:$0xff] %vm647, %v554
      %662 = vst.msk [vmem:[%s273 + $0x70] sm:$0xff] %vm647, %v559
      %663 = vst.msk [vmem:[%s273 + $0x78] sm:$0xff] %vm647, %v564
      %664 = vst.msk [vmem:[%s273 + $0x80] sm:$0xff] %vm647, %v569
      %665 = vst.msk [vmem:[%s273 + $0x88] sm:$0xff] %vm647, %v574
      %666 = vst.msk [vmem:[%s273 + $0x90] sm:$0xff] %vm647, %v579
      %667 = vst.msk [vmem:[%s273 + $0x98] sm:$0xff] %vm647, %v584
      %668 = vst.msk [vmem:[%s273 + $0xa0] sm:$0xff] %vm647, %v589
      %669 = vst.msk [vmem:[%s273 + $0xa8] sm:$0xff] %vm647, %v594
      %670 = vst.msk [vmem:[%s273 + $0xb0] sm:$0xff] %vm647, %v599
      %671 = vst.msk [vmem:[%s273 + $0xb8] sm:$0xff] %vm647, %v604
      %672 = vst.msk [vmem:[%s273 + $0xc0] sm:$0xff] %vm647, %v609
      %673 = vst.msk [vmem:[%s273 + $0xc8] sm:$0xff] %vm647, %v614
      %674 = vst.msk [vmem:[%s273 + $0xd0] sm:$0xff] %vm647, %v619
      %675 = vst.msk [vmem:[%s273 + $0xd8] sm:$0xff] %vm647, %v624
      %676 = vst.msk [vmem:[%s273 + $0xe0] sm:$0xff] %vm647, %v629
      %677 = vst.msk [vmem:[%s273 + $0xe8] sm:$0xff] %vm647, %v634
      %678 = vst.msk [vmem:[%s273 + $0xf0] sm:$0xff] %vm647, %v639
      %679 = vst.msk [vmem:[%s273 + $0xf8] sm:$0xff] %vm647, %v644
      %p680 = scmp.eq.s32.totalorder %s22, 0
      // Predicated region
      $region33: #{linear_bottleneck_forward.4} parent=31 // pred_check
        %p681 = pneg %p680
      $region34: #{linear_bottleneck_forward.4} parent=31 // pred_check_branch
        %683 = sbr.rel (%p681) target = $region36
      $region35: #{linear_bottleneck_forward.4} parent=31 // pred_region
        %vm684 = vcmask 188416
        %685 = vst.msk [vmem:[%s277] sm:$0x1] %vm684, 0.0
        %686 = vst.msk [vmem:[%s280] sm:$0x1] %vm684, 0.0
      $region36: #{linear_bottleneck_forward.4} parent=31 // pred_fallthru
        _
      %v687 = vld [vmem:[%s277] sm:$0x1]
      %v688 = vsel %vm647, %v489, 0.0
      %v689 = vsel %vm647, %v494, 0.0
      %v690 = vadd.f32 %v688, %v689
      %v691 = vsel %vm647, %v499, 0.0
      %v692 = vadd.f32 %v690, %v691
      %v693 = vsel %vm647, %v504, 0.0
      %v694 = vadd.f32 %v692, %v693
      %v695 = vsel %vm647, %v509, 0.0
      %v696 = vadd.f32 %v694, %v695
      %v697 = vsel %vm647, %v514, 0.0
      %v698 = vadd.f32 %v696, %v697
      %v699 = vsel %vm647, %v519, 0.0
      %v700 = vadd.f32 %v698, %v699
      %v701 = vsel %vm647, %v524, 0.0
      %v702 = vadd.f32 %v700, %v701
      %v703 = vsel %vm647, %v529, 0.0
      %v704 = vadd.f32 %v702, %v703
      %v705 = vsel %vm647, %v534, 0.0
      %v706 = vadd.f32 %v704, %v705
      %v707 = vsel %vm647, %v539, 0.0
      %v708 = vadd.f32 %v706, %v707
      %v709 = vsel %vm647, %v544, 0.0
      %v710 = vadd.f32 %v708, %v709
      %v711 = vsel %vm647, %v549, 0.0
      %v712 = vadd.f32 %v710, %v711
      %v713 = vsel %vm647, %v554, 0.0
      %v714 = vadd.f32 %v712, %v713
      %v715 = vsel %vm647, %v559, 0.0
      %v716 = vadd.f32 %v714, %v715
      %v717 = vsel %vm647, %v564, 0.0
      %v718 = vadd.f32 %v716, %v717
      %v719 = vsel %vm647, %v569, 0.0
      %v720 = vadd.f32 %v718, %v719
      %v721 = vsel %vm647, %v574, 0.0
      %v722 = vadd.f32 %v720, %v721
      %v723 = vsel %vm647, %v579, 0.0
      %v724 = vadd.f32 %v722, %v723
      %v725 = vsel %vm647, %v584, 0.0
      %v726 = vadd.f32 %v724, %v725
      %v727 = vsel %vm647, %v589, 0.0
      %v728 = vadd.f32 %v726, %v727
      %v729 = vsel %vm647, %v594, 0.0
      %v730 = vadd.f32 %v728, %v729
      %v731 = vsel %vm647, %v599, 0.0
      %v732 = vadd.f32 %v730, %v731
      %v733 = vsel %vm647, %v604, 0.0
      %v734 = vadd.f32 %v732, %v733
      %v735 = vsel %vm647, %v609, 0.0
      %v736 = vadd.f32 %v734, %v735
      %v737 = vsel %vm647, %v614, 0.0
      %v738 = vadd.f32 %v736, %v737
      %v739 = vsel %vm647, %v619, 0.0
      %v740 = vadd.f32 %v738, %v739
      %v741 = vsel %vm647, %v624, 0.0
      %v742 = vadd.f32 %v740, %v741
      %v743 = vsel %vm647, %v629, 0.0
      %v744 = vadd.f32 %v742, %v743
      %v745 = vsel %vm647, %v634, 0.0
      %v746 = vadd.f32 %v744, %v745
      %v747 = vsel %vm647, %v639, 0.0
      %v748 = vadd.f32 %v746, %v747
      %v749 = vsel %vm647, %v644, 0.0
      %v750 = vadd.f32 %v748, %v749
      %v751 = vrot.slane %v750, 4
      %v752 = vadd.f32 %v750, %v751
      %v753 = vrot.slane %v752, 2
      %v754 = vadd.f32 %v752, %v753
      %v755 = vrot.slane %v754, 1
      %v756 = vadd.f32 %v754, %v755
      %v757 = vadd.f32 %v687, %v756
      %vm758 = vcmask 188416
      %759 = vst.msk [vmem:[%s277] sm:$0x1] %vm758, %v757
      %v760 = vld [vmem:[%s280] sm:$0x1]
      %v761 = vmul.f32 %v489, %v489
      %v762 = vmul.f32 %v494, %v494
      %v763 = vmul.f32 %v499, %v499
      %v764 = vmul.f32 %v504, %v504
      %v765 = vmul.f32 %v509, %v509
      %v766 = vmul.f32 %v514, %v514
      %v767 = vmul.f32 %v519, %v519
      %v768 = vmul.f32 %v524, %v524
      %v769 = vmul.f32 %v529, %v529
      %v770 = vmul.f32 %v534, %v534
      %v771 = vmul.f32 %v539, %v539
      %v772 = vmul.f32 %v544, %v544
      %v773 = vmul.f32 %v549, %v549
      %v774 = vmul.f32 %v554, %v554
      %v775 = vmul.f32 %v559, %v559
      %v776 = vmul.f32 %v564, %v564
      %v777 = vmul.f32 %v569, %v569
      %v778 = vmul.f32 %v574, %v574
      %v779 = vmul.f32 %v579, %v579
      %v780 = vmul.f32 %v584, %v584
      %v781 = vmul.f32 %v589, %v589
      %v782 = vmul.f32 %v594, %v594
      %v783 = vmul.f32 %v599, %v599
      %v784 = vmul.f32 %v604, %v604
      %v785 = vmul.f32 %v609, %v609
      %v786 = vmul.f32 %v614, %v614
      %v787 = vmul.f32 %v619, %v619
      %v788 = vmul.f32 %v624, %v624
      %v789 = vmul.f32 %v629, %v629
      %v790 = vmul.f32 %v634, %v634
      %v791 = vmul.f32 %v639, %v639
      %v792 = vmul.f32 %v644, %v644
      %v793 = vsel %vm647, %v761, 0.0
      %v794 = vsel %vm647, %v762, 0.0
      %v795 = vadd.f32 %v793, %v794
      %v796 = vsel %vm647, %v763, 0.0
      %v797 = vadd.f32 %v795, %v796
      %v798 = vsel %vm647, %v764, 0.0
      %v799 = vadd.f32 %v797, %v798
      %v800 = vsel %vm647, %v765, 0.0
      %v801 = vadd.f32 %v799, %v800
      %v802 = vsel %vm647, %v766, 0.0
      %v803 = vadd.f32 %v801, %v802
      %v804 = vsel %vm647, %v767, 0.0
      %v805 = vadd.f32 %v803, %v804
      %v806 = vsel %vm647, %v768, 0.0
      %v807 = vadd.f32 %v805, %v806
      %v808 = vsel %vm647, %v769, 0.0
      %v809 = vadd.f32 %v807, %v808
      %v810 = vsel %vm647, %v770, 0.0
      %v811 = vadd.f32 %v809, %v810
      %v812 = vsel %vm647, %v771, 0.0
      %v813 = vadd.f32 %v811, %v812
      %v814 = vsel %vm647, %v772, 0.0
      %v815 = vadd.f32 %v813, %v814
      %v816 = vsel %vm647, %v773, 0.0
      %v817 = vadd.f32 %v815, %v816
      %v818 = vsel %vm647, %v774, 0.0
      %v819 = vadd.f32 %v817, %v818
      %v820 = vsel %vm647, %v775, 0.0
      %v821 = vadd.f32 %v819, %v820
      %v822 = vsel %vm647, %v776, 0.0
      %v823 = vadd.f32 %v821, %v822
      %v824 = vsel %vm647, %v777, 0.0
      %v825 = vadd.f32 %v823, %v824
      %v826 = vsel %vm647, %v778, 0.0
      %v827 = vadd.f32 %v825, %v826
      %v828 = vsel %vm647, %v779, 0.0
      %v829 = vadd.f32 %v827, %v828
      %v830 = vsel %vm647, %v780, 0.0
      %v831 = vadd.f32 %v829, %v830
      %v832 = vsel %vm647, %v781, 0.0
      %v833 = vadd.f32 %v831, %v832
      %v834 = vsel %vm647, %v782, 0.0
      %v835 = vadd.f32 %v833, %v834
      %v836 = vsel %vm647, %v783, 0.0
      %v837 = vadd.f32 %v835, %v836
      %v838 = vsel %vm647, %v784, 0.0
      %v839 = vadd.f32 %v837, %v838
      %v840 = vsel %vm647, %v785, 0.0
      %v841 = vadd.f32 %v839, %v840
      %v842 = vsel %vm647, %v786, 0.0
      %v843 = vadd.f32 %v841, %v842
      %v844 = vsel %vm647, %v787, 0.0
      %v845 = vadd.f32 %v843, %v844
      %v846 = vsel %vm647, %v788, 0.0
      %v847 = vadd.f32 %v845, %v846
      %v848 = vsel %vm647, %v789, 0.0
      %v849 = vadd.f32 %v847, %v848
      %v850 = vsel %vm647, %v790, 0.0
      %v851 = vadd.f32 %v849, %v850
      %v852 = vsel %vm647, %v791, 0.0
      %v853 = vadd.f32 %v851, %v852
      %v854 = vsel %vm647, %v792, 0.0
      %v855 = vadd.f32 %v853, %v854
      %v856 = vrot.slane %v855, 4
      %v857 = vadd.f32 %v855, %v856
      %v858 = vrot.slane %v857, 2
      %v859 = vadd.f32 %v857, %v858
      %v860 = vrot.slane %v859, 1
      %v861 = vadd.f32 %v859, %v860
      %v862 = vadd.f32 %v760, %v861
      %863 = vst.msk [vmem:[%s280] sm:$0x1] %vm758, %v862
      %s864 = smul.u32 32, %s22
      %p865 = scmp.lt.s32.totalorder %s21, 1
      %s866 = scalar_select %p865, %s21, 1
      %p867 = scmp.lt.s32.totalorder %s864, 31
      %s868 = scalar_select %p867, %s864, 31
      %s869 = smul.addr %s866, 32
      %s870 = sadd.s32 %s868, %s869
      %s871 = smul.addr %s870, 8
      %s872 = scalar_lea.vmem %s3, %s871
      %p873 = scmp.lt.s32.totalorder %s21, 1
      %s874 = scalar_select %p873, %s21, 1
      %s875 = scalar_lea.vmem %s4, %s874
      %p876 = scmp.lt.s32.totalorder %s21, 1
      %s877 = scalar_select %p876, %s21, 1
      %s878 = scalar_lea.vmem %s5, %s877
      // Predicated region
      $region37: #{linear_bottleneck_forward.4} parent=31 // pred_check
        %p879 = pneg %p119
      $region38: #{linear_bottleneck_forward.4} parent=31 // pred_check_branch
        %881 = sbr.rel (%p879) target = $region40
      $region39: #{linear_bottleneck_forward.4} parent=31 // pred_region
        %s882 = smul.u32 32, %s22
      $region40: #{linear_bottleneck_forward.4} parent=31 // pred_fallthru
        _
      // Predicated region
      $region41: #{linear_bottleneck_forward.4} parent=31 // pred_check
        %p883 = pneg %p145
      $region42: #{linear_bottleneck_forward.4} parent=31 // pred_check_branch
        %885 = sbr.rel (%p883) target = $region44
      $region43: #{linear_bottleneck_forward.4} parent=31 // pred_region
        _
      $region44: #{linear_bottleneck_forward.4} parent=31 // pred_fallthru
        _
      // Predicated region
      $region45: #{linear_bottleneck_forward.4} parent=31 // pred_check
        %p886 = pneg %p171
      $region46: #{linear_bottleneck_forward.4} parent=31 // pred_check_branch
        %888 = sbr.rel (%p886) target = $region48
      $region47: #{linear_bottleneck_forward.4} parent=31 // pred_region
        _
      $region48: #{linear_bottleneck_forward.4} parent=31 // pred_fallthru
        _
    $region32: #{linear_bottleneck_forward.4} parent=5 // pred_fallthru
      _
    %p889 = scmp.le.s32.totalorder 2, %s12
    // Predicated region
    $region49: #{linear_bottleneck_forward.4} parent=5 // pred_check
      %p890 = pneg %p889
    $region50: #{linear_bottleneck_forward.4} parent=5 // pred_check_branch
      %892 = sbr.rel (%p890) target = $region52
    $region51: #{linear_bottleneck_forward.4} parent=5 // pred_region
      %s893 = ssub.s32 %s12, 2
      // Predicated region
      $region53: #{linear_bottleneck_forward.4} parent=51 // pred_check
        %p894 = pneg %p125
      $region54: #{linear_bottleneck_forward.4} parent=51 // pred_check_branch
        %896 = sbr.rel (%p894) target = $region56
      $region55: #{linear_bottleneck_forward.4} parent=51 // pred_region
        %s897 = smul.u32 32, %s24
        %p898 = scmp.lt.s32.totalorder %s23, 1
        %s899 = scalar_select %p898, %s23, 1
        %p900 = scmp.lt.s32.totalorder %s897, 31
        %s901 = scalar_select %p900, %s897, 31
        %s902 = smul.addr %s899, 32
        %s903 = sadd.s32 %s901, %s902
        %s904 = smul.addr %s903, 8
        %s905 = scalar_lea.vmem %s3, %s904
      $region56: #{linear_bottleneck_forward.4} parent=51 // pred_fallthru
        _
      // Predicated region
      $region57: #{linear_bottleneck_forward.4} parent=51 // pred_check
        %p906 = pneg %p151
      $region58: #{linear_bottleneck_forward.4} parent=51 // pred_check_branch
        %908 = sbr.rel (%p906) target = $region60
      $region59: #{linear_bottleneck_forward.4} parent=51 // pred_region
        %p909 = scmp.lt.s32.totalorder %s23, 1
        %s910 = scalar_select %p909, %s23, 1
        %s911 = scalar_lea.vmem %s4, %s910
      $region60: #{linear_bottleneck_forward.4} parent=51 // pred_fallthru
        _
      // Predicated region
      $region61: #{linear_bottleneck_forward.4} parent=51 // pred_check
        %p912 = pneg %p177
      $region62: #{linear_bottleneck_forward.4} parent=51 // pred_check_branch
        %914 = sbr.rel (%p912) target = $region64
      $region63: #{linear_bottleneck_forward.4} parent=51 // pred_region
        %p915 = scmp.lt.s32.totalorder %s23, 1
        %s916 = scalar_select %p915, %s23, 1
        %s917 = scalar_lea.vmem %s5, %s916
      $region64: #{linear_bottleneck_forward.4} parent=51 // pred_fallthru
        _
    $region52: #{linear_bottleneck_forward.4} parent=5 // pred_fallthru
      _
  $region6: #{linear_bottleneck_forward.4} parent=0 // loop_footer
    %s16 = sadd.s32 1, %s12
  $region7: #{linear_bottleneck_forward.4} parent=0 // loop_footer_branch
    %11 = sbr.rel target = $region3
  $region8: #{linear_bottleneck_forward.4} parent=0 // loop_exit
    _

// kernel: linear_bottleneck_forward.6
$region0: #{linear_bottleneck_forward.6}
  #allocation0 [shape = 'u32[]', space=smem, size = 0x4, offset = 0x4, fixed_abs, tag = 'smem constant byte address 0x4 - core index']
  #allocation1 [shape = 'u32[144,128]{1,0:T(1,128)}', space=vmem, size = 0x12000, scoped, tag = 'internal scratch']
  %s0 = inlined_call_operand.vmem [shape: f32[2,256,24], index: 0, kind: input, shape index: {}]
  %s1 = inlined_call_operand.vmem [shape: f32[2,1,24], index: 1, kind: input, shape index: {}]
  %s2 = inlined_call_operand.vmem [shape: f32[2,1,24], index: 2, kind: input, shape index: {}]
  %s3 = inlined_call_operand.vmem [shape: f32[24,4], index: 3, kind: input, shape index: {}]
  %s4 = inlined_call_operand.vmem [shape: f32[1,4], index: 4, kind: input, shape index: {}]
  %s5 = inlined_call_operand.vmem [shape: f32[2,256,4], index: 5, kind: output, shape index: {0}]
  %s6 = inlined_call_operand.vmem [shape: f32[2,1,4], index: 6, kind: output, shape index: {1}]
  %s7 = inlined_call_operand.vmem [shape: f32[2,1,4], index: 7, kind: output, shape index: {2}]
  %8 = xla_tuple %s5, %s6, %s7
  %s9 = sld [smem:[#allocation0]]
  $region73: #{linear_bottleneck_forward.6} parent=0
    _
  %s11 = ssub.s32 1, %s9
  %s12 = scalar_select 0, %s11, %s9
  loop: start=0, step=1, limit=4
  $region2: #{linear_bottleneck_forward.6} parent=0 // loop_pre_header
    _
  $region3: #{linear_bottleneck_forward.6} parent=0 // loop_header
    %s14 = sphi 0, %s18
    %p15 = scmp.ge.s32.totalorder %s14, 4
    %s21 = sphi 0, %s33
    %s22 = sphi 0, %s29
    %s23 = sphi 0, %s21
    %s24 = sphi 0, %s22
    %s25 = sphi 0, %s23
    %s26 = sphi 0, %s24
    %s38 = sphi 0, %s40
    %s41 = sphi 0, %s38
    %s42 = sphi 0, %s41
    %s58 = sphi 0, %s42
    %s64 = sphi 0, %s66
    %s67 = sphi 0, %s64
    %s68 = sphi 0, %s67
    %s84 = sphi 0, %s68
    %s90 = sphi 0, %s92
    %s93 = sphi 0, %s90
    %s94 = sphi 0, %s93
    %s110 = sphi 0, %s94
    %s114 = sphi 0, %s114
    %s116 = sphi 0, %s114
    %s117 = sphi 0, %s116
    %s131 = sphi 0, %s117
    %s135 = sphi 0, %s135
    %s137 = sphi 0, %s135
    %s138 = sphi 0, %s137
    %s152 = sphi 0, %s138
    %s160 = sphi 0, %s162
    %s163 = sphi 0, %s160
    %s164 = sphi 0, %s163
    %s180 = sphi 0, %s164
    %s186 = sphi 0, %s188
    %s189 = sphi 0, %s186
    %s190 = sphi 0, %s189
    %s206 = sphi 0, %s190
    %s212 = sphi 0, %s214
    %s215 = sphi 0, %s212
    %s216 = sphi 0, %s215
    %s232 = sphi 0, %s216
  $region4: #{linear_bottleneck_forward.6} parent=0 // loop_header_branch
    %17 = sbr.rel (%p15) target = $region8
  $region5: #{linear_bottleneck_forward.6} parent=0 // loop_body
    %s19 = ssub.s32 %s14, 1
    %s20 = ssub.s32 %s14, 2
    %s27 = sadd.s32 1, %s22
    %p28 = scmp.ge.s32.totalorder %s27, 1
    %s29 = scalar_select %p28, 0, %s27
    %s30 = sadd.s32 1, %s21
    %s31 = scalar_select %p28, %s30, %s21
    %p32 = scmp.ge.s32.totalorder %s31, 2
    %s33 = scalar_select %p32, 0, %s31
    %s34 = ssub.s32 %s21, %s33
    %s35 = ssub.s32 %s22, %s29
    %s36 = sor.u32 %s34, %s35
    %p37 = scmp.eq.s32.totalorder %s36, 0
    %s39 = sadd.s32 %s38, 1
    %s40 = scalar_select %p37, %s38, %s39
    %p43 = pneg %p37
    %p44 = scmp.eq.s32.totalorder %s14, 1
    %p45 = por %p43, %p44
    %p46 = scmp.ne.s32.totalorder %s38, %s41
    %p47 = scmp.eq.s32.totalorder %s14, 0
    %p48 = por %p46, %p47
    %p49 = scmp.ne.s32.totalorder %s38, %s41
    %p50 = scmp.eq.s32.totalorder %s19, 1
    %p51 = por %p49, %p50
    %p52 = scmp.ne.s32.totalorder %s41, %s42
    %p53 = scmp.eq.s32.totalorder %s19, 0
    %p54 = por %p52, %p53
    %p55 = scmp.ne.s32.totalorder %s41, %s42
    %p56 = scmp.eq.s32.totalorder %s20, 1
    %p57 = por %p55, %p56
    %p59 = scmp.ne.s32.totalorder %s42, %s58
    %p60 = scmp.eq.s32.totalorder %s20, 0
    %p61 = por %p59, %p60
    %s62 = ssub.s32 %s21, %s33
    %p63 = scmp.eq.s32.totalorder %s62, 0
    %s65 = sadd.s32 %s64, 1
    %s66 = scalar_select %p63, %s64, %s65
    %p69 = pneg %p63
    %p70 = scmp.eq.s32.totalorder %s14, 1
    %p71 = por %p69, %p70
    %p72 = scmp.ne.s32.totalorder %s64, %s67
    %p73 = scmp.eq.s32.totalorder %s14, 0
    %p74 = por %p72, %p73
    %p75 = scmp.ne.s32.totalorder %s64, %s67
    %p76 = scmp.eq.s32.totalorder %s19, 1
    %p77 = por %p75, %p76
    %p78 = scmp.ne.s32.totalorder %s67, %s68
    %p79 = scmp.eq.s32.totalorder %s19, 0
    %p80 = por %p78, %p79
    %p81 = scmp.ne.s32.totalorder %s67, %s68
    %p82 = scmp.eq.s32.totalorder %s20, 1
    %p83 = por %p81, %p82
    %p85 = scmp.ne.s32.totalorder %s68, %s84
    %p86 = scmp.eq.s32.totalorder %s20, 0
    %p87 = por %p85, %p86
    %s88 = ssub.s32 %s21, %s33
    %p89 = scmp.eq.s32.totalorder %s88, 0
    %s91 = sadd.s32 %s90, 1
    %s92 = scalar_select %p89, %s90, %s91
    %p95 = pneg %p89
    %p96 = scmp.eq.s32.totalorder %s14, 1
    %p97 = por %p95, %p96
    %p98 = scmp.ne.s32.totalorder %s90, %s93
    %p99 = scmp.eq.s32.totalorder %s14, 0
    %p100 = por %p98, %p99
    %p101 = scmp.ne.s32.totalorder %s90, %s93
    %p102 = scmp.eq.s32.totalorder %s19, 1
    %p103 = por %p101, %p102
    %p104 = scmp.ne.s32.totalorder %s93, %s94
    %p105 = scmp.eq.s32.totalorder %s19, 0
    %p106 = por %p104, %p105
    %p107 = scmp.ne.s32.totalorder %s93, %s94
    %p108 = scmp.eq.s32.totalorder %s20, 1
    %p109 = por %p107, %p108
    %p111 = scmp.ne.s32.totalorder %s94, %s110
    %p112 = scmp.eq.s32.totalorder %s20, 0
    %p113 = por %p111, %p112
    %s115 = sadd.s32 %s114, 1
    %p118 = scmp.eq.s32.totalorder %s14, 1
    %p119 = scmp.ne.s32.totalorder %s114, %s116
    %p120 = scmp.eq.s32.totalorder %s14, 0
    %p121 = por %p119, %p120
    %p122 = scmp.ne.s32.totalorder %s114, %s116
    %p123 = scmp.eq.s32.totalorder %s19, 1
    %p124 = por %p122, %p123
    %p125 = scmp.ne.s32.totalorder %s116, %s117
    %p126 = scmp.eq.s32.totalorder %s19, 0
    %p127 = por %p125, %p126
    %p128 = scmp.ne.s32.totalorder %s116, %s117
    %p129 = scmp.eq.s32.totalorder %s20, 1
    %p130 = por %p128, %p129
    %p132 = scmp.ne.s32.totalorder %s117, %s131
    %p133 = scmp.eq.s32.totalorder %s20, 0
    %p134 = por %p132, %p133
    %s136 = sadd.s32 %s135, 1
    %p139 = scmp.eq.s32.totalorder %s14, 1
    %p140 = scmp.ne.s32.totalorder %s135, %s137
    %p141 = scmp.eq.s32.totalorder %s14, 0
    %p142 = por %p140, %p141
    %p143 = scmp.ne.s32.totalorder %s135, %s137
    %p144 = scmp.eq.s32.totalorder %s19, 1
    %p145 = por %p143, %p144
    %p146 = scmp.ne.s32.totalorder %s137, %s138
    %p147 = scmp.eq.s32.totalorder %s19, 0
    %p148 = por %p146, %p147
    %p149 = scmp.ne.s32.totalorder %s137, %s138
    %p150 = scmp.eq.s32.totalorder %s20, 1
    %p151 = por %p149, %p150
    %p153 = scmp.ne.s32.totalorder %s138, %s152
    %p154 = scmp.eq.s32.totalorder %s20, 0
    %p155 = por %p153, %p154
    %s156 = ssub.s32 %s21, %s33
    %s157 = ssub.s32 %s22, %s29
    %s158 = sor.u32 %s156, %s157
    %p159 = scmp.eq.s32.totalorder %s158, 0
    %s161 = sadd.s32 %s160, 1
    %s162 = scalar_select %p159, %s160, %s161
    %p165 = pneg %p159
    %p166 = scmp.eq.s32.totalorder %s14, 1
    %p167 = por %p165, %p166
    %p168 = scmp.ne.s32.totalorder %s160, %s163
    %p169 = scmp.eq.s32.totalorder %s14, 0
    %p170 = por %p168, %p169
    %p171 = scmp.ne.s32.totalorder %s160, %s163
    %p172 = scmp.eq.s32.totalorder %s19, 1
    %p173 = por %p171, %p172
    %p174 = scmp.ne.s32.totalorder %s163, %s164
    %p175 = scmp.eq.s32.totalorder %s19, 0
    %p176 = por %p174, %p175
    %p177 = scmp.ne.s32.totalorder %s163, %s164
    %p178 = scmp.eq.s32.totalorder %s20, 1
    %p179 = por %p177, %p178
    %p181 = scmp.ne.s32.totalorder %s164, %s180
    %p182 = scmp.eq.s32.totalorder %s20, 0
    %p183 = por %p181, %p182
    %s184 = ssub.s32 %s21, %s33
    %p185 = scmp.eq.s32.totalorder %s184, 0
    %s187 = sadd.s32 %s186, 1
    %s188 = scalar_select %p185, %s186, %s187
    %p191 = pneg %p185
    %p192 = scmp.eq.s32.totalorder %s14, 1
    %p193 = por %p191, %p192
    %p194 = scmp.ne.s32.totalorder %s186, %s189
    %p195 = scmp.eq.s32.totalorder %s14, 0
    %p196 = por %p194, %p195
    %p197 = scmp.ne.s32.totalorder %s186, %s189
    %p198 = scmp.eq.s32.totalorder %s19, 1
    %p199 = por %p197, %p198
    %p200 = scmp.ne.s32.totalorder %s189, %s190
    %p201 = scmp.eq.s32.totalorder %s19, 0
    %p202 = por %p200, %p201
    %p203 = scmp.ne.s32.totalorder %s189, %s190
    %p204 = scmp.eq.s32.totalorder %s20, 1
    %p205 = por %p203, %p204
    %p207 = scmp.ne.s32.totalorder %s190, %s206
    %p208 = scmp.eq.s32.totalorder %s20, 0
    %p209 = por %p207, %p208
    %s210 = ssub.s32 %s21, %s33
    %p211 = scmp.eq.s32.totalorder %s210, 0
    %s213 = sadd.s32 %s212, 1
    %s214 = scalar_select %p211, %s212, %s213
    %p217 = pneg %p211
    %p218 = scmp.eq.s32.totalorder %s14, 1
    %p219 = por %p217, %p218
    %p220 = scmp.ne.s32.totalorder %s212, %s215
    %p221 = scmp.eq.s32.totalorder %s14, 0
    %p222 = por %p220, %p221
    %p223 = scmp.ne.s32.totalorder %s212, %s215
    %p224 = scmp.eq.s32.totalorder %s19, 1
    %p225 = por %p223, %p224
    %p226 = scmp.ne.s32.totalorder %s215, %s216
    %p227 = scmp.eq.s32.totalorder %s19, 0
    %p228 = por %p226, %p227
    %p229 = scmp.ne.s32.totalorder %s215, %s216
    %p230 = scmp.eq.s32.totalorder %s20, 1
    %p231 = por %p229, %p230
    %p233 = scmp.ne.s32.totalorder %s216, %s232
    %p234 = scmp.eq.s32.totalorder %s20, 0
    %p235 = por %p233, %p234
    %p236 = scmp.le.s32.totalorder 1, %s14
    %p237 = scmp.lt.s32.totalorder %s14, 3
    %p238 = pnand %p236, %p237
    %p239 = pneg %p238
    // Predicated region
    $region9: #{linear_bottleneck_forward.6} parent=5 // pred_check
      _
    $region10: #{linear_bottleneck_forward.6} parent=5 // pred_check_branch
      %241 = sbr.rel (%p238) target = $region12
    $region11: #{linear_bottleneck_forward.6} parent=5 // pred_region
      %s242 = ssub.s32 %s14, 1
      // Predicated region
      $region13: #{linear_bottleneck_forward.6} parent=11 // pred_check
        %p243 = pneg %p127
      $region14: #{linear_bottleneck_forward.6} parent=11 // pred_check_branch
        %245 = sbr.rel (%p243) target = $region16
      $region15: #{linear_bottleneck_forward.6} parent=11 // pred_region
        _
      $region16: #{linear_bottleneck_forward.6} parent=11 // pred_fallthru
        _
      // Predicated region
      $region17: #{linear_bottleneck_forward.6} parent=11 // pred_check
        %p246 = pneg %p148
      $region18: #{linear_bottleneck_forward.6} parent=11 // pred_check_branch
        %248 = sbr.rel (%p246) target = $region20
      $region19: #{linear_bottleneck_forward.6} parent=11 // pred_region
        _
      $region20: #{linear_bottleneck_forward.6} parent=11 // pred_fallthru
        _
    $region12: #{linear_bottleneck_forward.6} parent=5 // pred_fallthru
      _
    %p249 = scmp.lt.s32.totalorder %s14, 2
    // Predicated region
    $region21: #{linear_bottleneck_forward.6} parent=5 // pred_check
      %p250 = pneg %p249
    $region22: #{linear_bottleneck_forward.6} parent=5 // pred_check_branch
      %252 = sbr.rel (%p250) target = $region24
    $region23: #{linear_bottleneck_forward.6} parent=5 // pred_region
      // Predicated region
      $region25: #{linear_bottleneck_forward.6} parent=23 // pred_check
        %p253 = pneg %p48
      $region26: #{linear_bottleneck_forward.6} parent=23 // pred_check_branch
        %255 = sbr.rel (%p253) target = $region28
      $region27: #{linear_bottleneck_forward.6} parent=23 // pred_region
        %s256 = smul.u32 32, %s22
        %p257 = scmp.lt.s32.totalorder %s21, 1
        %s258 = scalar_select %p257, %s21, 1
        %p259 = scmp.lt.s32.totalorder %s256, 31
        %s260 = scalar_select %p259, %s256, 31
        %s261 = smul.addr %s258, 32
        %s262 = sadd.s32 %s260, %s261
        %s263 = smul.addr %s262, 8
        %s264 = scalar_lea.vmem %s0, %s263
        %s265 = smul.u32 32, %s22
      $region28: #{linear_bottleneck_forward.6} parent=23 // pred_fallthru
        _
      // Predicated region
      $region29: #{linear_bottleneck_forward.6} parent=23 // pred_check
        %p266 = pneg %p74
      $region30: #{linear_bottleneck_forward.6} parent=23 // pred_check_branch
        %268 = sbr.rel (%p266) target = $region32
      $region31: #{linear_bottleneck_forward.6} parent=23 // pred_region
        %p269 = scmp.lt.s32.totalorder %s21, 1
        %s270 = scalar_select %p269, %s21, 1
        %s271 = scalar_lea.vmem %s1, %s270
      $region32: #{linear_bottleneck_forward.6} parent=23 // pred_fallthru
        _
      // Predicated region
      $region33: #{linear_bottleneck_forward.6} parent=23 // pred_check
        %p272 = pneg %p100
      $region34: #{linear_bottleneck_forward.6} parent=23 // pred_check_branch
        %274 = sbr.rel (%p272) target = $region36
      $region35: #{linear_bottleneck_forward.6} parent=23 // pred_region
        %p275 = scmp.lt.s32.totalorder %s21, 1
        %s276 = scalar_select %p275, %s21, 1
        %s277 = scalar_lea.vmem %s2, %s276
      $region36: #{linear_bottleneck_forward.6} parent=23 // pred_fallthru
        _
    $region24: #{linear_bottleneck_forward.6} parent=5 // pred_fallthru
      _
    %p278 = scmp.le.s32.totalorder 1, %s14
    %p279 = scmp.lt.s32.totalorder %s14, 3
    %p280 = pnand %p278, %p279
    %p281 = pneg %p280
    // Predicated region
    $region37: #{linear_bottleneck_forward.6} parent=5 // pred_check
      _
    $region38: #{linear_bottleneck_forward.6} parent=5 // pred_check_branch
      %283 = sbr.rel (%p280) target = $region40
    $region39: #{linear_bottleneck_forward.6} parent=5 // pred_region
      %s284 = ssub.s32 %s14, 1
      %s285 = smul.u32 32, %s24
      %p286 = scmp.lt.s32.totalorder %s23, 1
      %s287 = scalar_select %p286, %s23, 1
      %p288 = scmp.lt.s32.totalorder %s285, 31
      %s289 = scalar_select %p288, %s285, 31
      %s290 = smul.addr %s287, 32
      %s291 = sadd.s32 %s289, %s290
      %s292 = smul.addr %s291, 8
      %s293 = scalar_lea.vmem %s0, %s292
      %p294 = pneg %p54
      %p295 = pneg %p51
      %p296 = scmp.lt.s32.totalorder %s23, 1
      %s297 = scalar_select %p296, %s23, 1
      %s298 = scalar_lea.vmem %s1, %s297
      %p299 = pneg %p80
      %p300 = pneg %p77
      %p301 = scmp.lt.s32.totalorder %s23, 1
      %s302 = scalar_select %p301, %s23, 1
      %s303 = scalar_lea.vmem %s2, %s302
      %p304 = pneg %p106
      %p305 = pneg %p103
      %p306 = pneg %p127
      %p307 = pneg %p124
      %p308 = pneg %p148
      %p309 = pneg %p145
      %p310 = pneg %p176
      %p311 = pneg %p173
      %s312 = smul.u32 32, %s24
      %p313 = scmp.lt.s32.totalorder %s23, 1
      %s314 = scalar_select %p313, %s23, 1
      %p315 = scmp.lt.s32.totalorder %s312, 31
      %s316 = scalar_select %p315, %s312, 31
      %s317 = smul.addr %s314, 32
      %s318 = sadd.s32 %s316, %s317
      %s319 = smul.addr %s318, 8
      %s320 = scalar_lea.vmem %s5, %s319
      %p321 = pneg %p202
      %p322 = pneg %p199
      %p323 = scmp.lt.s32.totalorder %s23, 1
      %s324 = scalar_select %p323, %s23, 1
      %s325 = scalar_lea.vmem %s6, %s324
      %p326 = pneg %p228
      %p327 = pneg %p225
      %p328 = scmp.lt.s32.totalorder %s23, 1
      %s329 = scalar_select %p328, %s23, 1
      %s330 = scalar_lea.vmem %s7, %s329
      %s331 = smul.u32 32, %s24
      %p332 = scmp.lt.s32.totalorder %s23, 1
      %s333 = scalar_select %p332, %s23, 1
      %p334 = scmp.lt.s32.totalorder %s331, 31
      %s335 = scalar_select %p334, %s331, 31
      %s336 = smul.addr %s333, 32
      %s337 = sadd.s32 %s335, %s336
      %s338 = smul.addr %s337, 8
      %s339 = scalar_lea.vmem %s0, %s338
      %s340 = smul.u32 32, %s24
      %p341 = scmp.lt.s32.totalorder %s23, 1
      %s342 = scalar_select %p341, %s23, 1
      %s343 = scalar_lea.vmem %s1, %s342
      %p344 = scmp.lt.s32.totalorder %s23, 1
      %s345 = scalar_select %p344, %s23, 1
      %s346 = scalar_lea.vmem %s2, %s345
      %s347 = smul.u32 32, %s24
      %p348 = scmp.lt.s32.totalorder %s23, 1
      %s349 = scalar_select %p348, %s23, 1
      %p350 = scmp.lt.s32.totalorder %s347, 31
      %s351 = scalar_select %p350, %s347, 31
      %s352 = smul.addr %s349, 32
      %s353 = sadd.s32 %s351, %s352
      %s354 = smul.addr %s353, 8
      %s355 = scalar_lea.vmem %s5, %s354
      %s356 = smul.u32 32, %s24
      %p357 = scmp.lt.s32.totalorder %s23, 1
      %s358 = scalar_select %p357, %s23, 1
      %s359 = scalar_lea.vmem %s6, %s358
      %p360 = scmp.lt.s32.totalorder %s23, 1
      %s361 = scalar_select %p360, %s23, 1
      %s362 = scalar_lea.vmem %s7, %s361
      %v363 = vld [vmem:[%s339] sm:$0xff]
      %v364 = vld [vmem:[%s339 + $0x8] sm:$0xff]
      %v365 = vld [vmem:[%s339 + $0x10] sm:$0xff]
      %v366 = vld [vmem:[%s339 + $0x18] sm:$0xff]
      %v367 = vld [vmem:[%s339 + $0x20] sm:$0xff]
      %v368 = vld [vmem:[%s339 + $0x28] sm:$0xff]
      %v369 = vld [vmem:[%s339 + $0x30] sm:$0xff]
      %v370 = vld [vmem:[%s339 + $0x38] sm:$0xff]
      %v371 = vld [vmem:[%s339 + $0x40] sm:$0xff]
      %v372 = vld [vmem:[%s339 + $0x48] sm:$0xff]
      %v373 = vld [vmem:[%s339 + $0x50] sm:$0xff]
      %v374 = vld [vmem:[%s339 + $0x58] sm:$0xff]
      %v375 = vld [vmem:[%s339 + $0x60] sm:$0xff]
      %v376 = vld [vmem:[%s339 + $0x68] sm:$0xff]
      %v377 = vld [vmem:[%s339 + $0x70] sm:$0xff]
      %v378 = vld [vmem:[%s339 + $0x78] sm:$0xff]
      %v379 = vld [vmem:[%s339 + $0x80] sm:$0xff]
      %v380 = vld [vmem:[%s339 + $0x88] sm:$0xff]
      %v381 = vld [vmem:[%s339 + $0x90] sm:$0xff]
      %v382 = vld [vmem:[%s339 + $0x98] sm:$0xff]
      %v383 = vld [vmem:[%s339 + $0xa0] sm:$0xff]
      %v384 = vld [vmem:[%s339 + $0xa8] sm:$0xff]
      %v385 = vld [vmem:[%s339 + $0xb0] sm:$0xff]
      %v386 = vld [vmem:[%s339 + $0xb8] sm:$0xff]
      %v387 = vld [vmem:[%s339 + $0xc0] sm:$0xff]
      %v388 = vld [vmem:[%s339 + $0xc8] sm:$0xff]
      %v389 = vld [vmem:[%s339 + $0xd0] sm:$0xff]
      %v390 = vld [vmem:[%s339 + $0xd8] sm:$0xff]
      %v391 = vld [vmem:[%s339 + $0xe0] sm:$0xff]
      %v392 = vld [vmem:[%s339 + $0xe8] sm:$0xff]
      %v393 = vld [vmem:[%s339 + $0xf0] sm:$0xff]
      %v394 = vld [vmem:[%s339 + $0xf8] sm:$0xff]
      %v395 = vld [vmem:[%s343] sm:$0x1]
      %v397 = vlaneseq
      %v398 = vshrl.u32 %v397, 7
      %v399 = vsub.s32 0, %v398
      %v400 = vrot.slane %v395, %v399
      %v402 = vmul.f32 %v363, %v400
      %v403 = vmul.f32 %v364, %v400
      %v404 = vmul.f32 %v365, %v400
      %v405 = vmul.f32 %v366, %v400
      %v406 = vmul.f32 %v367, %v400
      %v407 = vmul.f32 %v368, %v400
      %v408 = vmul.f32 %v369, %v400
      %v409 = vmul.f32 %v370, %v400
      %v410 = vmul.f32 %v371, %v400
      %v411 = vmul.f32 %v372, %v400
      %v412 = vmul.f32 %v373, %v400
      %v413 = vmul.f32 %v374, %v400
      %v414 = vmul.f32 %v375, %v400
      %v415 = vmul.f32 %v376, %v400
      %v416 = vmul.f32 %v377, %v400
      %v417 = vmul.f32 %v378, %v400
      %v418 = vmul.f32 %v379, %v400
      %v419 = vmul.f32 %v380, %v400
      %v420 = vmul.f32 %v381, %v400
      %v421 = vmul.f32 %v382, %v400
      %v422 = vmul.f32 %v383, %v400
      %v423 = vmul.f32 %v384, %v400
      %v424 = vmul.f32 %v385, %v400
      %v425 = vmul.f32 %v386, %v400
      %v426 = vmul.f32 %v387, %v400
      %v427 = vmul.f32 %v388, %v400
      %v428 = vmul.f32 %v389, %v400
      %v429 = vmul.f32 %v390, %v400
      %v430 = vmul.f32 %v391, %v400
      %v431 = vmul.f32 %v392, %v400
      %v432 = vmul.f32 %v393, %v400
      %v433 = vmul.f32 %v394, %v400
      %v434 = vld [vmem:[%s346] sm:$0x1]
      %v436 = vlaneseq
      %v437 = vshrl.u32 %v436, 7
      %v438 = vsub.s32 0, %v437
      %v439 = vrot.slane %v434, %v438
      %v441 = vadd.f32 %v402, %v439
      %v442 = vadd.f32 %v403, %v439
      %v443 = vadd.f32 %v404, %v439
      %v444 = vadd.f32 %v405, %v439
      %v445 = vadd.f32 %v406, %v439
      %v446 = vadd.f32 %v407, %v439
      %v447 = vadd.f32 %v408, %v439
      %v448 = vadd.f32 %v409, %v439
      %v449 = vadd.f32 %v410, %v439
      %v450 = vadd.f32 %v411, %v439
      %v451 = vadd.f32 %v412, %v439
      %v452 = vadd.f32 %v413, %v439
      %v453 = vadd.f32 %v414, %v439
      %v454 = vadd.f32 %v415, %v439
      %v455 = vadd.f32 %v416, %v439
      %v456 = vadd.f32 %v417, %v439
      %v457 = vadd.f32 %v418, %v439
      %v458 = vadd.f32 %v419, %v439
      %v459 = vadd.f32 %v420, %v439
      %v460 = vadd.f32 %v421, %v439
      %v461 = vadd.f32 %v422, %v439
      %v462 = vadd.f32 %v423, %v439
      %v463 = vadd.f32 %v424, %v439
      %v464 = vadd.f32 %v425, %v439
      %v465 = vadd.f32 %v426, %v439
      %v466 = vadd.f32 %v427, %v439
      %v467 = vadd.f32 %v428, %v439
      %v468 = vadd.f32 %v429, %v439
      %v469 = vadd.f32 %v430, %v439
      %v470 = vadd.f32 %v431, %v439
      %v471 = vadd.f32 %v432, %v439
      %v472 = vadd.f32 %v433, %v439
      %v473 = vmax.f32 %v441, 0.0
      %v474 = vmax.f32 %v442, 0.0
      %v475 = vmax.f32 %v443, 0.0
      %v476 = vmax.f32 %v444, 0.0
      %v477 = vmax.f32 %v445, 0.0
      %v478 = vmax.f32 %v446, 0.0
      %v479 = vmax.f32 %v447, 0.0
      %v480 = vmax.f32 %v448, 0.0
      %v481 = vmax.f32 %v449, 0.0
      %v482 = vmax.f32 %v450, 0.0
      %v483 = vmax.f32 %v451, 0.0
      %v484 = vmax.f32 %v452, 0.0
      %v485 = vmax.f32 %v453, 0.0
      %v486 = vmax.f32 %v454, 0.0
      %v487 = vmax.f32 %v455, 0.0
      %v488 = vmax.f32 %v456, 0.0
      %v489 = vmax.f32 %v457, 0.0
      %v490 = vmax.f32 %v458, 0.0
      %v491 = vmax.f32 %v459, 0.0
      %v492 = vmax.f32 %v460, 0.0
      %v493 = vmax.f32 %v461, 0.0
      %v494 = vmax.f32 %v462, 0.0
      %v495 = vmax.f32 %v463, 0.0
      %v496 = vmax.f32 %v464, 0.0
      %v497 = vmax.f32 %v465, 0.0
      %v498 = vmax.f32 %v466, 0.0
      %v499 = vmax.f32 %v467, 0.0
      %v500 = vmax.f32 %v468, 0.0
      %v501 = vmax.f32 %v469, 0.0
      %v502 = vmax.f32 %v470, 0.0
      %v503 = vmax.f32 %v471, 0.0
      %v504 = vmax.f32 %v472, 0.0
      %v505 = vmin.f32 %v473, 6.0
      %v506 = vmin.f32 %v474, 6.0
      %v507 = vmin.f32 %v475, 6.0
      %v508 = vmin.f32 %v476, 6.0
      %v509 = vmin.f32 %v477, 6.0
      %v510 = vmin.f32 %v478, 6.0
      %v511 = vmin.f32 %v479, 6.0
      %v512 = vmin.f32 %v480, 6.0
      %v513 = vmin.f32 %v481, 6.0
      %v514 = vmin.f32 %v482, 6.0
      %v515 = vmin.f32 %v483, 6.0
      %v516 = vmin.f32 %v484, 6.0
      %v517 = vmin.f32 %v485, 6.0
      %v518 = vmin.f32 %v486, 6.0
      %v519 = vmin.f32 %v487, 6.0
      %v520 = vmin.f32 %v488, 6.0
      %v521 = vmin.f32 %v489, 6.0
      %v522 = vmin.f32 %v490, 6.0
      %v523 = vmin.f32 %v491, 6.0
      %v524 = vmin.f32 %v492, 6.0
      %v525 = vmin.f32 %v493, 6.0
      %v526 = vmin.f32 %v494, 6.0
      %v527 = vmin.f32 %v495, 6.0
      %v528 = vmin.f32 %v496, 6.0
      %v529 = vmin.f32 %v497, 6.0
      %v530 = vmin.f32 %v498, 6.0
      %v531 = vmin.f32 %v499, 6.0
      %v532 = vmin.f32 %v500, 6.0
      %v533 = vmin.f32 %v501, 6.0
      %v534 = vmin.f32 %v502, 6.0
      %v535 = vmin.f32 %v503, 6.0
      %v536 = vmin.f32 %v504, 6.0
      %v537 = vld [vmem:[%s3] sm:$0xff]
      %v538 = vld [vmem:[%s3 + $0x8] sm:$0xff]
      %v539 = vld [vmem:[%s3 + $0x10] sm:$0xff]
      %v540 = vld [vmem:[%s4] sm:$0x1]
      %v542 = vlaneseq
      %v543 = vshrl.u32 %v542, 7
      %v544 = vsub.s32 0, %v543
      %v545 = vrot.slane %v540, %v544
      %vm547 = vcmask 195584
      %v549 = vsel %vm547, %v505, 0
      %v552 = vsel %vm547, %v506, 0
      %v555 = vsel %vm547, %v507, 0
      %v558 = vsel %vm547, %v508, 0
      %v561 = vsel %vm547, %v509, 0
      %v564 = vsel %vm547, %v510, 0
      %v567 = vsel %vm547, %v511, 0
      %v570 = vsel %vm547, %v512, 0
      %v573 = vsel %vm547, %v513, 0
      %v576 = vsel %vm547, %v514, 0
      %v579 = vsel %vm547, %v515, 0
      %v582 = vsel %vm547, %v516, 0
      %v585 = vsel %vm547, %v517, 0
      %v588 = vsel %vm547, %v518, 0
      %v591 = vsel %vm547, %v519, 0
      %v594 = vsel %vm547, %v520, 0
      %v597 = vsel %vm547, %v521, 0
      %v600 = vsel %vm547, %v522, 0
      %v603 = vsel %vm547, %v523, 0
      %v606 = vsel %vm547, %v524, 0
      %v609 = vsel %vm547, %v525, 0
      %v612 = vsel %vm547, %v526, 0
      %v615 = vsel %vm547, %v527, 0
      %v618 = vsel %vm547, %v528, 0
      %v621 = vsel %vm547, %v529, 0
      %v624 = vsel %vm547, %v530, 0
      %v627 = vsel %vm547, %v531, 0
      %v630 = vsel %vm547, %v532, 0
      %v633 = vsel %vm547, %v533, 0
      %v636 = vsel %vm547, %v534, 0
      %v639 = vsel %vm547, %v535, 0
      %v642 = vsel %vm547, %v536, 0
      %644 = vmatprep.subr.mxu0 0.0
      %645 = vmatpush1.msra.mxu0 0.0
      %646 = vmatprep.subr.mxu0 0.0
      %647 = vmatpush1.msra.mxu0 0.0
      %648 = vmatprep.subr.mxu0 0.0
      %649 = vmatpush1.msra.mxu0 0.0
      %650 = vmatprep.subr.mxu0 0.0
      %651 = vmatpush1.msra.mxu0 0.0
      %652 = vmatprep.subr.mxu0 0.0
      %653 = vmatpush1.msra.mxu0 0.0
      %654 = vmatprep.subr.mxu0 0.0
      %655 = vmatpush1.msra.mxu0 0.0
      %656 = vmatprep.subr.mxu0 0.0
      %657 = vmatpush1.msra.mxu0 0.0
      %658 = vmatprep.subr.mxu0 0.0
      %659 = vmatpush1.msra.mxu0 0.0
      %660 = vmatprep.subr.mxu0 0.0
      %661 = vmatpush1.msra.mxu0 0.0
      %662 = vmatprep.subr.mxu0 0.0
      %663 = vmatpush1.msra.mxu0 0.0
      %664 = vmatprep.subr.mxu0 0.0
      %665 = vmatpush1.msra.mxu0 0.0
      %666 = vmatprep.subr.mxu0 0.0
      %667 = vmatpush1.msra.mxu0 0.0
      %668 = vmatprep.subr.mxu0 0.0
      %669 = vmatpush1.msra.mxu0 0.0
      %670 = vmatprep.subr.mxu0 0.0
      %671 = vmatpush1.msra.mxu0 %v539
      %672 = vmatprep.subr.mxu0 0.0
      %673 = vmatpush1.msra.mxu0 %v538
      %674 = vmatprep.subr.mxu0 0.0
      %675 = vmatpush1.msra.mxu0 %v537
      %676 = vmatprep.subr.mxu0 0.0
      %677 = vmatpush2.msra.mxu0 0.0
      %678 = vmatprep.subr.mxu0 0.0
      %679 = vmatpush2.msra.mxu0 0.0
      %680 = vmatprep.subr.mxu0 0.0
      %681 = vmatpush2.msra.mxu0 0.0
      %682 = vmatprep.subr.mxu0 0.0
      %683 = vmatpush2.msra.mxu0 0.0
      %684 = vmatprep.subr.mxu0 0.0
      %685 = vmatpush2.msra.mxu0 0.0
      %686 = vmatprep.subr.mxu0 0.0
      %687 = vmatpush2.msra.mxu0 0.0
      %688 = vmatprep.subr.mxu0 0.0
      %689 = vmatpush2.msra.mxu0 0.0
      %690 = vmatprep.subr.mxu0 0.0
      %691 = vmatpush2.msra.mxu0 0.0
      %692 = vmatprep.subr.mxu0 0.0
      %693 = vmatpush2.msra.mxu0 0.0
      %694 = vmatprep.subr.mxu0 0.0
      %695 = vmatpush2.msra.mxu0 0.0
      %696 = vmatprep.subr.mxu0 0.0
      %697 = vmatpush2.msra.mxu0 0.0
      %698 = vmatprep.subr.mxu0 0.0
      %699 = vmatpush2.msra.mxu0 0.0
      %700 = vmatprep.subr.mxu0 0.0
      %701 = vmatpush2.msra.mxu0 0.0
      %702 = vmatprep.subr.mxu0 0.0
      %703 = vmatpush2.msra.mxu0 0.0
      %704 = vmatprep.subr.mxu0 0.0
      %705 = vmatpush2.msra.mxu0 0.0
      %706 = vmatprep.subr.mxu0 0.0
      %707 = vmatpush2.msra.mxu0 0.0
      %708 = vmatprep.mubr.f32.mxu0 0.0
      %709 = vmatmul.mubr.f32.gmra.mxu0 %v549
      %v710 = vpop.f32.mrf.mxu0
      %v711 = vadd.f32 %v545, %v710
      %v712 = vpop.f32.mrf.mxu0
      %713 = vmatprep.mubr.f32.mxu0 0.0
      %714 = vmatmul.mubr.f32.gmra.mxu0 %v552
      %v715 = vpop.f32.mrf.mxu0
      %v716 = vadd.f32 %v545, %v715
      %v717 = vpop.f32.mrf.mxu0
      %718 = vmatprep.mubr.f32.mxu0 0.0
      %719 = vmatmul.mubr.f32.gmra.mxu0 %v555
      %v720 = vpop.f32.mrf.mxu0
      %v721 = vadd.f32 %v545, %v720
      %v722 = vpop.f32.mrf.mxu0
      %723 = vmatprep.mubr.f32.mxu0 0.0
      %724 = vmatmul.mubr.f32.gmra.mxu0 %v558
      %v725 = vpop.f32.mrf.mxu0
      %v726 = vadd.f32 %v545, %v725
      %v727 = vpop.f32.mrf.mxu0
      %728 = vmatprep.mubr.f32.mxu0 0.0
      %729 = vmatmul.mubr.f32.gmra.mxu0 %v561
      %v730 = vpop.f32.mrf.mxu0
      %v731 = vadd.f32 %v545, %v730
      %v732 = vpop.f32.mrf.mxu0
      %733 = vmatprep.mubr.f32.mxu0 0.0
      %734 = vmatmul.mubr.f32.gmra.mxu0 %v564
      %v735 = vpop.f32.mrf.mxu0
      %v736 = vadd.f32 %v545, %v735
      %v737 = vpop.f32.mrf.mxu0
      %738 = vmatprep.mubr.f32.mxu0 0.0
      %739 = vmatmul.mubr.f32.gmra.mxu0 %v567
      %v740 = vpop.f32.mrf.mxu0
      %v741 = vadd.f32 %v545, %v740
      %v742 = vpop.f32.mrf.mxu0
      %743 = vmatprep.mubr.f32.mxu0 0.0
      %744 = vmatmul.mubr.f32.gmra.mxu0 %v570
      %v745 = vpop.f32.mrf.mxu0
      %v746 = vadd.f32 %v545, %v745
      %v747 = vpop.f32.mrf.mxu0
      %748 = vmatprep.mubr.f32.mxu0 0.0
      %749 = vmatmul.mubr.f32.gmra.mxu0 %v573
      %v750 = vpop.f32.mrf.mxu0
      %v751 = vadd.f32 %v545, %v750
      %v752 = vpop.f32.mrf.mxu0
      %753 = vmatprep.mubr.f32.mxu0 0.0
      %754 = vmatmul.mubr.f32.gmra.mxu0 %v576
      %v755 = vpop.f32.mrf.mxu0
      %v756 = vadd.f32 %v545, %v755
      %v757 = vpop.f32.mrf.mxu0
      %758 = vmatprep.mubr.f32.mxu0 0.0
      %759 = vmatmul.mubr.f32.gmra.mxu0 %v579
      %v760 = vpop.f32.mrf.mxu0
      %v761 = vadd.f32 %v545, %v760
      %v762 = vpop.f32.mrf.mxu0
      %763 = vmatprep.mubr.f32.mxu0 0.0
      %764 = vmatmul.mubr.f32.gmra.mxu0 %v582
      %v765 = vpop.f32.mrf.mxu0
      %v766 = vadd.f32 %v545, %v765
      %v767 = vpop.f32.mrf.mxu0
      %768 = vmatprep.mubr.f32.mxu0 0.0
      %769 = vmatmul.mubr.f32.gmra.mxu0 %v585
      %v770 = vpop.f32.mrf.mxu0
      %v771 = vadd.f32 %v545, %v770
      %v772 = vpop.f32.mrf.mxu0
      %773 = vmatprep.mubr.f32.mxu0 0.0
      %774 = vmatmul.mubr.f32.gmra.mxu0 %v588
      %v775 = vpop.f32.mrf.mxu0
      %v776 = vadd.f32 %v545, %v775
      %v777 = vpop.f32.mrf.mxu0
      %778 = vmatprep.mubr.f32.mxu0 0.0
      %779 = vmatmul.mubr.f32.gmra.mxu0 %v591
      %v780 = vpop.f32.mrf.mxu0
      %v781 = vadd.f32 %v545, %v780
      %v782 = vpop.f32.mrf.mxu0
      %783 = vmatprep.mubr.f32.mxu0 0.0
      %784 = vmatmul.mubr.f32.gmra.mxu0 %v594
      %v785 = vpop.f32.mrf.mxu0
      %v786 = vadd.f32 %v545, %v785
      %v787 = vpop.f32.mrf.mxu0
      %788 = vmatprep.mubr.f32.mxu0 0.0
      %789 = vmatmul.mubr.f32.gmra.mxu0 %v597
      %v790 = vpop.f32.mrf.mxu0
      %v791 = vadd.f32 %v545, %v790
      %v792 = vpop.f32.mrf.mxu0
      %793 = vmatprep.mubr.f32.mxu0 0.0
      %794 = vmatmul.mubr.f32.gmra.mxu0 %v600
      %v795 = vpop.f32.mrf.mxu0
      %v796 = vadd.f32 %v545, %v795
      %v797 = vpop.f32.mrf.mxu0
      %798 = vmatprep.mubr.f32.mxu0 0.0
      %799 = vmatmul.mubr.f32.gmra.mxu0 %v603
      %v800 = vpop.f32.mrf.mxu0
      %v801 = vadd.f32 %v545, %v800
      %v802 = vpop.f32.mrf.mxu0
      %803 = vmatprep.mubr.f32.mxu0 0.0
      %804 = vmatmul.mubr.f32.gmra.mxu0 %v606
      %v805 = vpop.f32.mrf.mxu0
      %v806 = vadd.f32 %v545, %v805
      %v807 = vpop.f32.mrf.mxu0
      %808 = vmatprep.mubr.f32.mxu0 0.0
      %809 = vmatmul.mubr.f32.gmra.mxu0 %v609
      %v810 = vpop.f32.mrf.mxu0
      %v811 = vadd.f32 %v545, %v810
      %v812 = vpop.f32.mrf.mxu0
      %813 = vmatprep.mubr.f32.mxu0 0.0
      %814 = vmatmul.mubr.f32.gmra.mxu0 %v612
      %v815 = vpop.f32.mrf.mxu0
      %v816 = vadd.f32 %v545, %v815
      %v817 = vpop.f32.mrf.mxu0
      %818 = vmatprep.mubr.f32.mxu0 0.0
      %819 = vmatmul.mubr.f32.gmra.mxu0 %v615
      %v820 = vpop.f32.mrf.mxu0
      %v821 = vadd.f32 %v545, %v820
      %v822 = vpop.f32.mrf.mxu0
      %823 = vmatprep.mubr.f32.mxu0 0.0
      %824 = vmatmul.mubr.f32.gmra.mxu0 %v618
      %v825 = vpop.f32.mrf.mxu0
      %v826 = vadd.f32 %v545, %v825
      %v827 = vpop.f32.mrf.mxu0
      %828 = vmatprep.mubr.f32.mxu0 0.0
      %829 = vmatmul.mubr.f32.gmra.mxu0 %v621
      %v830 = vpop.f32.mrf.mxu0
      %v831 = vadd.f32 %v545, %v830
      %v832 = vpop.f32.mrf.mxu0
      %833 = vmatprep.mubr.f32.mxu0 0.0
      %834 = vmatmul.mubr.f32.gmra.mxu0 %v624
      %v835 = vpop.f32.mrf.mxu0
      %v836 = vadd.f32 %v545, %v835
      %v837 = vpop.f32.mrf.mxu0
      %838 = vmatprep.mubr.f32.mxu0 0.0
      %839 = vmatmul.mubr.f32.gmra.mxu0 %v627
      %v840 = vpop.f32.mrf.mxu0
      %v841 = vadd.f32 %v545, %v840
      %v842 = vpop.f32.mrf.mxu0
      %843 = vmatprep.mubr.f32.mxu0 0.0
      %844 = vmatmul.mubr.f32.gmra.mxu0 %v630
      %v845 = vpop.f32.mrf.mxu0
      %v846 = vadd.f32 %v545, %v845
      %v847 = vpop.f32.mrf.mxu0
      %848 = vmatprep.mubr.f32.mxu0 0.0
      %849 = vmatmul.mubr.f32.gmra.mxu0 %v633
      %v850 = vpop.f32.mrf.mxu0
      %v851 = vadd.f32 %v545, %v850
      %v852 = vpop.f32.mrf.mxu0
      %853 = vmatprep.mubr.f32.mxu0 0.0
      %854 = vmatmul.mubr.f32.gmra.mxu0 %v636
      %v855 = vpop.f32.mrf.mxu0
      %v856 = vadd.f32 %v545, %v855
      %v857 = vpop.f32.mrf.mxu0
      %858 = vmatprep.mubr.f32.mxu0 0.0
      %859 = vmatmul.mubr.f32.gmra.mxu0 %v639
      %v860 = vpop.f32.mrf.mxu0
      %v861 = vadd.f32 %v545, %v860
      %v862 = vpop.f32.mrf.mxu0
      %863 = vmatprep.mubr.f32.mxu0 0.0
      %864 = vmatmul.mubr.f32.gmra.mxu0 %v642
      %v865 = vpop.f32.mrf.mxu0
      %v866 = vadd.f32 %v545, %v865
      %v867 = vpop.f32.mrf.mxu0
      %868 = vdwg.mxu0
      %vm869 = vcmask 31744
      %870 = vst.msk [vmem:[%s355] sm:$0xff] %vm869, %v711
      %871 = vst.msk [vmem:[%s355 + $0x8] sm:$0xff] %vm869, %v716
      %872 = vst.msk [vmem:[%s355 + $0x10] sm:$0xff] %vm869, %v721
      %873 = vst.msk [vmem:[%s355 + $0x18] sm:$0xff] %vm869, %v726
      %874 = vst.msk [vmem:[%s355 + $0x20] sm:$0xff] %vm869, %v731
      %875 = vst.msk [vmem:[%s355 + $0x28] sm:$0xff] %vm869, %v736
      %876 = vst.msk [vmem:[%s355 + $0x30] sm:$0xff] %vm869, %v741
      %877 = vst.msk [vmem:[%s355 + $0x38] sm:$0xff] %vm869, %v746
      %878 = vst.msk [vmem:[%s355 + $0x40] sm:$0xff] %vm869, %v751
      %879 = vst.msk [vmem:[%s355 + $0x48] sm:$0xff] %vm869, %v756
      %880 = vst.msk [vmem:[%s355 + $0x50] sm:$0xff] %vm869, %v761
      %881 = vst.msk [vmem:[%s355 + $0x58] sm:$0xff] %vm869, %v766
      %882 = vst.msk [vmem:[%s355 + $0x60] sm:$0xff] %vm869, %v771
      %883 = vst.msk [vmem:[%s355 + $0x68] sm:$0xff] %vm869, %v776
      %884 = vst.msk [vmem:[%s355 + $0x70] sm:$0xff] %vm869, %v781
      %885 = vst.msk [vmem:[%s355 + $0x78] sm:$0xff] %vm869, %v786
      %886 = vst.msk [vmem:[%s355 + $0x80] sm:$0xff] %vm869, %v791
      %887 = vst.msk [vmem:[%s355 + $0x88] sm:$0xff] %vm869, %v796
      %888 = vst.msk [vmem:[%s355 + $0x90] sm:$0xff] %vm869, %v801
      %889 = vst.msk [vmem:[%s355 + $0x98] sm:$0xff] %vm869, %v806
      %890 = vst.msk [vmem:[%s355 + $0xa0] sm:$0xff] %vm869, %v811
      %891 = vst.msk [vmem:[%s355 + $0xa8] sm:$0xff] %vm869, %v816
      %892 = vst.msk [vmem:[%s355 + $0xb0] sm:$0xff] %vm869, %v821
      %893 = vst.msk [vmem:[%s355 + $0xb8] sm:$0xff] %vm869, %v826
      %894 = vst.msk [vmem:[%s355 + $0xc0] sm:$0xff] %vm869, %v831
      %895 = vst.msk [vmem:[%s355 + $0xc8] sm:$0xff] %vm869, %v836
      %896 = vst.msk [vmem:[%s355 + $0xd0] sm:$0xff] %vm869, %v841
      %897 = vst.msk [vmem:[%s355 + $0xd8] sm:$0xff] %vm869, %v846
      %898 = vst.msk [vmem:[%s355 + $0xe0] sm:$0xff] %vm869, %v851
      %899 = vst.msk [vmem:[%s355 + $0xe8] sm:$0xff] %vm869, %v856
      %900 = vst.msk [vmem:[%s355 + $0xf0] sm:$0xff] %vm869, %v861
      %901 = vst.msk [vmem:[%s355 + $0xf8] sm:$0xff] %vm869, %v866
      %p902 = scmp.eq.s32.totalorder %s24, 0
      // Predicated region
      $region41: #{linear_bottleneck_forward.6} parent=39 // pred_check
        %p903 = pneg %p902
      $region42: #{linear_bottleneck_forward.6} parent=39 // pred_check_branch
        %905 = sbr.rel (%p903) target = $region44
      $region43: #{linear_bottleneck_forward.6} parent=39 // pred_region
        %vm906 = vcmask 24576
        %907 = vst.msk [vmem:[%s359] sm:$0x1] %vm906, 0.0
        %908 = vst.msk [vmem:[%s362] sm:$0x1] %vm906, 0.0
      $region44: #{linear_bottleneck_forward.6} parent=39 // pred_fallthru
        _
      %v909 = vld [vmem:[%s359] sm:$0x1]
      %v910 = vsel %vm869, %v711, 0.0
      %v911 = vsel %vm869, %v716, 0.0
      %v912 = vadd.f32 %v910, %v911
      %v913 = vsel %vm869, %v721, 0.0
      %v914 = vadd.f32 %v912, %v913
      %v915 = vsel %vm869, %v726, 0.0
      %v916 = vadd.f32 %v914, %v915
      %v917 = vsel %vm869, %v731, 0.0
      %v918 = vadd.f32 %v916, %v917
      %v919 = vsel %vm869, %v736, 0.0
      %v920 = vadd.f32 %v918, %v919
      %v921 = vsel %vm869, %v741, 0.0
      %v922 = vadd.f32 %v920, %v921
      %v923 = vsel %vm869, %v746, 0.0
      %v924 = vadd.f32 %v922, %v923
      %v925 = vsel %vm869, %v751, 0.0
      %v926 = vadd.f32 %v924, %v925
      %v927 = vsel %vm869, %v756, 0.0
      %v928 = vadd.f32 %v926, %v927
      %v929 = vsel %vm869, %v761, 0.0
      %v930 = vadd.f32 %v928, %v929
      %v931 = vsel %vm869, %v766, 0.0
      %v932 = vadd.f32 %v930, %v931
      %v933 = vsel %vm869, %v771, 0.0
      %v934 = vadd.f32 %v932, %v933
      %v935 = vsel %vm869, %v776, 0.0
      %v936 = vadd.f32 %v934, %v935
      %v937 = vsel %vm869, %v781, 0.0
      %v938 = vadd.f32 %v936, %v937
      %v939 = vsel %vm869, %v786, 0.0
      %v940 = vadd.f32 %v938, %v939
      %v941 = vsel %vm869, %v791, 0.0
      %v942 = vadd.f32 %v940, %v941
      %v943 = vsel %vm869, %v796, 0.0
      %v944 = vadd.f32 %v942, %v943
      %v945 = vsel %vm869, %v801, 0.0
      %v946 = vadd.f32 %v944, %v945
      %v947 = vsel %vm869, %v806, 0.0
      %v948 = vadd.f32 %v946, %v947
      %v949 = vsel %vm869, %v811, 0.0
      %v950 = vadd.f32 %v948, %v949
      %v951 = vsel %vm869, %v816, 0.0
      %v952 = vadd.f32 %v950, %v951
      %v953 = vsel %vm869, %v821, 0.0
      %v954 = vadd.f32 %v952, %v953
      %v955 = vsel %vm869, %v826, 0.0
      %v956 = vadd.f32 %v954, %v955
      %v957 = vsel %vm869, %v831, 0.0
      %v958 = vadd.f32 %v956, %v957
      %v959 = vsel %vm869, %v836, 0.0
      %v960 = vadd.f32 %v958, %v959
      %v961 = vsel %vm869, %v841, 0.0
      %v962 = vadd.f32 %v960, %v961
      %v963 = vsel %vm869, %v846, 0.0
      %v964 = vadd.f32 %v962, %v963
      %v965 = vsel %vm869, %v851, 0.0
      %v966 = vadd.f32 %v964, %v965
      %v967 = vsel %vm869, %v856, 0.0
      %v968 = vadd.f32 %v966, %v967
      %v969 = vsel %vm869, %v861, 0.0
      %v970 = vadd.f32 %v968, %v969
      %v971 = vsel %vm869, %v866, 0.0
      %v972 = vadd.f32 %v970, %v971
      %v973 = vrot.slane %v972, 4
      %v974 = vadd.f32 %v972, %v973
      %v975 = vrot.slane %v974, 2
      %v976 = vadd.f32 %v974, %v975
      %v977 = vrot.slane %v976, 1
      %v978 = vadd.f32 %v976, %v977
      %v979 = vadd.f32 %v909, %v978
      %vm980 = vcmask 24576
      %981 = vst.msk [vmem:[%s359] sm:$0x1] %vm980, %v979
      %v982 = vld [vmem:[%s362] sm:$0x1]
      %v983 = vmul.f32 %v711, %v711
      %v984 = vmul.f32 %v716, %v716
      %v985 = vmul.f32 %v721, %v721
      %v986 = vmul.f32 %v726, %v726
      %v987 = vmul.f32 %v731, %v731
      %v988 = vmul.f32 %v736, %v736
      %v989 = vmul.f32 %v741, %v741
      %v990 = vmul.f32 %v746, %v746
      %v991 = vmul.f32 %v751, %v751
      %v992 = vmul.f32 %v756, %v756
      %v993 = vmul.f32 %v761, %v761
      %v994 = vmul.f32 %v766, %v766
      %v995 = vmul.f32 %v771, %v771
      %v996 = vmul.f32 %v776, %v776
      %v997 = vmul.f32 %v781, %v781
      %v998 = vmul.f32 %v786, %v786
      %v999 = vmul.f32 %v791, %v791
      %v1000 = vmul.f32 %v796, %v796
      %v1001 = vmul.f32 %v801, %v801
      %v1002 = vmul.f32 %v806, %v806
      %v1003 = vmul.f32 %v811, %v811
      %v1004 = vmul.f32 %v816, %v816
      %v1005 = vmul.f32 %v821, %v821
      %v1006 = vmul.f32 %v826, %v826
      %v1007 = vmul.f32 %v831, %v831
      %v1008 = vmul.f32 %v836, %v836
      %v1009 = vmul.f32 %v841, %v841
      %v1010 = vmul.f32 %v846, %v846
      %v1011 = vmul.f32 %v851, %v851
      %v1012 = vmul.f32 %v856, %v856
      %v1013 = vmul.f32 %v861, %v861
      %v1014 = vmul.f32 %v866, %v866
      %v1015 = vsel %vm869, %v983, 0.0
      %v1016 = vsel %vm869, %v984, 0.0
      %v1017 = vadd.f32 %v1015, %v1016
      %v1018 = vsel %vm869, %v985, 0.0
      %v1019 = vadd.f32 %v1017, %v1018
      %v1020 = vsel %vm869, %v986, 0.0
      %v1021 = vadd.f32 %v1019, %v1020
      %v1022 = vsel %vm869, %v987, 0.0
      %v1023 = vadd.f32 %v1021, %v1022
      %v1024 = vsel %vm869, %v988, 0.0
      %v1025 = vadd.f32 %v1023, %v1024
      %v1026 = vsel %vm869, %v989, 0.0
      %v1027 = vadd.f32 %v1025, %v1026
      %v1028 = vsel %vm869, %v990, 0.0
      %v1029 = vadd.f32 %v1027, %v1028
      %v1030 = vsel %vm869, %v991, 0.0
      %v1031 = vadd.f32 %v1029, %v1030
      %v1032 = vsel %vm869, %v992, 0.0
      %v1033 = vadd.f32 %v1031, %v1032
      %v1034 = vsel %vm869, %v993, 0.0
      %v1035 = vadd.f32 %v1033, %v1034
      %v1036 = vsel %vm869, %v994, 0.0
      %v1037 = vadd.f32 %v1035, %v1036
      %v1038 = vsel %vm869, %v995, 0.0
      %v1039 = vadd.f32 %v1037, %v1038
      %v1040 = vsel %vm869, %v996, 0.0
      %v1041 = vadd.f32 %v1039, %v1040
      %v1042 = vsel %vm869, %v997, 0.0
      %v1043 = vadd.f32 %v1041, %v1042
      %v1044 = vsel %vm869, %v998, 0.0
      %v1045 = vadd.f32 %v1043, %v1044
      %v1046 = vsel %vm869, %v999, 0.0
      %v1047 = vadd.f32 %v1045, %v1046
      %v1048 = vsel %vm869, %v1000, 0.0
      %v1049 = vadd.f32 %v1047, %v1048
      %v1050 = vsel %vm869, %v1001, 0.0
      %v1051 = vadd.f32 %v1049, %v1050
      %v1052 = vsel %vm869, %v1002, 0.0
      %v1053 = vadd.f32 %v1051, %v1052
      %v1054 = vsel %vm869, %v1003, 0.0
      %v1055 = vadd.f32 %v1053, %v1054
      %v1056 = vsel %vm869, %v1004, 0.0
      %v1057 = vadd.f32 %v1055, %v1056
      %v1058 = vsel %vm869, %v1005, 0.0
      %v1059 = vadd.f32 %v1057, %v1058
      %v1060 = vsel %vm869, %v1006, 0.0
      %v1061 = vadd.f32 %v1059, %v1060
      %v1062 = vsel %vm869, %v1007, 0.0
      %v1063 = vadd.f32 %v1061, %v1062
      %v1064 = vsel %vm869, %v1008, 0.0
      %v1065 = vadd.f32 %v1063, %v1064
      %v1066 = vsel %vm869, %v1009, 0.0
      %v1067 = vadd.f32 %v1065, %v1066
      %v1068 = vsel %vm869, %v1010, 0.0
      %v1069 = vadd.f32 %v1067, %v1068
      %v1070 = vsel %vm869, %v1011, 0.0
      %v1071 = vadd.f32 %v1069, %v1070
      %v1072 = vsel %vm869, %v1012, 0.0
      %v1073 = vadd.f32 %v1071, %v1072
      %v1074 = vsel %vm869, %v1013, 0.0
      %v1075 = vadd.f32 %v1073, %v1074
      %v1076 = vsel %vm869, %v1014, 0.0
      %v1077 = vadd.f32 %v1075, %v1076
      %v1078 = vrot.slane %v1077, 4
      %v1079 = vadd.f32 %v1077, %v1078
      %v1080 = vrot.slane %v1079, 2
      %v1081 = vadd.f32 %v1079, %v1080
      %v1082 = vrot.slane %v1081, 1
      %v1083 = vadd.f32 %v1081, %v1082
      %v1084 = vadd.f32 %v982, %v1083
      %1085 = vst.msk [vmem:[%s362] sm:$0x1] %vm980, %v1084
      %s1086 = smul.u32 32, %s24
      %p1087 = scmp.lt.s32.totalorder %s23, 1
      %s1088 = scalar_select %p1087, %s23, 1
      %p1089 = scmp.lt.s32.totalorder %s1086, 31
      %s1090 = scalar_select %p1089, %s1086, 31
      %s1091 = smul.addr %s1088, 32
      %s1092 = sadd.s32 %s1090, %s1091
      %s1093 = smul.addr %s1092, 8
      %s1094 = scalar_lea.vmem %s5, %s1093
      %p1095 = scmp.lt.s32.totalorder %s23, 1
      %s1096 = scalar_select %p1095, %s23, 1
      %s1097 = scalar_lea.vmem %s6, %s1096
      %p1098 = scmp.lt.s32.totalorder %s23, 1
      %s1099 = scalar_select %p1098, %s23, 1
      %s1100 = scalar_lea.vmem %s7, %s1099
      // Predicated region
      $region45: #{linear_bottleneck_forward.6} parent=39 // pred_check
        %p1101 = pneg %p173
      $region46: #{linear_bottleneck_forward.6} parent=39 // pred_check_branch
        %1103 = sbr.rel (%p1101) target = $region48
      $region47: #{linear_bottleneck_forward.6} parent=39 // pred_region
        %s1104 = smul.u32 32, %s24
      $region48: #{linear_bottleneck_forward.6} parent=39 // pred_fallthru
        _
      // Predicated region
      $region49: #{linear_bottleneck_forward.6} parent=39 // pred_check
        %p1105 = pneg %p199
      $region50: #{linear_bottleneck_forward.6} parent=39 // pred_check_branch
        %1107 = sbr.rel (%p1105) target = $region52
      $region51: #{linear_bottleneck_forward.6} parent=39 // pred_region
        _
      $region52: #{linear_bottleneck_forward.6} parent=39 // pred_fallthru
        _
      // Predicated region
      $region53: #{linear_bottleneck_forward.6} parent=39 // pred_check
        %p1108 = pneg %p225
      $region54: #{linear_bottleneck_forward.6} parent=39 // pred_check_branch
        %1110 = sbr.rel (%p1108) target = $region56
      $region55: #{linear_bottleneck_forward.6} parent=39 // pred_region
        _
      $region56: #{linear_bottleneck_forward.6} parent=39 // pred_fallthru
        _
    $region40: #{linear_bottleneck_forward.6} parent=5 // pred_fallthru
      _
    %p1111 = scmp.le.s32.totalorder 2, %s14
    // Predicated region
    $region57: #{linear_bottleneck_forward.6} parent=5 // pred_check
      %p1112 = pneg %p1111
    $region58: #{linear_bottleneck_forward.6} parent=5 // pred_check_branch
      %1114 = sbr.rel (%p1112) target = $region60
    $region59: #{linear_bottleneck_forward.6} parent=5 // pred_region
      %s1115 = ssub.s32 %s14, 2
      // Predicated region
      $region61: #{linear_bottleneck_forward.6} parent=59 // pred_check
        %p1116 = pneg %p179
      $region62: #{linear_bottleneck_forward.6} parent=59 // pred_check_branch
        %1118 = sbr.rel (%p1116) target = $region64
      $region63: #{linear_bottleneck_forward.6} parent=59 // pred_region
        %s1119 = smul.u32 32, %s26
        %p1120 = scmp.lt.s32.totalorder %s25, 1
        %s1121 = scalar_select %p1120, %s25, 1
        %p1122 = scmp.lt.s32.totalorder %s1119, 31
        %s1123 = scalar_select %p1122, %s1119, 31
        %s1124 = smul.addr %s1121, 32
        %s1125 = sadd.s32 %s1123, %s1124
        %s1126 = smul.addr %s1125, 8
        %s1127 = scalar_lea.vmem %s5, %s1126
      $region64: #{linear_bottleneck_forward.6} parent=59 // pred_fallthru
        _
      // Predicated region
      $region65: #{linear_bottleneck_forward.6} parent=59 // pred_check
        %p1128 = pneg %p205
      $region66: #{linear_bottleneck_forward.6} parent=59 // pred_check_branch
        %1130 = sbr.rel (%p1128) target = $region68
      $region67: #{linear_bottleneck_forward.6} parent=59 // pred_region
        %p1131 = scmp.lt.s32.totalorder %s25, 1
        %s1132 = scalar_select %p1131, %s25, 1
        %s1133 = scalar_lea.vmem %s6, %s1132
      $region68: #{linear_bottleneck_forward.6} parent=59 // pred_fallthru
        _
      // Predicated region
      $region69: #{linear_bottleneck_forward.6} parent=59 // pred_check
        %p1134 = pneg %p231
      $region70: #{linear_bottleneck_forward.6} parent=59 // pred_check_branch
        %1136 = sbr.rel (%p1134) target = $region72
      $region71: #{linear_bottleneck_forward.6} parent=59 // pred_region
        %p1137 = scmp.lt.s32.totalorder %s25, 1
        %s1138 = scalar_select %p1137, %s25, 1
        %s1139 = scalar_lea.vmem %s7, %s1138
      $region72: #{linear_bottleneck_forward.6} parent=59 // pred_fallthru
        _
    $region60: #{linear_bottleneck_forward.6} parent=5 // pred_fallthru
      _
  $region6: #{linear_bottleneck_forward.6} parent=0 // loop_footer
    %s18 = sadd.s32 1, %s14
  $region7: #{linear_bottleneck_forward.6} parent=0 // loop_footer_branch
    %13 = sbr.rel target = $region3
  $region8: #{linear_bottleneck_forward.6} parent=0 // loop_exit
    _

// kernel: linear_bottleneck_forward.7
$region0: #{linear_bottleneck_forward.7}
  #allocation0 [shape = 'u32[]', space=smem, size = 0x4, offset = 0x4, fixed_abs, tag = 'smem constant byte address 0x4 - core index']
  #allocation1 [shape = 'u32[144,128]{1,0:T(1,128)}', space=vmem, size = 0x12000, scoped, tag = 'internal scratch']
  %s0 = inlined_call_operand.vmem [shape: f32[2,256,4], index: 0, kind: input, shape index: {}]
  %s1 = inlined_call_operand.vmem [shape: f32[2,1,4], index: 1, kind: input, shape index: {}]
  %s2 = inlined_call_operand.vmem [shape: f32[2,1,4], index: 2, kind: input, shape index: {}]
  %s3 = inlined_call_operand.vmem [shape: f32[2,256,4], index: 3, kind: input, shape index: {}]
  %s4 = inlined_call_operand.vmem [shape: f32[2,256,4], index: 4, kind: output, shape index: {}]
  %s5 = sld [smem:[#allocation0]]
  $region49: #{linear_bottleneck_forward.7} parent=0
    _
  %s7 = ssub.s32 1, %s5
  %s8 = scalar_select 0, %s7, %s5
  loop: start=0, step=1, limit=4
  $region2: #{linear_bottleneck_forward.7} parent=0 // loop_pre_header
    _
  $region3: #{linear_bottleneck_forward.7} parent=0 // loop_header
    %s10 = sphi 0, %s14
    %p11 = scmp.ge.s32.totalorder %s10, 4
    %s17 = sphi 0, %s29
    %s18 = sphi 0, %s25
    %s19 = sphi 0, %s17
    %s20 = sphi 0, %s18
    %s21 = sphi 0, %s19
    %s22 = sphi 0, %s20
    %s34 = sphi 0, %s36
    %s37 = sphi 0, %s34
    %s38 = sphi 0, %s37
    %s54 = sphi 0, %s38
    %s60 = sphi 0, %s62
    %s63 = sphi 0, %s60
    %s64 = sphi 0, %s63
    %s80 = sphi 0, %s64
    %s86 = sphi 0, %s88
    %s89 = sphi 0, %s86
    %s90 = sphi 0, %s89
    %s106 = sphi 0, %s90
    %s114 = sphi 0, %s116
    %s117 = sphi 0, %s114
    %s118 = sphi 0, %s117
    %s134 = sphi 0, %s118
    %s142 = sphi 0, %s144
    %s145 = sphi 0, %s142
    %s146 = sphi 0, %s145
    %s162 = sphi 0, %s146
  $region4: #{linear_bottleneck_forward.7} parent=0 // loop_header_branch
    %13 = sbr.rel (%p11) target = $region8
  $region5: #{linear_bottleneck_forward.7} parent=0 // loop_body
    %s15 = ssub.s32 %s10, 1
    %s16 = ssub.s32 %s10, 2
    %s23 = sadd.s32 1, %s18
    %p24 = scmp.ge.s32.totalorder %s23, 1
    %s25 = scalar_select %p24, 0, %s23
    %s26 = sadd.s32 1, %s17
    %s27 = scalar_select %p24, %s26, %s17
    %p28 = scmp.ge.s32.totalorder %s27, 2
    %s29 = scalar_select %p28, 0, %s27
    %s30 = ssub.s32 %s17, %s29
    %s31 = ssub.s32 %s18, %s25
    %s32 = sor.u32 %s30, %s31
    %p33 = scmp.eq.s32.totalorder %s32, 0
    %s35 = sadd.s32 %s34, 1
    %s36 = scalar_select %p33, %s34, %s35
    %p39 = pneg %p33
    %p40 = scmp.eq.s32.totalorder %s10, 1
    %p41 = por %p39, %p40
    %p42 = scmp.ne.s32.totalorder %s34, %s37
    %p43 = scmp.eq.s32.totalorder %s10, 0
    %p44 = por %p42, %p43
    %p45 = scmp.ne.s32.totalorder %s34, %s37
    %p46 = scmp.eq.s32.totalorder %s15, 1
    %p47 = por %p45, %p46
    %p48 = scmp.ne.s32.totalorder %s37, %s38
    %p49 = scmp.eq.s32.totalorder %s15, 0
    %p50 = por %p48, %p49
    %p51 = scmp.ne.s32.totalorder %s37, %s38
    %p52 = scmp.eq.s32.totalorder %s16, 1
    %p53 = por %p51, %p52
    %p55 = scmp.ne.s32.totalorder %s38, %s54
    %p56 = scmp.eq.s32.totalorder %s16, 0
    %p57 = por %p55, %p56
    %s58 = ssub.s32 %s17, %s29
    %p59 = scmp.eq.s32.totalorder %s58, 0
    %s61 = sadd.s32 %s60, 1
    %s62 = scalar_select %p59, %s60, %s61
    %p65 = pneg %p59
    %p66 = scmp.eq.s32.totalorder %s10, 1
    %p67 = por %p65, %p66
    %p68 = scmp.ne.s32.totalorder %s60, %s63
    %p69 = scmp.eq.s32.totalorder %s10, 0
    %p70 = por %p68, %p69
    %p71 = scmp.ne.s32.totalorder %s60, %s63
    %p72 = scmp.eq.s32.totalorder %s15, 1
    %p73 = por %p71, %p72
    %p74 = scmp.ne.s32.totalorder %s63, %s64
    %p75 = scmp.eq.s32.totalorder %s15, 0
    %p76 = por %p74, %p75
    %p77 = scmp.ne.s32.totalorder %s63, %s64
    %p78 = scmp.eq.s32.totalorder %s16, 1
    %p79 = por %p77, %p78
    %p81 = scmp.ne.s32.totalorder %s64, %s80
    %p82 = scmp.eq.s32.totalorder %s16, 0
    %p83 = por %p81, %p82
    %s84 = ssub.s32 %s17, %s29
    %p85 = scmp.eq.s32.totalorder %s84, 0
    %s87 = sadd.s32 %s86, 1
    %s88 = scalar_select %p85, %s86, %s87
    %p91 = pneg %p85
    %p92 = scmp.eq.s32.totalorder %s10, 1
    %p93 = por %p91, %p92
    %p94 = scmp.ne.s32.totalorder %s86, %s89
    %p95 = scmp.eq.s32.totalorder %s10, 0
    %p96 = por %p94, %p95
    %p97 = scmp.ne.s32.totalorder %s86, %s89
    %p98 = scmp.eq.s32.totalorder %s15, 1
    %p99 = por %p97, %p98
    %p100 = scmp.ne.s32.totalorder %s89, %s90
    %p101 = scmp.eq.s32.totalorder %s15, 0
    %p102 = por %p100, %p101
    %p103 = scmp.ne.s32.totalorder %s89, %s90
    %p104 = scmp.eq.s32.totalorder %s16, 1
    %p105 = por %p103, %p104
    %p107 = scmp.ne.s32.totalorder %s90, %s106
    %p108 = scmp.eq.s32.totalorder %s16, 0
    %p109 = por %p107, %p108
    %s110 = ssub.s32 %s17, %s29
    %s111 = ssub.s32 %s18, %s25
    %s112 = sor.u32 %s110, %s111
    %p113 = scmp.eq.s32.totalorder %s112, 0
    %s115 = sadd.s32 %s114, 1
    %s116 = scalar_select %p113, %s114, %s115
    %p119 = pneg %p113
    %p120 = scmp.eq.s32.totalorder %s10, 1
    %p121 = por %p119, %p120
    %p122 = scmp.ne.s32.totalorder %s114, %s117
    %p123 = scmp.eq.s32.totalorder %s10, 0
    %p124 = por %p122, %p123
    %p125 = scmp.ne.s32.totalorder %s114, %s117
    %p126 = scmp.eq.s32.totalorder %s15, 1
    %p127 = por %p125, %p126
    %p128 = scmp.ne.s32.totalorder %s117, %s118
    %p129 = scmp.eq.s32.totalorder %s15, 0
    %p130 = por %p128, %p129
    %p131 = scmp.ne.s32.totalorder %s117, %s118
    %p132 = scmp.eq.s32.totalorder %s16, 1
    %p133 = por %p131, %p132
    %p135 = scmp.ne.s32.totalorder %s118, %s134
    %p136 = scmp.eq.s32.totalorder %s16, 0
    %p137 = por %p135, %p136
    %s138 = ssub.s32 %s17, %s29
    %s139 = ssub.s32 %s18, %s25
    %s140 = sor.u32 %s138, %s139
    %p141 = scmp.eq.s32.totalorder %s140, 0
    %s143 = sadd.s32 %s142, 1
    %s144 = scalar_select %p141, %s142, %s143
    %p147 = pneg %p141
    %p148 = scmp.eq.s32.totalorder %s10, 1
    %p149 = por %p147, %p148
    %p150 = scmp.ne.s32.totalorder %s142, %s145
    %p151 = scmp.eq.s32.totalorder %s10, 0
    %p152 = por %p150, %p151
    %p153 = scmp.ne.s32.totalorder %s142, %s145
    %p154 = scmp.eq.s32.totalorder %s15, 1
    %p155 = por %p153, %p154
    %p156 = scmp.ne.s32.totalorder %s145, %s146
    %p157 = scmp.eq.s32.totalorder %s15, 0
    %p158 = por %p156, %p157
    %p159 = scmp.ne.s32.totalorder %s145, %s146
    %p160 = scmp.eq.s32.totalorder %s16, 1
    %p161 = por %p159, %p160
    %p163 = scmp.ne.s32.totalorder %s146, %s162
    %p164 = scmp.eq.s32.totalorder %s16, 0
    %p165 = por %p163, %p164
    %p166 = scmp.le.s32.totalorder 1, %s10
    %p167 = scmp.lt.s32.totalorder %s10, 3
    %p168 = pnand %p166, %p167
    %p169 = pneg %p168
    // Predicated region
    $region9: #{linear_bottleneck_forward.7} parent=5 // pred_check
      _
    $region10: #{linear_bottleneck_forward.7} parent=5 // pred_check_branch
      %171 = sbr.rel (%p168) target = $region12
    $region11: #{linear_bottleneck_forward.7} parent=5 // pred_region
      %s172 = ssub.s32 %s10, 1
    $region12: #{linear_bottleneck_forward.7} parent=5 // pred_fallthru
      _
    %p173 = scmp.lt.s32.totalorder %s10, 2
    // Predicated region
    $region13: #{linear_bottleneck_forward.7} parent=5 // pred_check
      %p174 = pneg %p173
    $region14: #{linear_bottleneck_forward.7} parent=5 // pred_check_branch
      %176 = sbr.rel (%p174) target = $region16
    $region15: #{linear_bottleneck_forward.7} parent=5 // pred_region
      // Predicated region
      $region17: #{linear_bottleneck_forward.7} parent=15 // pred_check
        %p177 = pneg %p44
      $region18: #{linear_bottleneck_forward.7} parent=15 // pred_check_branch
        %179 = sbr.rel (%p177) target = $region20
      $region19: #{linear_bottleneck_forward.7} parent=15 // pred_region
        %s180 = smul.u32 32, %s18
        %p181 = scmp.lt.s32.totalorder %s17, 1
        %s182 = scalar_select %p181, %s17, 1
        %p183 = scmp.lt.s32.totalorder %s180, 31
        %s184 = scalar_select %p183, %s180, 31
        %s185 = smul.addr %s182, 32
        %s186 = sadd.s32 %s184, %s185
        %s187 = smul.addr %s186, 8
        %s188 = scalar_lea.vmem %s0, %s187
        %s189 = smul.u32 32, %s18
      $region20: #{linear_bottleneck_forward.7} parent=15 // pred_fallthru
        _
      // Predicated region
      $region21: #{linear_bottleneck_forward.7} parent=15 // pred_check
        %p190 = pneg %p70
      $region22: #{linear_bottleneck_forward.7} parent=15 // pred_check_branch
        %192 = sbr.rel (%p190) target = $region24
      $region23: #{linear_bottleneck_forward.7} parent=15 // pred_region
        %p193 = scmp.lt.s32.totalorder %s17, 1
        %s194 = scalar_select %p193, %s17, 1
        %s195 = scalar_lea.vmem %s1, %s194
      $region24: #{linear_bottleneck_forward.7} parent=15 // pred_fallthru
        _
      // Predicated region
      $region25: #{linear_bottleneck_forward.7} parent=15 // pred_check
        %p196 = pneg %p96
      $region26: #{linear_bottleneck_forward.7} parent=15 // pred_check_branch
        %198 = sbr.rel (%p196) target = $region28
      $region27: #{linear_bottleneck_forward.7} parent=15 // pred_region
        %p199 = scmp.lt.s32.totalorder %s17, 1
        %s200 = scalar_select %p199, %s17, 1
        %s201 = scalar_lea.vmem %s2, %s200
      $region28: #{linear_bottleneck_forward.7} parent=15 // pred_fallthru
        _
      // Predicated region
      $region29: #{linear_bottleneck_forward.7} parent=15 // pred_check
        %p202 = pneg %p124
      $region30: #{linear_bottleneck_forward.7} parent=15 // pred_check_branch
        %204 = sbr.rel (%p202) target = $region32
      $region31: #{linear_bottleneck_forward.7} parent=15 // pred_region
        %s205 = smul.u32 32, %s18
        %p206 = scmp.lt.s32.totalorder %s17, 1
        %s207 = scalar_select %p206, %s17, 1
        %p208 = scmp.lt.s32.totalorder %s205, 31
        %s209 = scalar_select %p208, %s205, 31
        %s210 = smul.addr %s207, 32
        %s211 = sadd.s32 %s209, %s210
        %s212 = smul.addr %s211, 8
        %s213 = scalar_lea.vmem %s3, %s212
        %s214 = smul.u32 32, %s18
      $region32: #{linear_bottleneck_forward.7} parent=15 // pred_fallthru
        _
    $region16: #{linear_bottleneck_forward.7} parent=5 // pred_fallthru
      _
    %p215 = scmp.le.s32.totalorder 1, %s10
    %p216 = scmp.lt.s32.totalorder %s10, 3
    %p217 = pnand %p215, %p216
    %p218 = pneg %p217
    // Predicated region
    $region33: #{linear_bottleneck_forward.7} parent=5 // pred_check
      _
    $region34: #{linear_bottleneck_forward.7} parent=5 // pred_check_branch
      %220 = sbr.rel (%p217) target = $region36
    $region35: #{linear_bottleneck_forward.7} parent=5 // pred_region
      %s221 = ssub.s32 %s10, 1
      %s222 = smul.u32 32, %s20
      %p223 = scmp.lt.s32.totalorder %s19, 1
      %s224 = scalar_select %p223, %s19, 1
      %p225 = scmp.lt.s32.totalorder %s222, 31
      %s226 = scalar_select %p225, %s222, 31
      %s227 = smul.addr %s224, 32
      %s228 = sadd.s32 %s226, %s227
      %s229 = smul.addr %s228, 8
      %s230 = scalar_lea.vmem %s0, %s229
      %p231 = pneg %p50
      %p232 = pneg %p47
      %p233 = scmp.lt.s32.totalorder %s19, 1
      %s234 = scalar_select %p233, %s19, 1
      %s235 = scalar_lea.vmem %s1, %s234
      %p236 = pneg %p76
      %p237 = pneg %p73
      %p238 = scmp.lt.s32.totalorder %s19, 1
      %s239 = scalar_select %p238, %s19, 1
      %s240 = scalar_lea.vmem %s2, %s239
      %p241 = pneg %p102
      %p242 = pneg %p99
      %s243 = smul.u32 32, %s20
      %p244 = scmp.lt.s32.totalorder %s19, 1
      %s245 = scalar_select %p244, %s19, 1
      %p246 = scmp.lt.s32.totalorder %s243, 31
      %s247 = scalar_select %p246, %s243, 31
      %s248 = smul.addr %s245, 32
      %s249 = sadd.s32 %s247, %s248
      %s250 = smul.addr %s249, 8
      %s251 = scalar_lea.vmem %s3, %s250
      %p252 = pneg %p130
      %p253 = pneg %p127
      %p254 = pneg %p158
      %p255 = pneg %p155
      %s256 = smul.u32 32, %s20
      %p257 = scmp.lt.s32.totalorder %s19, 1
      %s258 = scalar_select %p257, %s19, 1
      %p259 = scmp.lt.s32.totalorder %s256, 31
      %s260 = scalar_select %p259, %s256, 31
      %s261 = smul.addr %s258, 32
      %s262 = sadd.s32 %s260, %s261
      %s263 = smul.addr %s262, 8
      %s264 = scalar_lea.vmem %s4, %s263
      %s265 = smul.u32 32, %s20
      %p266 = scmp.lt.s32.totalorder %s19, 1
      %s267 = scalar_select %p266, %s19, 1
      %p268 = scmp.lt.s32.totalorder %s265, 31
      %s269 = scalar_select %p268, %s265, 31
      %s270 = smul.addr %s267, 32
      %s271 = sadd.s32 %s269, %s270
      %s272 = smul.addr %s271, 8
      %s273 = scalar_lea.vmem %s0, %s272
      %s274 = smul.u32 32, %s20
      %p275 = scmp.lt.s32.totalorder %s19, 1
      %s276 = scalar_select %p275, %s19, 1
      %s277 = scalar_lea.vmem %s1, %s276
      %p278 = scmp.lt.s32.totalorder %s19, 1
      %s279 = scalar_select %p278, %s19, 1
      %s280 = scalar_lea.vmem %s2, %s279
      %s281 = smul.u32 32, %s20
      %p282 = scmp.lt.s32.totalorder %s19, 1
      %s283 = scalar_select %p282, %s19, 1
      %p284 = scmp.lt.s32.totalorder %s281, 31
      %s285 = scalar_select %p284, %s281, 31
      %s286 = smul.addr %s283, 32
      %s287 = sadd.s32 %s285, %s286
      %s288 = smul.addr %s287, 8
      %s289 = scalar_lea.vmem %s3, %s288
      %s290 = smul.u32 32, %s20
      %s291 = smul.u32 32, %s20
      %p292 = scmp.lt.s32.totalorder %s19, 1
      %s293 = scalar_select %p292, %s19, 1
      %p294 = scmp.lt.s32.totalorder %s291, 31
      %s295 = scalar_select %p294, %s291, 31
      %s296 = smul.addr %s293, 32
      %s297 = sadd.s32 %s295, %s296
      %s298 = smul.addr %s297, 8
      %s299 = scalar_lea.vmem %s4, %s298
      %s300 = smul.u32 32, %s20
      %v301 = vld [vmem:[%s273] sm:$0xff]
      %v302 = vld [vmem:[%s273 + $0x8] sm:$0xff]
      %v303 = vld [vmem:[%s273 + $0x10] sm:$0xff]
      %v304 = vld [vmem:[%s273 + $0x18] sm:$0xff]
      %v305 = vld [vmem:[%s273 + $0x20] sm:$0xff]
      %v306 = vld [vmem:[%s273 + $0x28] sm:$0xff]
      %v307 = vld [vmem:[%s273 + $0x30] sm:$0xff]
      %v308 = vld [vmem:[%s273 + $0x38] sm:$0xff]
      %v309 = vld [vmem:[%s273 + $0x40] sm:$0xff]
      %v310 = vld [vmem:[%s273 + $0x48] sm:$0xff]
      %v311 = vld [vmem:[%s273 + $0x50] sm:$0xff]
      %v312 = vld [vmem:[%s273 + $0x58] sm:$0xff]
      %v313 = vld [vmem:[%s273 + $0x60] sm:$0xff]
      %v314 = vld [vmem:[%s273 + $0x68] sm:$0xff]
      %v315 = vld [vmem:[%s273 + $0x70] sm:$0xff]
      %v316 = vld [vmem:[%s273 + $0x78] sm:$0xff]
      %v317 = vld [vmem:[%s273 + $0x80] sm:$0xff]
      %v318 = vld [vmem:[%s273 + $0x88] sm:$0xff]
      %v319 = vld [vmem:[%s273 + $0x90] sm:$0xff]
      %v320 = vld [vmem:[%s273 + $0x98] sm:$0xff]
      %v321 = vld [vmem:[%s273 + $0xa0] sm:$0xff]
      %v322 = vld [vmem:[%s273 + $0xa8] sm:$0xff]
      %v323 = vld [vmem:[%s273 + $0xb0] sm:$0xff]
      %v324 = vld [vmem:[%s273 + $0xb8] sm:$0xff]
      %v325 = vld [vmem:[%s273 + $0xc0] sm:$0xff]
      %v326 = vld [vmem:[%s273 + $0xc8] sm:$0xff]
      %v327 = vld [vmem:[%s273 + $0xd0] sm:$0xff]
      %v328 = vld [vmem:[%s273 + $0xd8] sm:$0xff]
      %v329 = vld [vmem:[%s273 + $0xe0] sm:$0xff]
      %v330 = vld [vmem:[%s273 + $0xe8] sm:$0xff]
      %v331 = vld [vmem:[%s273 + $0xf0] sm:$0xff]
      %v332 = vld [vmem:[%s273 + $0xf8] sm:$0xff]
      %v333 = vld [vmem:[%s277] sm:$0x1]
      %v335 = vlaneseq
      %v336 = vshrl.u32 %v335, 7
      %v337 = vsub.s32 0, %v336
      %v338 = vrot.slane %v333, %v337
      %v340 = vmul.f32 %v301, %v338
      %v341 = vmul.f32 %v302, %v338
      %v342 = vmul.f32 %v303, %v338
      %v343 = vmul.f32 %v304, %v338
      %v344 = vmul.f32 %v305, %v338
      %v345 = vmul.f32 %v306, %v338
      %v346 = vmul.f32 %v307, %v338
      %v347 = vmul.f32 %v308, %v338
      %v348 = vmul.f32 %v309, %v338
      %v349 = vmul.f32 %v310, %v338
      %v350 = vmul.f32 %v311, %v338
      %v351 = vmul.f32 %v312, %v338
      %v352 = vmul.f32 %v313, %v338
      %v353 = vmul.f32 %v314, %v338
      %v354 = vmul.f32 %v315, %v338
      %v355 = vmul.f32 %v316, %v338
      %v356 = vmul.f32 %v317, %v338
      %v357 = vmul.f32 %v318, %v338
      %v358 = vmul.f32 %v319, %v338
      %v359 = vmul.f32 %v320, %v338
      %v360 = vmul.f32 %v321, %v338
      %v361 = vmul.f32 %v322, %v338
      %v362 = vmul.f32 %v323, %v338
      %v363 = vmul.f32 %v324, %v338
      %v364 = vmul.f32 %v325, %v338
      %v365 = vmul.f32 %v326, %v338
      %v366 = vmul.f32 %v327, %v338
      %v367 = vmul.f32 %v328, %v338
      %v368 = vmul.f32 %v329, %v338
      %v369 = vmul.f32 %v330, %v338
      %v370 = vmul.f32 %v331, %v338
      %v371 = vmul.f32 %v332, %v338
      %v372 = vld [vmem:[%s280] sm:$0x1]
      %v374 = vlaneseq
      %v375 = vshrl.u32 %v374, 7
      %v376 = vsub.s32 0, %v375
      %v377 = vrot.slane %v372, %v376
      %v379 = vadd.f32 %v340, %v377
      %v380 = vadd.f32 %v341, %v377
      %v381 = vadd.f32 %v342, %v377
      %v382 = vadd.f32 %v343, %v377
      %v383 = vadd.f32 %v344, %v377
      %v384 = vadd.f32 %v345, %v377
      %v385 = vadd.f32 %v346, %v377
      %v386 = vadd.f32 %v347, %v377
      %v387 = vadd.f32 %v348, %v377
      %v388 = vadd.f32 %v349, %v377
      %v389 = vadd.f32 %v350, %v377
      %v390 = vadd.f32 %v351, %v377
      %v391 = vadd.f32 %v352, %v377
      %v392 = vadd.f32 %v353, %v377
      %v393 = vadd.f32 %v354, %v377
      %v394 = vadd.f32 %v355, %v377
      %v395 = vadd.f32 %v356, %v377
      %v396 = vadd.f32 %v357, %v377
      %v397 = vadd.f32 %v358, %v377
      %v398 = vadd.f32 %v359, %v377
      %v399 = vadd.f32 %v360, %v377
      %v400 = vadd.f32 %v361, %v377
      %v401 = vadd.f32 %v362, %v377
      %v402 = vadd.f32 %v363, %v377
      %v403 = vadd.f32 %v364, %v377
      %v404 = vadd.f32 %v365, %v377
      %v405 = vadd.f32 %v366, %v377
      %v406 = vadd.f32 %v367, %v377
      %v407 = vadd.f32 %v368, %v377
      %v408 = vadd.f32 %v369, %v377
      %v409 = vadd.f32 %v370, %v377
      %v410 = vadd.f32 %v371, %v377
      %v411 = vld [vmem:[%s289] sm:$0xff]
      %v412 = vld [vmem:[%s289 + $0x8] sm:$0xff]
      %v413 = vld [vmem:[%s289 + $0x10] sm:$0xff]
      %v414 = vld [vmem:[%s289 + $0x18] sm:$0xff]
      %v415 = vld [vmem:[%s289 + $0x20] sm:$0xff]
      %v416 = vld [vmem:[%s289 + $0x28] sm:$0xff]
      %v417 = vld [vmem:[%s289 + $0x30] sm:$0xff]
      %v418 = vld [vmem:[%s289 + $0x38] sm:$0xff]
      %v419 = vld [vmem:[%s289 + $0x40] sm:$0xff]
      %v420 = vld [vmem:[%s289 + $0x48] sm:$0xff]
      %v421 = vld [vmem:[%s289 + $0x50] sm:$0xff]
      %v422 = vld [vmem:[%s289 + $0x58] sm:$0xff]
      %v423 = vld [vmem:[%s289 + $0x60] sm:$0xff]
      %v424 = vld [vmem:[%s289 + $0x68] sm:$0xff]
      %v425 = vld [vmem:[%s289 + $0x70] sm:$0xff]
      %v426 = vld [vmem:[%s289 + $0x78] sm:$0xff]
      %v427 = vld [vmem:[%s289 + $0x80] sm:$0xff]
      %v428 = vld [vmem:[%s289 + $0x88] sm:$0xff]
      %v429 = vld [vmem:[%s289 + $0x90] sm:$0xff]
      %v430 = vld [vmem:[%s289 + $0x98] sm:$0xff]
      %v431 = vld [vmem:[%s289 + $0xa0] sm:$0xff]
      %v432 = vld [vmem:[%s289 + $0xa8] sm:$0xff]
      %v433 = vld [vmem:[%s289 + $0xb0] sm:$0xff]
      %v434 = vld [vmem:[%s289 + $0xb8] sm:$0xff]
      %v435 = vld [vmem:[%s289 + $0xc0] sm:$0xff]
      %v436 = vld [vmem:[%s289 + $0xc8] sm:$0xff]
      %v437 = vld [vmem:[%s289 + $0xd0] sm:$0xff]
      %v438 = vld [vmem:[%s289 + $0xd8] sm:$0xff]
      %v439 = vld [vmem:[%s289 + $0xe0] sm:$0xff]
      %v440 = vld [vmem:[%s289 + $0xe8] sm:$0xff]
      %v441 = vld [vmem:[%s289 + $0xf0] sm:$0xff]
      %v442 = vld [vmem:[%s289 + $0xf8] sm:$0xff]
      %v443 = vadd.f32 %v379, %v411
      %v444 = vadd.f32 %v380, %v412
      %v445 = vadd.f32 %v381, %v413
      %v446 = vadd.f32 %v382, %v414
      %v447 = vadd.f32 %v383, %v415
      %v448 = vadd.f32 %v384, %v416
      %v449 = vadd.f32 %v385, %v417
      %v450 = vadd.f32 %v386, %v418
      %v451 = vadd.f32 %v387, %v419
      %v452 = vadd.f32 %v388, %v420
      %v453 = vadd.f32 %v389, %v421
      %v454 = vadd.f32 %v390, %v422
      %v455 = vadd.f32 %v391, %v423
      %v456 = vadd.f32 %v392, %v424
      %v457 = vadd.f32 %v393, %v425
      %v458 = vadd.f32 %v394, %v426
      %v459 = vadd.f32 %v395, %v427
      %v460 = vadd.f32 %v396, %v428
      %v461 = vadd.f32 %v397, %v429
      %v462 = vadd.f32 %v398, %v430
      %v463 = vadd.f32 %v399, %v431
      %v464 = vadd.f32 %v400, %v432
      %v465 = vadd.f32 %v401, %v433
      %v466 = vadd.f32 %v402, %v434
      %v467 = vadd.f32 %v403, %v435
      %v468 = vadd.f32 %v404, %v436
      %v469 = vadd.f32 %v405, %v437
      %v470 = vadd.f32 %v406, %v438
      %v471 = vadd.f32 %v407, %v439
      %v472 = vadd.f32 %v408, %v440
      %v473 = vadd.f32 %v409, %v441
      %v474 = vadd.f32 %v410, %v442
      %vm475 = vcmask 31744
      %476 = vst.msk [vmem:[%s299] sm:$0xff] %vm475, %v443
      %477 = vst.msk [vmem:[%s299 + $0x8] sm:$0xff] %vm475, %v444
      %478 = vst.msk [vmem:[%s299 + $0x10] sm:$0xff] %vm475, %v445
      %479 = vst.msk [vmem:[%s299 + $0x18] sm:$0xff] %vm475, %v446
      %480 = vst.msk [vmem:[%s299 + $0x20] sm:$0xff] %vm475, %v447
      %481 = vst.msk [vmem:[%s299 + $0x28] sm:$0xff] %vm475, %v448
      %482 = vst.msk [vmem:[%s299 + $0x30] sm:$0xff] %vm475, %v449
      %483 = vst.msk [vmem:[%s299 + $0x38] sm:$0xff] %vm475, %v450
      %484 = vst.msk [vmem:[%s299 + $0x40] sm:$0xff] %vm475, %v451
      %485 = vst.msk [vmem:[%s299 + $0x48] sm:$0xff] %vm475, %v452
      %486 = vst.msk [vmem:[%s299 + $0x50] sm:$0xff] %vm475, %v453
      %487 = vst.msk [vmem:[%s299 + $0x58] sm:$0xff] %vm475, %v454
      %488 = vst.msk [vmem:[%s299 + $0x60] sm:$0xff] %vm475, %v455
      %489 = vst.msk [vmem:[%s299 + $0x68] sm:$0xff] %vm475, %v456
      %490 = vst.msk [vmem:[%s299 + $0x70] sm:$0xff] %vm475, %v457
      %491 = vst.msk [vmem:[%s299 + $0x78] sm:$0xff] %vm475, %v458
      %492 = vst.msk [vmem:[%s299 + $0x80] sm:$0xff] %vm475, %v459
      %493 = vst.msk [vmem:[%s299 + $0x88] sm:$0xff] %vm475, %v460
      %494 = vst.msk [vmem:[%s299 + $0x90] sm:$0xff] %vm475, %v461
      %495 = vst.msk [vmem:[%s299 + $0x98] sm:$0xff] %vm475, %v462
      %496 = vst.msk [vmem:[%s299 + $0xa0] sm:$0xff] %vm475, %v463
      %497 = vst.msk [vmem:[%s299 + $0xa8] sm:$0xff] %vm475, %v464
      %498 = vst.msk [vmem:[%s299 + $0xb0] sm:$0xff] %vm475, %v465
      %499 = vst.msk [vmem:[%s299 + $0xb8] sm:$0xff] %vm475, %v466
      %500 = vst.msk [vmem:[%s299 + $0xc0] sm:$0xff] %vm475, %v467
      %501 = vst.msk [vmem:[%s299 + $0xc8] sm:$0xff] %vm475, %v468
      %502 = vst.msk [vmem:[%s299 + $0xd0] sm:$0xff] %vm475, %v469
      %503 = vst.msk [vmem:[%s299 + $0xd8] sm:$0xff] %vm475, %v470
      %504 = vst.msk [vmem:[%s299 + $0xe0] sm:$0xff] %vm475, %v471
      %505 = vst.msk [vmem:[%s299 + $0xe8] sm:$0xff] %vm475, %v472
      %506 = vst.msk [vmem:[%s299 + $0xf0] sm:$0xff] %vm475, %v473
      %507 = vst.msk [vmem:[%s299 + $0xf8] sm:$0xff] %vm475, %v474
      %s508 = smul.u32 32, %s20
      %p509 = scmp.lt.s32.totalorder %s19, 1
      %s510 = scalar_select %p509, %s19, 1
      %p511 = scmp.lt.s32.totalorder %s508, 31
      %s512 = scalar_select %p511, %s508, 31
      %s513 = smul.addr %s510, 32
      %s514 = sadd.s32 %s512, %s513
      %s515 = smul.addr %s514, 8
      %s516 = scalar_lea.vmem %s4, %s515
      // Predicated region
      $region37: #{linear_bottleneck_forward.7} parent=35 // pred_check
        %p517 = pneg %p155
      $region38: #{linear_bottleneck_forward.7} parent=35 // pred_check_branch
        %519 = sbr.rel (%p517) target = $region40
      $region39: #{linear_bottleneck_forward.7} parent=35 // pred_region
        %s520 = smul.u32 32, %s20
      $region40: #{linear_bottleneck_forward.7} parent=35 // pred_fallthru
        _
    $region36: #{linear_bottleneck_forward.7} parent=5 // pred_fallthru
      _
    %p521 = scmp.le.s32.totalorder 2, %s10
    // Predicated region
    $region41: #{linear_bottleneck_forward.7} parent=5 // pred_check
      %p522 = pneg %p521
    $region42: #{linear_bottleneck_forward.7} parent=5 // pred_check_branch
      %524 = sbr.rel (%p522) target = $region44
    $region43: #{linear_bottleneck_forward.7} parent=5 // pred_region
      %s525 = ssub.s32 %s10, 2
      // Predicated region
      $region45: #{linear_bottleneck_forward.7} parent=43 // pred_check
        %p526 = pneg %p161
      $region46: #{linear_bottleneck_forward.7} parent=43 // pred_check_branch
        %528 = sbr.rel (%p526) target = $region48
      $region47: #{linear_bottleneck_forward.7} parent=43 // pred_region
        %s529 = smul.u32 32, %s22
        %p530 = scmp.lt.s32.totalorder %s21, 1
        %s531 = scalar_select %p530, %s21, 1
        %p532 = scmp.lt.s32.totalorder %s529, 31
        %s533 = scalar_select %p532, %s529, 31
        %s534 = smul.addr %s531, 32
        %s535 = sadd.s32 %s533, %s534
        %s536 = smul.addr %s535, 8
        %s537 = scalar_lea.vmem %s4, %s536
      $region48: #{linear_bottleneck_forward.7} parent=43 // pred_fallthru
        _
    $region44: #{linear_bottleneck_forward.7} parent=5 // pred_fallthru
      _
  $region6: #{linear_bottleneck_forward.7} parent=0 // loop_footer
    %s14 = sadd.s32 1, %s10
  $region7: #{linear_bottleneck_forward.7} parent=0 // loop_footer_branch
    %9 = sbr.rel target = $region3
  $region8: #{linear_bottleneck_forward.7} parent=0 // loop_exit
    _

// kernel: linear_bottleneck_forward.5
$region0: #{linear_bottleneck_forward.5}
  #allocation0 [shape = 'u32[]', space=smem, size = 0x4, offset = 0x4, fixed_abs, tag = 'smem constant byte address 0x4 - core index']
  #allocation1 [shape = 'u32[144,128]{1,0:T(1,128)}', space=vmem, size = 0x12000, scoped, tag = 'internal scratch']
  #allocation2 [shape = 'f32[18,32,24]{2,1,0:T(8,128)}', space=vmem, size = 0x48000, scoped, tag = 'scratch operand']
  %s0 = inlined_call_operand.vmem [shape: f32[2,16,16,24], index: 0, kind: input, shape index: {}]
  %s1 = inlined_call_operand.vmem [shape: f32[2,1,24], index: 1, kind: input, shape index: {}]
  %s2 = inlined_call_operand.vmem [shape: f32[2,1,24], index: 2, kind: input, shape index: {}]
  %s3 = inlined_call_operand.vmem [shape: f32[3,3,24], index: 3, kind: input, shape index: {}]
  %s4 = inlined_call_operand.vmem [shape: f32[1,1,24], index: 4, kind: input, shape index: {}]
  %s5 = inlined_call_operand.vmem [shape: f32[2,16,16,24], index: 5, kind: output, shape index: {0}]
  %s6 = inlined_call_operand.vmem [shape: f32[2,1,24], index: 6, kind: output, shape index: {1}]
  %s7 = inlined_call_operand.vmem [shape: f32[2,1,24], index: 7, kind: output, shape index: {2}]
  %8 = xla_tuple %s5, %s6, %s7
  %s9 = sld [smem:[#allocation0]]
  $region69: #{linear_bottleneck_forward.5} parent=0
    _
  %s11 = ssub.s32 1, %s9
  %s12 = scalar_select 0, %s11, %s9
  loop: start=0, step=1, limit=4
  $region2: #{linear_bottleneck_forward.5} parent=0 // loop_pre_header
    _
  $region3: #{linear_bottleneck_forward.5} parent=0 // loop_header
    %s14 = sphi 0, %s18
    %p15 = scmp.ge.s32.totalorder %s14, 4
    %s24 = sphi 0, %s26
    %s27 = sphi 0, %s24
    %s28 = sphi 0, %s27
    %s44 = sphi 0, %s28
    %s50 = sphi 0, %s52
    %s53 = sphi 0, %s50
    %s54 = sphi 0, %s53
    %s70 = sphi 0, %s54
    %s76 = sphi 0, %s78
    %s79 = sphi 0, %s76
    %s80 = sphi 0, %s79
    %s96 = sphi 0, %s80
    %s100 = sphi 0, %s100
    %s102 = sphi 0, %s100
    %s103 = sphi 0, %s102
    %s117 = sphi 0, %s103
    %s121 = sphi 0, %s121
    %s123 = sphi 0, %s121
    %s124 = sphi 0, %s123
    %s138 = sphi 0, %s124
    %s144 = sphi 0, %s146
    %s147 = sphi 0, %s144
    %s148 = sphi 0, %s147
    %s164 = sphi 0, %s148
    %s170 = sphi 0, %s172
    %s173 = sphi 0, %s170
    %s174 = sphi 0, %s173
    %s190 = sphi 0, %s174
    %s196 = sphi 0, %s198
    %s199 = sphi 0, %s196
    %s200 = sphi 0, %s199
    %s216 = sphi 0, %s200
  $region4: #{linear_bottleneck_forward.5} parent=0 // loop_header_branch
    %17 = sbr.rel (%p15) target = $region8
  $region5: #{linear_bottleneck_forward.5} parent=0 // loop_body
    %s19 = ssub.s32 %s14, 1
    %s20 = ssub.s32 %s14, 2
    %s21 = sadd.s32 %s14, 1
    %s22 = ssub.s32 %s14, %s21
    %p23 = scmp.eq.s32.totalorder %s22, 0
    %s25 = sadd.s32 %s24, 1
    %s26 = scalar_select %p23, %s24, %s25
    %p29 = pneg %p23
    %p30 = scmp.eq.s32.totalorder %s14, 1
    %p31 = por %p29, %p30
    %p32 = scmp.ne.s32.totalorder %s24, %s27
    %p33 = scmp.eq.s32.totalorder %s14, 0
    %p34 = por %p32, %p33
    %p35 = scmp.ne.s32.totalorder %s24, %s27
    %p36 = scmp.eq.s32.totalorder %s19, 1
    %p37 = por %p35, %p36
    %p38 = scmp.ne.s32.totalorder %s27, %s28
    %p39 = scmp.eq.s32.totalorder %s19, 0
    %p40 = por %p38, %p39
    %p41 = scmp.ne.s32.totalorder %s27, %s28
    %p42 = scmp.eq.s32.totalorder %s20, 1
    %p43 = por %p41, %p42
    %p45 = scmp.ne.s32.totalorder %s28, %s44
    %p46 = scmp.eq.s32.totalorder %s20, 0
    %p47 = por %p45, %p46
    %s48 = ssub.s32 %s14, %s21
    %p49 = scmp.eq.s32.totalorder %s48, 0
    %s51 = sadd.s32 %s50, 1
    %s52 = scalar_select %p49, %s50, %s51
    %p55 = pneg %p49
    %p56 = scmp.eq.s32.totalorder %s14, 1
    %p57 = por %p55, %p56
    %p58 = scmp.ne.s32.totalorder %s50, %s53
    %p59 = scmp.eq.s32.totalorder %s14, 0
    %p60 = por %p58, %p59
    %p61 = scmp.ne.s32.totalorder %s50, %s53
    %p62 = scmp.eq.s32.totalorder %s19, 1
    %p63 = por %p61, %p62
    %p64 = scmp.ne.s32.totalorder %s53, %s54
    %p65 = scmp.eq.s32.totalorder %s19, 0
    %p66 = por %p64, %p65
    %p67 = scmp.ne.s32.totalorder %s53, %s54
    %p68 = scmp.eq.s32.totalorder %s20, 1
    %p69 = por %p67, %p68
    %p71 = scmp.ne.s32.totalorder %s54, %s70
    %p72 = scmp.eq.s32.totalorder %s20, 0
    %p73 = por %p71, %p72
    %s74 = ssub.s32 %s14, %s21
    %p75 = scmp.eq.s32.totalorder %s74, 0
    %s77 = sadd.s32 %s76, 1
    %s78 = scalar_select %p75, %s76, %s77
    %p81 = pneg %p75
    %p82 = scmp.eq.s32.totalorder %s14, 1
    %p83 = por %p81, %p82
    %p84 = scmp.ne.s32.totalorder %s76, %s79
    %p85 = scmp.eq.s32.totalorder %s14, 0
    %p86 = por %p84, %p85
    %p87 = scmp.ne.s32.totalorder %s76, %s79
    %p88 = scmp.eq.s32.totalorder %s19, 1
    %p89 = por %p87, %p88
    %p90 = scmp.ne.s32.totalorder %s79, %s80
    %p91 = scmp.eq.s32.totalorder %s19, 0
    %p92 = por %p90, %p91
    %p93 = scmp.ne.s32.totalorder %s79, %s80
    %p94 = scmp.eq.s32.totalorder %s20, 1
    %p95 = por %p93, %p94
    %p97 = scmp.ne.s32.totalorder %s80, %s96
    %p98 = scmp.eq.s32.totalorder %s20, 0
    %p99 = por %p97, %p98
    %s101 = sadd.s32 %s100, 1
    %p104 = scmp.eq.s32.totalorder %s14, 1
    %p105 = scmp.ne.s32.totalorder %s100, %s102
    %p106 = scmp.eq.s32.totalorder %s14, 0
    %p107 = por %p105, %p106
    %p108 = scmp.ne.s32.totalorder %s100, %s102
    %p109 = scmp.eq.s32.totalorder %s19, 1
    %p110 = por %p108, %p109
    %p111 = scmp.ne.s32.totalorder %s102, %s103
    %p112 = scmp.eq.s32.totalorder %s19, 0
    %p113 = por %p111, %p112
    %p114 = scmp.ne.s32.totalorder %s102, %s103
    %p115 = scmp.eq.s32.totalorder %s20, 1
    %p116 = por %p114, %p115
    %p118 = scmp.ne.s32.totalorder %s103, %s117
    %p119 = scmp.eq.s32.totalorder %s20, 0
    %p120 = por %p118, %p119
    %s122 = sadd.s32 %s121, 1
    %p125 = scmp.eq.s32.totalorder %s14, 1
    %p126 = scmp.ne.s32.totalorder %s121, %s123
    %p127 = scmp.eq.s32.totalorder %s14, 0
    %p128 = por %p126, %p127
    %p129 = scmp.ne.s32.totalorder %s121, %s123
    %p130 = scmp.eq.s32.totalorder %s19, 1
    %p131 = por %p129, %p130
    %p132 = scmp.ne.s32.totalorder %s123, %s124
    %p133 = scmp.eq.s32.totalorder %s19, 0
    %p134 = por %p132, %p133
    %p135 = scmp.ne.s32.totalorder %s123, %s124
    %p136 = scmp.eq.s32.totalorder %s20, 1
    %p137 = por %p135, %p136
    %p139 = scmp.ne.s32.totalorder %s124, %s138
    %p140 = scmp.eq.s32.totalorder %s20, 0
    %p141 = por %p139, %p140
    %s142 = ssub.s32 %s14, %s21
    %p143 = scmp.eq.s32.totalorder %s142, 0
    %s145 = sadd.s32 %s144, 1
    %s146 = scalar_select %p143, %s144, %s145
    %p149 = pneg %p143
    %p150 = scmp.eq.s32.totalorder %s14, 1
    %p151 = por %p149, %p150
    %p152 = scmp.ne.s32.totalorder %s144, %s147
    %p153 = scmp.eq.s32.totalorder %s14, 0
    %p154 = por %p152, %p153
    %p155 = scmp.ne.s32.totalorder %s144, %s147
    %p156 = scmp.eq.s32.totalorder %s19, 1
    %p157 = por %p155, %p156
    %p158 = scmp.ne.s32.totalorder %s147, %s148
    %p159 = scmp.eq.s32.totalorder %s19, 0
    %p160 = por %p158, %p159
    %p161 = scmp.ne.s32.totalorder %s147, %s148
    %p162 = scmp.eq.s32.totalorder %s20, 1
    %p163 = por %p161, %p162
    %p165 = scmp.ne.s32.totalorder %s148, %s164
    %p166 = scmp.eq.s32.totalorder %s20, 0
    %p167 = por %p165, %p166
    %s168 = ssub.s32 %s14, %s21
    %p169 = scmp.eq.s32.totalorder %s168, 0
    %s171 = sadd.s32 %s170, 1
    %s172 = scalar_select %p169, %s170, %s171
    %p175 = pneg %p169
    %p176 = scmp.eq.s32.totalorder %s14, 1
    %p177 = por %p175, %p176
    %p178 = scmp.ne.s32.totalorder %s170, %s173
    %p179 = scmp.eq.s32.totalorder %s14, 0
    %p180 = por %p178, %p179
    %p181 = scmp.ne.s32.totalorder %s170, %s173
    %p182 = scmp.eq.s32.totalorder %s19, 1
    %p183 = por %p181, %p182
    %p184 = scmp.ne.s32.totalorder %s173, %s174
    %p185 = scmp.eq.s32.totalorder %s19, 0
    %p186 = por %p184, %p185
    %p187 = scmp.ne.s32.totalorder %s173, %s174
    %p188 = scmp.eq.s32.totalorder %s20, 1
    %p189 = por %p187, %p188
    %p191 = scmp.ne.s32.totalorder %s174, %s190
    %p192 = scmp.eq.s32.totalorder %s20, 0
    %p193 = por %p191, %p192
    %s194 = ssub.s32 %s14, %s21
    %p195 = scmp.eq.s32.totalorder %s194, 0
    %s197 = sadd.s32 %s196, 1
    %s198 = scalar_select %p195, %s196, %s197
    %p201 = pneg %p195
    %p202 = scmp.eq.s32.totalorder %s14, 1
    %p203 = por %p201, %p202
    %p204 = scmp.ne.s32.totalorder %s196, %s199
    %p205 = scmp.eq.s32.totalorder %s14, 0
    %p206 = por %p204, %p205
    %p207 = scmp.ne.s32.totalorder %s196, %s199
    %p208 = scmp.eq.s32.totalorder %s19, 1
    %p209 = por %p207, %p208
    %p210 = scmp.ne.s32.totalorder %s199, %s200
    %p211 = scmp.eq.s32.totalorder %s19, 0
    %p212 = por %p210, %p211
    %p213 = scmp.ne.s32.totalorder %s199, %s200
    %p214 = scmp.eq.s32.totalorder %s20, 1
    %p215 = por %p213, %p214
    %p217 = scmp.ne.s32.totalorder %s200, %s216
    %p218 = scmp.eq.s32.totalorder %s20, 0
    %p219 = por %p217, %p218
    %p220 = scmp.le.s32.totalorder 1, %s14
    %p221 = scmp.lt.s32.totalorder %s14, 3
    %p222 = pnand %p220, %p221
    %p223 = pneg %p222
    // Predicated region
    $region9: #{linear_bottleneck_forward.5} parent=5 // pred_check
      _
    $region10: #{linear_bottleneck_forward.5} parent=5 // pred_check_branch
      %225 = sbr.rel (%p222) target = $region12
    $region11: #{linear_bottleneck_forward.5} parent=5 // pred_region
      %s226 = ssub.s32 %s14, 1
      // Predicated region
      $region13: #{linear_bottleneck_forward.5} parent=11 // pred_check
        %p227 = pneg %p113
      $region14: #{linear_bottleneck_forward.5} parent=11 // pred_check_branch
        %229 = sbr.rel (%p227) target = $region16
      $region15: #{linear_bottleneck_forward.5} parent=11 // pred_region
        _
      $region16: #{linear_bottleneck_forward.5} parent=11 // pred_fallthru
        _
      // Predicated region
      $region17: #{linear_bottleneck_forward.5} parent=11 // pred_check
        %p230 = pneg %p134
      $region18: #{linear_bottleneck_forward.5} parent=11 // pred_check_branch
        %232 = sbr.rel (%p230) target = $region20
      $region19: #{linear_bottleneck_forward.5} parent=11 // pred_region
        _
      $region20: #{linear_bottleneck_forward.5} parent=11 // pred_fallthru
        _
    $region12: #{linear_bottleneck_forward.5} parent=5 // pred_fallthru
      _
    %p233 = scmp.lt.s32.totalorder %s14, 2
    // Predicated region
    $region21: #{linear_bottleneck_forward.5} parent=5 // pred_check
      %p234 = pneg %p233
    $region22: #{linear_bottleneck_forward.5} parent=5 // pred_check_branch
      %236 = sbr.rel (%p234) target = $region24
    $region23: #{linear_bottleneck_forward.5} parent=5 // pred_region
      // Predicated region
      $region25: #{linear_bottleneck_forward.5} parent=23 // pred_check
        %p237 = pneg %p34
      $region26: #{linear_bottleneck_forward.5} parent=23 // pred_check_branch
        %239 = sbr.rel (%p237) target = $region28
      $region27: #{linear_bottleneck_forward.5} parent=23 // pred_region
        %p240 = scmp.lt.s32.totalorder %s14, 1
        %s241 = scalar_select %p240, %s14, 1
        %s242 = smul.addr %s241, 32
        %s243 = smul.addr %s242, 8
        %s244 = scalar_lea.vmem %s0, %s243
      $region28: #{linear_bottleneck_forward.5} parent=23 // pred_fallthru
        _
      // Predicated region
      $region29: #{linear_bottleneck_forward.5} parent=23 // pred_check
        %p245 = pneg %p60
      $region30: #{linear_bottleneck_forward.5} parent=23 // pred_check_branch
        %247 = sbr.rel (%p245) target = $region32
      $region31: #{linear_bottleneck_forward.5} parent=23 // pred_region
        %p248 = scmp.lt.s32.totalorder %s14, 1
        %s249 = scalar_select %p248, %s14, 1
        %s250 = scalar_lea.vmem %s1, %s249
      $region32: #{linear_bottleneck_forward.5} parent=23 // pred_fallthru
        _
      // Predicated region
      $region33: #{linear_bottleneck_forward.5} parent=23 // pred_check
        %p251 = pneg %p86
      $region34: #{linear_bottleneck_forward.5} parent=23 // pred_check_branch
        %253 = sbr.rel (%p251) target = $region36
      $region35: #{linear_bottleneck_forward.5} parent=23 // pred_region
        %p254 = scmp.lt.s32.totalorder %s14, 1
        %s255 = scalar_select %p254, %s14, 1
        %s256 = scalar_lea.vmem %s2, %s255
      $region36: #{linear_bottleneck_forward.5} parent=23 // pred_fallthru
        _
    $region24: #{linear_bottleneck_forward.5} parent=5 // pred_fallthru
      _
    %p257 = scmp.le.s32.totalorder 1, %s14
    %p258 = scmp.lt.s32.totalorder %s14, 3
    %p259 = pnand %p257, %p258
    %p260 = pneg %p259
    // Predicated region
    $region37: #{linear_bottleneck_forward.5} parent=5 // pred_check
      _
    $region38: #{linear_bottleneck_forward.5} parent=5 // pred_check_branch
      %262 = sbr.rel (%p259) target = $region40
    $region39: #{linear_bottleneck_forward.5} parent=5 // pred_region
      %s263 = ssub.s32 %s14, 1
      %p264 = scmp.lt.s32.totalorder %s19, 1
      %s265 = scalar_select %p264, %s19, 1
      %s266 = smul.addr %s265, 32
      %s267 = smul.addr %s266, 8
      %s268 = scalar_lea.vmem %s0, %s267
      %p269 = pneg %p40
      %p270 = pneg %p37
      %p271 = scmp.lt.s32.totalorder %s19, 1
      %s272 = scalar_select %p271, %s19, 1
      %s273 = scalar_lea.vmem %s1, %s272
      %p274 = pneg %p66
      %p275 = pneg %p63
      %p276 = scmp.lt.s32.totalorder %s19, 1
      %s277 = scalar_select %p276, %s19, 1
      %s278 = scalar_lea.vmem %s2, %s277
      %p279 = pneg %p92
      %p280 = pneg %p89
      %p281 = pneg %p113
      %p282 = pneg %p110
      %p283 = pneg %p134
      %p284 = pneg %p131
      %p285 = pneg %p160
      %p286 = pneg %p157
      %p287 = scmp.lt.s32.totalorder %s19, 1
      %s288 = scalar_select %p287, %s19, 1
      %s289 = smul.addr %s288, 32
      %s290 = smul.addr %s289, 8
      %s291 = scalar_lea.vmem %s5, %s290
      %p292 = pneg %p186
      %p293 = pneg %p183
      %p294 = scmp.lt.s32.totalorder %s19, 1
      %s295 = scalar_select %p294, %s19, 1
      %s296 = scalar_lea.vmem %s6, %s295
      %p297 = pneg %p212
      %p298 = pneg %p209
      %p299 = scmp.lt.s32.totalorder %s19, 1
      %s300 = scalar_select %p299, %s19, 1
      %s301 = scalar_lea.vmem %s7, %s300
      %p302 = scmp.lt.s32.totalorder %s19, 1
      %s303 = scalar_select %p302, %s19, 1
      %s304 = smul.addr %s303, 32
      %s305 = smul.addr %s304, 8
      %s306 = scalar_lea.vmem %s0, %s305
      %p307 = scmp.lt.s32.totalorder %s19, 1
      %s308 = scalar_select %p307, %s19, 1
      %s309 = scalar_lea.vmem %s1, %s308
      %p310 = scmp.lt.s32.totalorder %s19, 1
      %s311 = scalar_select %p310, %s19, 1
      %s312 = scalar_lea.vmem %s2, %s311
      %p313 = scmp.lt.s32.totalorder %s19, 1
      %s314 = scalar_select %p313, %s19, 1
      %s315 = smul.addr %s314, 32
      %s316 = smul.addr %s315, 8
      %s317 = scalar_lea.vmem %s5, %s316
      %p318 = scmp.lt.s32.totalorder %s19, 1
      %s319 = scalar_select %p318, %s19, 1
      %s320 = scalar_lea.vmem %s6, %s319
      %p321 = scmp.lt.s32.totalorder %s19, 1
      %s322 = scalar_select %p321, %s19, 1
      %s323 = scalar_lea.vmem %s7, %s322
      %v324 = vld [vmem:[%s306] sm:$0xff]
      %v325 = vld [vmem:[%s306 + $0x8] sm:$0xff]
      %v326 = vld [vmem:[%s306 + $0x10] sm:$0xff]
      %v327 = vld [vmem:[%s306 + $0x18] sm:$0xff]
      %v328 = vld [vmem:[%s306 + $0x20] sm:$0xff]
      %v329 = vld [vmem:[%s306 + $0x28] sm:$0xff]
      %v330 = vld [vmem:[%s306 + $0x30] sm:$0xff]
      %v331 = vld [vmem:[%s306 + $0x38] sm:$0xff]
      %v332 = vld [vmem:[%s306 + $0x40] sm:$0xff]
      %v333 = vld [vmem:[%s306 + $0x48] sm:$0xff]
      %v334 = vld [vmem:[%s306 + $0x50] sm:$0xff]
      %v335 = vld [vmem:[%s306 + $0x58] sm:$0xff]
      %v336 = vld [vmem:[%s306 + $0x60] sm:$0xff]
      %v337 = vld [vmem:[%s306 + $0x68] sm:$0xff]
      %v338 = vld [vmem:[%s306 + $0x70] sm:$0xff]
      %v339 = vld [vmem:[%s306 + $0x78] sm:$0xff]
      %v340 = vld [vmem:[%s306 + $0x80] sm:$0xff]
      %v341 = vld [vmem:[%s306 + $0x88] sm:$0xff]
      %v342 = vld [vmem:[%s306 + $0x90] sm:$0xff]
      %v343 = vld [vmem:[%s306 + $0x98] sm:$0xff]
      %v344 = vld [vmem:[%s306 + $0xa0] sm:$0xff]
      %v345 = vld [vmem:[%s306 + $0xa8] sm:$0xff]
      %v346 = vld [vmem:[%s306 + $0xb0] sm:$0xff]
      %v347 = vld [vmem:[%s306 + $0xb8] sm:$0xff]
      %v348 = vld [vmem:[%s306 + $0xc0] sm:$0xff]
      %v349 = vld [vmem:[%s306 + $0xc8] sm:$0xff]
      %v350 = vld [vmem:[%s306 + $0xd0] sm:$0xff]
      %v351 = vld [vmem:[%s306 + $0xd8] sm:$0xff]
      %v352 = vld [vmem:[%s306 + $0xe0] sm:$0xff]
      %v353 = vld [vmem:[%s306 + $0xe8] sm:$0xff]
      %v354 = vld [vmem:[%s306 + $0xf0] sm:$0xff]
      %v355 = vld [vmem:[%s306 + $0xf8] sm:$0xff]
      %v356 = vld [vmem:[%s309] sm:$0x1]
      %v358 = vlaneseq
      %v359 = vshrl.u32 %v358, 7
      %v360 = vsub.s32 0, %v359
      %v361 = vrot.slane %v356, %v360
      %v363 = vmul.f32 %v324, %v361
      %v364 = vmul.f32 %v325, %v361
      %v365 = vmul.f32 %v326, %v361
      %v366 = vmul.f32 %v327, %v361
      %v367 = vmul.f32 %v328, %v361
      %v368 = vmul.f32 %v329, %v361
      %v369 = vmul.f32 %v330, %v361
      %v370 = vmul.f32 %v331, %v361
      %v371 = vmul.f32 %v332, %v361
      %v372 = vmul.f32 %v333, %v361
      %v373 = vmul.f32 %v334, %v361
      %v374 = vmul.f32 %v335, %v361
      %v375 = vmul.f32 %v336, %v361
      %v376 = vmul.f32 %v337, %v361
      %v377 = vmul.f32 %v338, %v361
      %v378 = vmul.f32 %v339, %v361
      %v379 = vmul.f32 %v340, %v361
      %v380 = vmul.f32 %v341, %v361
      %v381 = vmul.f32 %v342, %v361
      %v382 = vmul.f32 %v343, %v361
      %v383 = vmul.f32 %v344, %v361
      %v384 = vmul.f32 %v345, %v361
      %v385 = vmul.f32 %v346, %v361
      %v386 = vmul.f32 %v347, %v361
      %v387 = vmul.f32 %v348, %v361
      %v388 = vmul.f32 %v349, %v361
      %v389 = vmul.f32 %v350, %v361
      %v390 = vmul.f32 %v351, %v361
      %v391 = vmul.f32 %v352, %v361
      %v392 = vmul.f32 %v353, %v361
      %v393 = vmul.f32 %v354, %v361
      %v394 = vmul.f32 %v355, %v361
      %v395 = vld [vmem:[%s312] sm:$0x1]
      %v397 = vlaneseq
      %v398 = vshrl.u32 %v397, 7
      %v399 = vsub.s32 0, %v398
      %v400 = vrot.slane %v395, %v399
      %v402 = vadd.f32 %v363, %v400
      %v403 = vadd.f32 %v364, %v400
      %v404 = vadd.f32 %v365, %v400
      %v405 = vadd.f32 %v366, %v400
      %v406 = vadd.f32 %v367, %v400
      %v407 = vadd.f32 %v368, %v400
      %v408 = vadd.f32 %v369, %v400
      %v409 = vadd.f32 %v370, %v400
      %v410 = vadd.f32 %v371, %v400
      %v411 = vadd.f32 %v372, %v400
      %v412 = vadd.f32 %v373, %v400
      %v413 = vadd.f32 %v374, %v400
      %v414 = vadd.f32 %v375, %v400
      %v415 = vadd.f32 %v376, %v400
      %v416 = vadd.f32 %v377, %v400
      %v417 = vadd.f32 %v378, %v400
      %v418 = vadd.f32 %v379, %v400
      %v419 = vadd.f32 %v380, %v400
      %v420 = vadd.f32 %v381, %v400
      %v421 = vadd.f32 %v382, %v400
      %v422 = vadd.f32 %v383, %v400
      %v423 = vadd.f32 %v384, %v400
      %v424 = vadd.f32 %v385, %v400
      %v425 = vadd.f32 %v386, %v400
      %v426 = vadd.f32 %v387, %v400
      %v427 = vadd.f32 %v388, %v400
      %v428 = vadd.f32 %v389, %v400
      %v429 = vadd.f32 %v390, %v400
      %v430 = vadd.f32 %v391, %v400
      %v431 = vadd.f32 %v392, %v400
      %v432 = vadd.f32 %v393, %v400
      %v433 = vadd.f32 %v394, %v400
      %v434 = vmax.f32 %v402, 0.0
      %v435 = vmax.f32 %v403, 0.0
      %v436 = vmax.f32 %v404, 0.0
      %v437 = vmax.f32 %v405, 0.0
      %v438 = vmax.f32 %v406, 0.0
      %v439 = vmax.f32 %v407, 0.0
      %v440 = vmax.f32 %v408, 0.0
      %v441 = vmax.f32 %v409, 0.0
      %v442 = vmax.f32 %v410, 0.0
      %v443 = vmax.f32 %v411, 0.0
      %v444 = vmax.f32 %v412, 0.0
      %v445 = vmax.f32 %v413, 0.0
      %v446 = vmax.f32 %v414, 0.0
      %v447 = vmax.f32 %v415, 0.0
      %v448 = vmax.f32 %v416, 0.0
      %v449 = vmax.f32 %v417, 0.0
      %v450 = vmax.f32 %v418, 0.0
      %v451 = vmax.f32 %v419, 0.0
      %v452 = vmax.f32 %v420, 0.0
      %v453 = vmax.f32 %v421, 0.0
      %v454 = vmax.f32 %v422, 0.0
      %v455 = vmax.f32 %v423, 0.0
      %v456 = vmax.f32 %v424, 0.0
      %v457 = vmax.f32 %v425, 0.0
      %v458 = vmax.f32 %v426, 0.0
      %v459 = vmax.f32 %v427, 0.0
      %v460 = vmax.f32 %v428, 0.0
      %v461 = vmax.f32 %v429, 0.0
      %v462 = vmax.f32 %v430, 0.0
      %v463 = vmax.f32 %v431, 0.0
      %v464 = vmax.f32 %v432, 0.0
      %v465 = vmax.f32 %v433, 0.0
      %v466 = vmin.f32 %v434, 6.0
      %v467 = vmin.f32 %v435, 6.0
      %v468 = vmin.f32 %v436, 6.0
      %v469 = vmin.f32 %v437, 6.0
      %v470 = vmin.f32 %v438, 6.0
      %v471 = vmin.f32 %v439, 6.0
      %v472 = vmin.f32 %v440, 6.0
      %v473 = vmin.f32 %v441, 6.0
      %v474 = vmin.f32 %v442, 6.0
      %v475 = vmin.f32 %v443, 6.0
      %v476 = vmin.f32 %v444, 6.0
      %v477 = vmin.f32 %v445, 6.0
      %v478 = vmin.f32 %v446, 6.0
      %v479 = vmin.f32 %v447, 6.0
      %v480 = vmin.f32 %v448, 6.0
      %v481 = vmin.f32 %v449, 6.0
      %v482 = vmin.f32 %v450, 6.0
      %v483 = vmin.f32 %v451, 6.0
      %v484 = vmin.f32 %v452, 6.0
      %v485 = vmin.f32 %v453, 6.0
      %v486 = vmin.f32 %v454, 6.0
      %v487 = vmin.f32 %v455, 6.0
      %v488 = vmin.f32 %v456, 6.0
      %v489 = vmin.f32 %v457, 6.0
      %v490 = vmin.f32 %v458, 6.0
      %v491 = vmin.f32 %v459, 6.0
      %v492 = vmin.f32 %v460, 6.0
      %v493 = vmin.f32 %v461, 6.0
      %v494 = vmin.f32 %v462, 6.0
      %v495 = vmin.f32 %v463, 6.0
      %v496 = vmin.f32 %v464, 6.0
      %v497 = vmin.f32 %v465, 6.0
      %vm498 = vcmask 195584
      %499 = vst.msk [vmem:[#allocation2] sm:$0xff] %vm498, 0.0
      %500 = vst.msk [vmem:[#allocation2 + $0x8] sm:$0xff] %vm498, 0.0
      %501 = vst.msk [vmem:[#allocation2 + $0x10] sm:$0xff] %vm498, 0.0
      %502 = vst.msk [vmem:[#allocation2 + $0x18] sm:$0xff] %vm498, 0.0
      %s503 = scalar_lea.vmem [#allocation2], 544
      %504 = vst.msk [vmem:[%s503] sm:$0xff] %vm498, 0.0
      %505 = vst.msk [vmem:[%s503 + $0x8] sm:$0xff] %vm498, 0.0
      %506 = vst.msk [vmem:[%s503 + $0x10] sm:$0xff] %vm498, 0.0
      %507 = vst.msk [vmem:[%s503 + $0x18] sm:$0xff] %vm498, 0.0
      %s508 = scalar_lea.vmem [#allocation2], 32
      %vm509 = vcmask 188416
      %510 = vst.msk [vmem:[%s508 + $0x7] sm:$0x1] %vm509, 0.0
      %511 = vst.msk [vmem:[%s508 + $0x27] sm:$0x1] %vm509, 0.0
      %512 = vst.msk [vmem:[%s508 + $0x47] sm:$0x1] %vm509, 0.0
      %513 = vst.msk [vmem:[%s508 + $0x67] sm:$0x1] %vm509, 0.0
      %514 = vst.msk [vmem:[%s508 + $0x87] sm:$0x1] %vm509, 0.0
      %515 = vst.msk [vmem:[%s508 + $0xa7] sm:$0x1] %vm509, 0.0
      %516 = vst.msk [vmem:[%s508 + $0xc7] sm:$0x1] %vm509, 0.0
      %517 = vst.msk [vmem:[%s508 + $0xe7] sm:$0x1] %vm509, 0.0
      %518 = vst.msk [vmem:[%s508 + $0x107] sm:$0x1] %vm509, 0.0
      %519 = vst.msk [vmem:[%s508 + $0x127] sm:$0x1] %vm509, 0.0
      %520 = vst.msk [vmem:[%s508 + $0x147] sm:$0x1] %vm509, 0.0
      %521 = vst.msk [vmem:[%s508 + $0x167] sm:$0x1] %vm509, 0.0
      %522 = vst.msk [vmem:[%s508 + $0x187] sm:$0x1] %vm509, 0.0
      %523 = vst.msk [vmem:[%s508 + $0x1a7] sm:$0x1] %vm509, 0.0
      %524 = vst.msk [vmem:[%s508 + $0x1c7] sm:$0x1] %vm509, 0.0
      %525 = vst.msk [vmem:[%s508 + $0x1e7] sm:$0x1] %vm509, 0.0
      %526 = vst.msk [vmem:[%s508 + $0x18] sm:$0x1] %vm509, 0.0
      %527 = vst.msk [vmem:[%s508 + $0x38] sm:$0x1] %vm509, 0.0
      %528 = vst.msk [vmem:[%s508 + $0x58] sm:$0x1] %vm509, 0.0
      %529 = vst.msk [vmem:[%s508 + $0x78] sm:$0x1] %vm509, 0.0
      %530 = vst.msk [vmem:[%s508 + $0x98] sm:$0x1] %vm509, 0.0
      %531 = vst.msk [vmem:[%s508 + $0xb8] sm:$0x1] %vm509, 0.0
      %532 = vst.msk [vmem:[%s508 + $0xd8] sm:$0x1] %vm509, 0.0
      %533 = vst.msk [vmem:[%s508 + $0xf8] sm:$0x1] %vm509, 0.0
      %534 = vst.msk [vmem:[%s508 + $0x118] sm:$0x1] %vm509, 0.0
      %535 = vst.msk [vmem:[%s508 + $0x138] sm:$0x1] %vm509, 0.0
      %536 = vst.msk [vmem:[%s508 + $0x158] sm:$0x1] %vm509, 0.0
      %537 = vst.msk [vmem:[%s508 + $0x178] sm:$0x1] %vm509, 0.0
      %538 = vst.msk [vmem:[%s508 + $0x198] sm:$0x1] %vm509, 0.0
      %539 = vst.msk [vmem:[%s508 + $0x1b8] sm:$0x1] %vm509, 0.0
      %540 = vst.msk [vmem:[%s508 + $0x1d8] sm:$0x1] %vm509, 0.0
      %541 = vst.msk [vmem:[%s508 + $0x1f8] sm:$0x1] %vm509, 0.0
      %542 = vst.msk [vmem:[%s508 + $0x8] sm:$0xff] %vm498, %v466
      %543 = vst.msk [vmem:[%s508 + $0x10] sm:$0xff] %vm498, %v467
      %544 = vst.msk [vmem:[%s508 + $0x28] sm:$0xff] %vm498, %v468
      %545 = vst.msk [vmem:[%s508 + $0x30] sm:$0xff] %vm498, %v469
      %546 = vst.msk [vmem:[%s508 + $0x48] sm:$0xff] %vm498, %v470
      %547 = vst.msk [vmem:[%s508 + $0x50] sm:$0xff] %vm498, %v471
      %548 = vst.msk [vmem:[%s508 + $0x68] sm:$0xff] %vm498, %v472
      %549 = vst.msk [vmem:[%s508 + $0x70] sm:$0xff] %vm498, %v473
      %550 = vst.msk [vmem:[%s508 + $0x88] sm:$0xff] %vm498, %v474
      %551 = vst.msk [vmem:[%s508 + $0x90] sm:$0xff] %vm498, %v475
      %552 = vst.msk [vmem:[%s508 + $0xa8] sm:$0xff] %vm498, %v476
      %553 = vst.msk [vmem:[%s508 + $0xb0] sm:$0xff] %vm498, %v477
      %554 = vst.msk [vmem:[%s508 + $0xc8] sm:$0xff] %vm498, %v478
      %555 = vst.msk [vmem:[%s508 + $0xd0] sm:$0xff] %vm498, %v479
      %556 = vst.msk [vmem:[%s508 + $0xe8] sm:$0xff] %vm498, %v480
      %557 = vst.msk [vmem:[%s508 + $0xf0] sm:$0xff] %vm498, %v481
      %558 = vst.msk [vmem:[%s508 + $0x108] sm:$0xff] %vm498, %v482
      %559 = vst.msk [vmem:[%s508 + $0x110] sm:$0xff] %vm498, %v483
      %560 = vst.msk [vmem:[%s508 + $0x128] sm:$0xff] %vm498, %v484
      %561 = vst.msk [vmem:[%s508 + $0x130] sm:$0xff] %vm498, %v485
      %562 = vst.msk [vmem:[%s508 + $0x148] sm:$0xff] %vm498, %v486
      %563 = vst.msk [vmem:[%s508 + $0x150] sm:$0xff] %vm498, %v487
      %564 = vst.msk [vmem:[%s508 + $0x168] sm:$0xff] %vm498, %v488
      %565 = vst.msk [vmem:[%s508 + $0x170] sm:$0xff] %vm498, %v489
      %566 = vst.msk [vmem:[%s508 + $0x188] sm:$0xff] %vm498, %v490
      %567 = vst.msk [vmem:[%s508 + $0x190] sm:$0xff] %vm498, %v491
      %568 = vst.msk [vmem:[%s508 + $0x1a8] sm:$0xff] %vm498, %v492
      %569 = vst.msk [vmem:[%s508 + $0x1b0] sm:$0xff] %vm498, %v493
      %570 = vst.msk [vmem:[%s508 + $0x1c8] sm:$0xff] %vm498, %v494
      %571 = vst.msk [vmem:[%s508 + $0x1d0] sm:$0xff] %vm498, %v495
      %572 = vst.msk [vmem:[%s508 + $0x1e8] sm:$0xff] %vm498, %v496
      %573 = vst.msk [vmem:[%s508 + $0x1f0] sm:$0xff] %vm498, %v497
      %v574 = vld [vmem:[%s3] sm:$0x7]
      %v575 = vld [vmem:[%s3 + $0x4] sm:$0x7]
      %v576 = vld [vmem:[%s3 + $0x8] sm:$0x7]
      %v577 = vld [vmem:[#allocation2 + $0x7] sm:$0xff]
      %v578 = vld [vmem:[#allocation2 + $0xf] sm:$0xff]
      %v579 = vld [vmem:[#allocation2 + $0x27] sm:$0xff]
      %v580 = vld [vmem:[#allocation2 + $0x2f] sm:$0xff]
      %v581 = vld [vmem:[#allocation2 + $0x47] sm:$0xff]
      %v582 = vld [vmem:[#allocation2 + $0x4f] sm:$0xff]
      %v583 = vld [vmem:[#allocation2 + $0x67] sm:$0xff]
      %v584 = vld [vmem:[#allocation2 + $0x6f] sm:$0xff]
      %v585 = vld [vmem:[#allocation2 + $0x87] sm:$0xff]
      %v586 = vld [vmem:[#allocation2 + $0x8f] sm:$0xff]
      %v587 = vld [vmem:[#allocation2 + $0xa7] sm:$0xff]
      %v588 = vld [vmem:[#allocation2 + $0xaf] sm:$0xff]
      %v589 = vld [vmem:[#allocation2 + $0xc7] sm:$0xff]
      %v590 = vld [vmem:[#allocation2 + $0xcf] sm:$0xff]
      %v591 = vld [vmem:[#allocation2 + $0xe7] sm:$0xff]
      %v592 = vld [vmem:[#allocation2 + $0xef] sm:$0xff]
      %v593 = vld [vmem:[#allocation2 + $0x107] sm:$0xff]
      %v594 = vld [vmem:[#allocation2 + $0x10f] sm:$0xff]
      %v595 = vld [vmem:[#allocation2 + $0x127] sm:$0xff]
      %v596 = vld [vmem:[#allocation2 + $0x12f] sm:$0xff]
      %v597 = vld [vmem:[#allocation2 + $0x147] sm:$0xff]
      %v598 = vld [vmem:[#allocation2 + $0x14f] sm:$0xff]
      %v599 = vld [vmem:[#allocation2 + $0x167] sm:$0xff]
      %v600 = vld [vmem:[#allocation2 + $0x16f] sm:$0xff]
      %v601 = vld [vmem:[#allocation2 + $0x187] sm:$0xff]
      %v602 = vld [vmem:[#allocation2 + $0x18f] sm:$0xff]
      %v603 = vld [vmem:[#allocation2 + $0x1a7] sm:$0xff]
      %v604 = vld [vmem:[#allocation2 + $0x1af] sm:$0xff]
      %v605 = vld [vmem:[#allocation2 + $0x1c7] sm:$0xff]
      %v606 = vld [vmem:[#allocation2 + $0x1cf] sm:$0xff]
      %v607 = vld [vmem:[#allocation2 + $0x1e7] sm:$0xff]
      %v608 = vld [vmem:[#allocation2 + $0x1ef] sm:$0xff]
      %v609 = vld [vmem:[#allocation2 + $0x207] sm:$0xff]
      %v610 = vld [vmem:[#allocation2 + $0x20f] sm:$0xff]
      %v611 = vld [vmem:[#allocation2 + $0x227] sm:$0xff]
      %v612 = vld [vmem:[#allocation2 + $0x22f] sm:$0xff]
      %v613 = vlaneseq
      %v614 = vshrl.u32 %v613, 7
      %v615 = vsub.s32 0, %v614
      %v616 = vrot.slane %v574, %v615
      %v617 = vmul.f32 %v616, %v577
      %v618 = vmul.f32 %v616, %v578
      %v619 = vmul.f32 %v616, %v579
      %v620 = vmul.f32 %v616, %v580
      %v621 = vmul.f32 %v616, %v581
      %v622 = vmul.f32 %v616, %v582
      %v623 = vmul.f32 %v616, %v583
      %v624 = vmul.f32 %v616, %v584
      %v625 = vmul.f32 %v616, %v585
      %v626 = vmul.f32 %v616, %v586
      %v627 = vmul.f32 %v616, %v587
      %v628 = vmul.f32 %v616, %v588
      %v629 = vmul.f32 %v616, %v589
      %v630 = vmul.f32 %v616, %v590
      %v631 = vmul.f32 %v616, %v591
      %v632 = vmul.f32 %v616, %v592
      %v633 = vmul.f32 %v616, %v593
      %v634 = vmul.f32 %v616, %v594
      %v635 = vmul.f32 %v616, %v595
      %v636 = vmul.f32 %v616, %v596
      %v637 = vmul.f32 %v616, %v597
      %v638 = vmul.f32 %v616, %v598
      %v639 = vmul.f32 %v616, %v599
      %v640 = vmul.f32 %v616, %v600
      %v641 = vmul.f32 %v616, %v601
      %v642 = vmul.f32 %v616, %v602
      %v643 = vmul.f32 %v616, %v603
      %v644 = vmul.f32 %v616, %v604
      %v645 = vmul.f32 %v616, %v605
      %v646 = vmul.f32 %v616, %v606
      %v647 = vmul.f32 %v616, %v607
      %v648 = vmul.f32 %v616, %v608
      %v649 = vadd.f32 %v617, 0.0
      %v650 = vadd.f32 %v618, 0.0
      %v651 = vadd.f32 %v619, 0.0
      %v652 = vadd.f32 %v620, 0.0
      %v653 = vadd.f32 %v621, 0.0
      %v654 = vadd.f32 %v622, 0.0
      %v655 = vadd.f32 %v623, 0.0
      %v656 = vadd.f32 %v624, 0.0
      %v657 = vadd.f32 %v625, 0.0
      %v658 = vadd.f32 %v626, 0.0
      %v659 = vadd.f32 %v627, 0.0
      %v660 = vadd.f32 %v628, 0.0
      %v661 = vadd.f32 %v629, 0.0
      %v662 = vadd.f32 %v630, 0.0
      %v663 = vadd.f32 %v631, 0.0
      %v664 = vadd.f32 %v632, 0.0
      %v665 = vadd.f32 %v633, 0.0
      %v666 = vadd.f32 %v634, 0.0
      %v667 = vadd.f32 %v635, 0.0
      %v668 = vadd.f32 %v636, 0.0
      %v669 = vadd.f32 %v637, 0.0
      %v670 = vadd.f32 %v638, 0.0
      %v671 = vadd.f32 %v639, 0.0
      %v672 = vadd.f32 %v640, 0.0
      %v673 = vadd.f32 %v641, 0.0
      %v674 = vadd.f32 %v642, 0.0
      %v675 = vadd.f32 %v643, 0.0
      %v676 = vadd.f32 %v644, 0.0
      %v677 = vadd.f32 %v645, 0.0
      %v678 = vadd.f32 %v646, 0.0
      %v679 = vadd.f32 %v647, 0.0
      %v680 = vadd.f32 %v648, 0.0
      %v681 = vlaneseq
      %v682 = vshrl.u32 %v681, 7
      %v683 = vsub.s32 0, %v682
      %v684 = vrot.slane %v575, %v683
      %v685 = vmul.f32 %v684, %v579
      %v686 = vmul.f32 %v684, %v580
      %v687 = vmul.f32 %v684, %v581
      %v688 = vmul.f32 %v684, %v582
      %v689 = vmul.f32 %v684, %v583
      %v690 = vmul.f32 %v684, %v584
      %v691 = vmul.f32 %v684, %v585
      %v692 = vmul.f32 %v684, %v586
      %v693 = vmul.f32 %v684, %v587
      %v694 = vmul.f32 %v684, %v588
      %v695 = vmul.f32 %v684, %v589
      %v696 = vmul.f32 %v684, %v590
      %v697 = vmul.f32 %v684, %v591
      %v698 = vmul.f32 %v684, %v592
      %v699 = vmul.f32 %v684, %v593
      %v700 = vmul.f32 %v684, %v594
      %v701 = vmul.f32 %v684, %v595
      %v702 = vmul.f32 %v684, %v596
      %v703 = vmul.f32 %v684, %v597
      %v704 = vmul.f32 %v684, %v598
      %v705 = vmul.f32 %v684, %v599
      %v706 = vmul.f32 %v684, %v600
      %v707 = vmul.f32 %v684, %v601
      %v708 = vmul.f32 %v684, %v602
      %v709 = vmul.f32 %v684, %v603
      %v710 = vmul.f32 %v684, %v604
      %v711 = vmul.f32 %v684, %v605
      %v712 = vmul.f32 %v684, %v606
      %v713 = vmul.f32 %v684, %v607
      %v714 = vmul.f32 %v684, %v608
      %v715 = vmul.f32 %v684, %v609
      %v716 = vmul.f32 %v684, %v610
      %v717 = vadd.f32 %v649, %v685
      %v718 = vadd.f32 %v650, %v686
      %v719 = vadd.f32 %v651, %v687
      %v720 = vadd.f32 %v652, %v688
      %v721 = vadd.f32 %v653, %v689
      %v722 = vadd.f32 %v654, %v690
      %v723 = vadd.f32 %v655, %v691
      %v724 = vadd.f32 %v656, %v692
      %v725 = vadd.f32 %v657, %v693
      %v726 = vadd.f32 %v658, %v694
      %v727 = vadd.f32 %v659, %v695
      %v728 = vadd.f32 %v660, %v696
      %v729 = vadd.f32 %v661, %v697
      %v730 = vadd.f32 %v662, %v698
      %v731 = vadd.f32 %v663, %v699
      %v732 = vadd.f32 %v664, %v700
      %v733 = vadd.f32 %v665, %v701
      %v734 = vadd.f32 %v666, %v702
      %v735 = vadd.f32 %v667, %v703
      %v736 = vadd.f32 %v668, %v704
      %v737 = vadd.f32 %v669, %v705
      %v738 = vadd.f32 %v670, %v706
      %v739 = vadd.f32 %v671, %v707
      %v740 = vadd.f32 %v672, %v708
      %v741 = vadd.f32 %v673, %v709
      %v742 = vadd.f32 %v674, %v710
      %v743 = vadd.f32 %v675, %v711
      %v744 = vadd.f32 %v676, %v712
      %v745 = vadd.f32 %v677, %v713
      %v746 = vadd.f32 %v678, %v714
      %v747 = vadd.f32 %v679, %v715
      %v748 = vadd.f32 %v680, %v716
      %v749 = vlaneseq
      %v750 = vshrl.u32 %v749, 7
      %v751 = vsub.s32 0, %v750
      %v752 = vrot.slane %v576, %v751
      %v753 = vmul.f32 %v752, %v581
      %v754 = vmul.f32 %v752, %v582
      %v755 = vmul.f32 %v752, %v583
      %v756 = vmul.f32 %v752, %v584
      %v757 = vmul.f32 %v752, %v585
      %v758 = vmul.f32 %v752, %v586
      %v759 = vmul.f32 %v752, %v587
      %v760 = vmul.f32 %v752, %v588
      %v761 = vmul.f32 %v752, %v589
      %v762 = vmul.f32 %v752, %v590
      %v763 = vmul.f32 %v752, %v591
      %v764 = vmul.f32 %v752, %v592
      %v765 = vmul.f32 %v752, %v593
      %v766 = vmul.f32 %v752, %v594
      %v767 = vmul.f32 %v752, %v595
      %v768 = vmul.f32 %v752, %v596
      %v769 = vmul.f32 %v752, %v597
      %v770 = vmul.f32 %v752, %v598
      %v771 = vmul.f32 %v752, %v599
      %v772 = vmul.f32 %v752, %v600
      %v773 = vmul.f32 %v752, %v601
      %v774 = vmul.f32 %v752, %v602
      %v775 = vmul.f32 %v752, %v603
      %v776 = vmul.f32 %v752, %v604
      %v777 = vmul.f32 %v752, %v605
      %v778 = vmul.f32 %v752, %v606
      %v779 = vmul.f32 %v752, %v607
      %v780 = vmul.f32 %v752, %v608
      %v781 = vmul.f32 %v752, %v609
      %v782 = vmul.f32 %v752, %v610
      %v783 = vmul.f32 %v752, %v611
      %v784 = vmul.f32 %v752, %v612
      %v785 = vadd.f32 %v717, %v753
      %v786 = vadd.f32 %v718, %v754
      %v787 = vadd.f32 %v719, %v755
      %v788 = vadd.f32 %v720, %v756
      %v789 = vadd.f32 %v721, %v757
      %v790 = vadd.f32 %v722, %v758
      %v791 = vadd.f32 %v723, %v759
      %v792 = vadd.f32 %v724, %v760
      %v793 = vadd.f32 %v725, %v761
      %v794 = vadd.f32 %v726, %v762
      %v795 = vadd.f32 %v727, %v763
      %v796 = vadd.f32 %v728, %v764
      %v797 = vadd.f32 %v729, %v765
      %v798 = vadd.f32 %v730, %v766
      %v799 = vadd.f32 %v731, %v767
      %v800 = vadd.f32 %v732, %v768
      %v801 = vadd.f32 %v733, %v769
      %v802 = vadd.f32 %v734, %v770
      %v803 = vadd.f32 %v735, %v771
      %v804 = vadd.f32 %v736, %v772
      %v805 = vadd.f32 %v737, %v773
      %v806 = vadd.f32 %v738, %v774
      %v807 = vadd.f32 %v739, %v775
      %v808 = vadd.f32 %v740, %v776
      %v809 = vadd.f32 %v741, %v777
      %v810 = vadd.f32 %v742, %v778
      %v811 = vadd.f32 %v743, %v779
      %v812 = vadd.f32 %v744, %v780
      %v813 = vadd.f32 %v745, %v781
      %v814 = vadd.f32 %v746, %v782
      %v815 = vadd.f32 %v747, %v783
      %v816 = vadd.f32 %v748, %v784
      %v817 = vld [vmem:[#allocation2 + $0x8] sm:$0xff]
      %v818 = vld [vmem:[#allocation2 + $0x10] sm:$0xff]
      %v819 = vld [vmem:[#allocation2 + $0x28] sm:$0xff]
      %v820 = vld [vmem:[#allocation2 + $0x30] sm:$0xff]
      %v821 = vld [vmem:[#allocation2 + $0x48] sm:$0xff]
      %v822 = vld [vmem:[#allocation2 + $0x50] sm:$0xff]
      %v823 = vld [vmem:[#allocation2 + $0x68] sm:$0xff]
      %v824 = vld [vmem:[#allocation2 + $0x70] sm:$0xff]
      %v825 = vld [vmem:[#allocation2 + $0x88] sm:$0xff]
      %v826 = vld [vmem:[#allocation2 + $0x90] sm:$0xff]
      %v827 = vld [vmem:[#allocation2 + $0xa8] sm:$0xff]
      %v828 = vld [vmem:[#allocation2 + $0xb0] sm:$0xff]
      %v829 = vld [vmem:[#allocation2 + $0xc8] sm:$0xff]
      %v830 = vld [vmem:[#allocation2 + $0xd0] sm:$0xff]
      %v831 = vld [vmem:[#allocation2 + $0xe8] sm:$0xff]
      %v832 = vld [vmem:[#allocation2 + $0xf0] sm:$0xff]
      %v833 = vld [vmem:[#allocation2 + $0x108] sm:$0xff]
      %v834 = vld [vmem:[#allocation2 + $0x110] sm:$0xff]
      %v835 = vld [vmem:[#allocation2 + $0x128] sm:$0xff]
      %v836 = vld [vmem:[#allocation2 + $0x130] sm:$0xff]
      %v837 = vld [vmem:[#allocation2 + $0x148] sm:$0xff]
      %v838 = vld [vmem:[#allocation2 + $0x150] sm:$0xff]
      %v839 = vld [vmem:[#allocation2 + $0x168] sm:$0xff]
      %v840 = vld [vmem:[#allocation2 + $0x170] sm:$0xff]
      %v841 = vld [vmem:[#allocation2 + $0x188] sm:$0xff]
      %v842 = vld [vmem:[#allocation2 + $0x190] sm:$0xff]
      %v843 = vld [vmem:[#allocation2 + $0x1a8] sm:$0xff]
      %v844 = vld [vmem:[#allocation2 + $0x1b0] sm:$0xff]
      %v845 = vld [vmem:[#allocation2 + $0x1c8] sm:$0xff]
      %v846 = vld [vmem:[#allocation2 + $0x1d0] sm:$0xff]
      %v847 = vld [vmem:[#allocation2 + $0x1e8] sm:$0xff]
      %v848 = vld [vmem:[#allocation2 + $0x1f0] sm:$0xff]
      %v849 = vld [vmem:[#allocation2 + $0x208] sm:$0xff]
      %v850 = vld [vmem:[#allocation2 + $0x210] sm:$0xff]
      %v851 = vld [vmem:[#allocation2 + $0x228] sm:$0xff]
      %v852 = vld [vmem:[#allocation2 + $0x230] sm:$0xff]
      %v853 = vlaneseq
      %v854 = vshrl.u32 %v853, 7
      %v855 = vsub.s32 1, %v854
      %v856 = vrot.slane %v574, %v855
      %v857 = vmul.f32 %v856, %v817
      %v858 = vmul.f32 %v856, %v818
      %v859 = vmul.f32 %v856, %v819
      %v860 = vmul.f32 %v856, %v820
      %v861 = vmul.f32 %v856, %v821
      %v862 = vmul.f32 %v856, %v822
      %v863 = vmul.f32 %v856, %v823
      %v864 = vmul.f32 %v856, %v824
      %v865 = vmul.f32 %v856, %v825
      %v866 = vmul.f32 %v856, %v826
      %v867 = vmul.f32 %v856, %v827
      %v868 = vmul.f32 %v856, %v828
      %v869 = vmul.f32 %v856, %v829
      %v870 = vmul.f32 %v856, %v830
      %v871 = vmul.f32 %v856, %v831
      %v872 = vmul.f32 %v856, %v832
      %v873 = vmul.f32 %v856, %v833
      %v874 = vmul.f32 %v856, %v834
      %v875 = vmul.f32 %v856, %v835
      %v876 = vmul.f32 %v856, %v836
      %v877 = vmul.f32 %v856, %v837
      %v878 = vmul.f32 %v856, %v838
      %v879 = vmul.f32 %v856, %v839
      %v880 = vmul.f32 %v856, %v840
      %v881 = vmul.f32 %v856, %v841
      %v882 = vmul.f32 %v856, %v842
      %v883 = vmul.f32 %v856, %v843
      %v884 = vmul.f32 %v856, %v844
      %v885 = vmul.f32 %v856, %v845
      %v886 = vmul.f32 %v856, %v846
      %v887 = vmul.f32 %v856, %v847
      %v888 = vmul.f32 %v856, %v848
      %v889 = vadd.f32 %v785, %v857
      %v890 = vadd.f32 %v786, %v858
      %v891 = vadd.f32 %v787, %v859
      %v892 = vadd.f32 %v788, %v860
      %v893 = vadd.f32 %v789, %v861
      %v894 = vadd.f32 %v790, %v862
      %v895 = vadd.f32 %v791, %v863
      %v896 = vadd.f32 %v792, %v864
      %v897 = vadd.f32 %v793, %v865
      %v898 = vadd.f32 %v794, %v866
      %v899 = vadd.f32 %v795, %v867
      %v900 = vadd.f32 %v796, %v868
      %v901 = vadd.f32 %v797, %v869
      %v902 = vadd.f32 %v798, %v870
      %v903 = vadd.f32 %v799, %v871
      %v904 = vadd.f32 %v800, %v872
      %v905 = vadd.f32 %v801, %v873
      %v906 = vadd.f32 %v802, %v874
      %v907 = vadd.f32 %v803, %v875
      %v908 = vadd.f32 %v804, %v876
      %v909 = vadd.f32 %v805, %v877
      %v910 = vadd.f32 %v806, %v878
      %v911 = vadd.f32 %v807, %v879
      %v912 = vadd.f32 %v808, %v880
      %v913 = vadd.f32 %v809, %v881
      %v914 = vadd.f32 %v810, %v882
      %v915 = vadd.f32 %v811, %v883
      %v916 = vadd.f32 %v812, %v884
      %v917 = vadd.f32 %v813, %v885
      %v918 = vadd.f32 %v814, %v886
      %v919 = vadd.f32 %v815, %v887
      %v920 = vadd.f32 %v816, %v888
      %v921 = vlaneseq
      %v922 = vshrl.u32 %v921, 7
      %v923 = vsub.s32 1, %v922
      %v924 = vrot.slane %v575, %v923
      %v925 = vmul.f32 %v924, %v819
      %v926 = vmul.f32 %v924, %v820
      %v927 = vmul.f32 %v924, %v821
      %v928 = vmul.f32 %v924, %v822
      %v929 = vmul.f32 %v924, %v823
      %v930 = vmul.f32 %v924, %v824
      %v931 = vmul.f32 %v924, %v825
      %v932 = vmul.f32 %v924, %v826
      %v933 = vmul.f32 %v924, %v827
      %v934 = vmul.f32 %v924, %v828
      %v935 = vmul.f32 %v924, %v829
      %v936 = vmul.f32 %v924, %v830
      %v937 = vmul.f32 %v924, %v831
      %v938 = vmul.f32 %v924, %v832
      %v939 = vmul.f32 %v924, %v833
      %v940 = vmul.f32 %v924, %v834
      %v941 = vmul.f32 %v924, %v835
      %v942 = vmul.f32 %v924, %v836
      %v943 = vmul.f32 %v924, %v837
      %v944 = vmul.f32 %v924, %v838
      %v945 = vmul.f32 %v924, %v839
      %v946 = vmul.f32 %v924, %v840
      %v947 = vmul.f32 %v924, %v841
      %v948 = vmul.f32 %v924, %v842
      %v949 = vmul.f32 %v924, %v843
      %v950 = vmul.f32 %v924, %v844
      %v951 = vmul.f32 %v924, %v845
      %v952 = vmul.f32 %v924, %v846
      %v953 = vmul.f32 %v924, %v847
      %v954 = vmul.f32 %v924, %v848
      %v955 = vmul.f32 %v924, %v849
      %v956 = vmul.f32 %v924, %v850
      %v957 = vadd.f32 %v889, %v925
      %v958 = vadd.f32 %v890, %v926
      %v959 = vadd.f32 %v891, %v927
      %v960 = vadd.f32 %v892, %v928
      %v961 = vadd.f32 %v893, %v929
      %v962 = vadd.f32 %v894, %v930
      %v963 = vadd.f32 %v895, %v931
      %v964 = vadd.f32 %v896, %v932
      %v965 = vadd.f32 %v897, %v933
      %v966 = vadd.f32 %v898, %v934
      %v967 = vadd.f32 %v899, %v935
      %v968 = vadd.f32 %v900, %v936
      %v969 = vadd.f32 %v901, %v937
      %v970 = vadd.f32 %v902, %v938
      %v971 = vadd.f32 %v903, %v939
      %v972 = vadd.f32 %v904, %v940
      %v973 = vadd.f32 %v905, %v941
      %v974 = vadd.f32 %v906, %v942
      %v975 = vadd.f32 %v907, %v943
      %v976 = vadd.f32 %v908, %v944
      %v977 = vadd.f32 %v909, %v945
      %v978 = vadd.f32 %v910, %v946
      %v979 = vadd.f32 %v911, %v947
      %v980 = vadd.f32 %v912, %v948
      %v981 = vadd.f32 %v913, %v949
      %v982 = vadd.f32 %v914, %v950
      %v983 = vadd.f32 %v915, %v951
      %v984 = vadd.f32 %v916, %v952
      %v985 = vadd.f32 %v917, %v953
      %v986 = vadd.f32 %v918, %v954
      %v987 = vadd.f32 %v919, %v955
      %v988 = vadd.f32 %v920, %v956
      %v989 = vlaneseq
      %v990 = vshrl.u32 %v989, 7
      %v991 = vsub.s32 1, %v990
      %v992 = vrot.slane %v576, %v991
      %v993 = vmul.f32 %v992, %v821
      %v994 = vmul.f32 %v992, %v822
      %v995 = vmul.f32 %v992, %v823
      %v996 = vmul.f32 %v992, %v824
      %v997 = vmul.f32 %v992, %v825
      %v998 = vmul.f32 %v992, %v826
      %v999 = vmul.f32 %v992, %v827
      %v1000 = vmul.f32 %v992, %v828
      %v1001 = vmul.f32 %v992, %v829
      %v1002 = vmul.f32 %v992, %v830
      %v1003 = vmul.f32 %v992, %v831
      %v1004 = vmul.f32 %v992, %v832
      %v1005 = vmul.f32 %v992, %v833
      %v1006 = vmul.f32 %v992, %v834
      %v1007 = vmul.f32 %v992, %v835
      %v1008 = vmul.f32 %v992, %v836
      %v1009 = vmul.f32 %v992, %v837
      %v1010 = vmul.f32 %v992, %v838
      %v1011 = vmul.f32 %v992, %v839
      %v1012 = vmul.f32 %v992, %v840
      %v1013 = vmul.f32 %v992, %v841
      %v1014 = vmul.f32 %v992, %v842
      %v1015 = vmul.f32 %v992, %v843
      %v1016 = vmul.f32 %v992, %v844
      %v1017 = vmul.f32 %v992, %v845
      %v1018 = vmul.f32 %v992, %v846
      %v1019 = vmul.f32 %v992, %v847
      %v1020 = vmul.f32 %v992, %v848
      %v1021 = vmul.f32 %v992, %v849
      %v1022 = vmul.f32 %v992, %v850
      %v1023 = vmul.f32 %v992, %v851
      %v1024 = vmul.f32 %v992, %v852
      %v1025 = vadd.f32 %v957, %v993
      %v1026 = vadd.f32 %v958, %v994
      %v1027 = vadd.f32 %v959, %v995
      %v1028 = vadd.f32 %v960, %v996
      %v1029 = vadd.f32 %v961, %v997
      %v1030 = vadd.f32 %v962, %v998
      %v1031 = vadd.f32 %v963, %v999
      %v1032 = vadd.f32 %v964, %v1000
      %v1033 = vadd.f32 %v965, %v1001
      %v1034 = vadd.f32 %v966, %v1002
      %v1035 = vadd.f32 %v967, %v1003
      %v1036 = vadd.f32 %v968, %v1004
      %v1037 = vadd.f32 %v969, %v1005
      %v1038 = vadd.f32 %v970, %v1006
      %v1039 = vadd.f32 %v971, %v1007
      %v1040 = vadd.f32 %v972, %v1008
      %v1041 = vadd.f32 %v973, %v1009
      %v1042 = vadd.f32 %v974, %v1010
      %v1043 = vadd.f32 %v975, %v1011
      %v1044 = vadd.f32 %v976, %v1012
      %v1045 = vadd.f32 %v977, %v1013
      %v1046 = vadd.f32 %v978, %v1014
      %v1047 = vadd.f32 %v979, %v1015
      %v1048 = vadd.f32 %v980, %v1016
      %v1049 = vadd.f32 %v981, %v1017
      %v1050 = vadd.f32 %v982, %v1018
      %v1051 = vadd.f32 %v983, %v1019
      %v1052 = vadd.f32 %v984, %v1020
      %v1053 = vadd.f32 %v985, %v1021
      %v1054 = vadd.f32 %v986, %v1022
      %v1055 = vadd.f32 %v987, %v1023
      %v1056 = vadd.f32 %v988, %v1024
      %v1057 = vld [vmem:[#allocation2 + $0x9] sm:$0xff]
      %v1058 = vld [vmem:[#allocation2 + $0x11] sm:$0xff]
      %v1059 = vld [vmem:[#allocation2 + $0x29] sm:$0xff]
      %v1060 = vld [vmem:[#allocation2 + $0x31] sm:$0xff]
      %v1061 = vld [vmem:[#allocation2 + $0x49] sm:$0xff]
      %v1062 = vld [vmem:[#allocation2 + $0x51] sm:$0xff]
      %v1063 = vld [vmem:[#allocation2 + $0x69] sm:$0xff]
      %v1064 = vld [vmem:[#allocation2 + $0x71] sm:$0xff]
      %v1065 = vld [vmem:[#allocation2 + $0x89] sm:$0xff]
      %v1066 = vld [vmem:[#allocation2 + $0x91] sm:$0xff]
      %v1067 = vld [vmem:[#allocation2 + $0xa9] sm:$0xff]
      %v1068 = vld [vmem:[#allocation2 + $0xb1] sm:$0xff]
      %v1069 = vld [vmem:[#allocation2 + $0xc9] sm:$0xff]
      %v1070 = vld [vmem:[#allocation2 + $0xd1] sm:$0xff]
      %v1071 = vld [vmem:[#allocation2 + $0xe9] sm:$0xff]
      %v1072 = vld [vmem:[#allocation2 + $0xf1] sm:$0xff]
      %v1073 = vld [vmem:[#allocation2 + $0x109] sm:$0xff]
      %v1074 = vld [vmem:[#allocation2 + $0x111] sm:$0xff]
      %v1075 = vld [vmem:[#allocation2 + $0x129] sm:$0xff]
      %v1076 = vld [vmem:[#allocation2 + $0x131] sm:$0xff]
      %v1077 = vld [vmem:[#allocation2 + $0x149] sm:$0xff]
      %v1078 = vld [vmem:[#allocation2 + $0x151] sm:$0xff]
      %v1079 = vld [vmem:[#allocation2 + $0x169] sm:$0xff]
      %v1080 = vld [vmem:[#allocation2 + $0x171] sm:$0xff]
      %v1081 = vld [vmem:[#allocation2 + $0x189] sm:$0xff]
      %v1082 = vld [vmem:[#allocation2 + $0x191] sm:$0xff]
      %v1083 = vld [vmem:[#allocation2 + $0x1a9] sm:$0xff]
      %v1084 = vld [vmem:[#allocation2 + $0x1b1] sm:$0xff]
      %v1085 = vld [vmem:[#allocation2 + $0x1c9] sm:$0xff]
      %v1086 = vld [vmem:[#allocation2 + $0x1d1] sm:$0xff]
      %v1087 = vld [vmem:[#allocation2 + $0x1e9] sm:$0xff]
      %v1088 = vld [vmem:[#allocation2 + $0x1f1] sm:$0xff]
      %v1089 = vld [vmem:[#allocation2 + $0x209] sm:$0xff]
      %v1090 = vld [vmem:[#allocation2 + $0x211] sm:$0xff]
      %v1091 = vld [vmem:[#allocation2 + $0x229] sm:$0xff]
      %v1092 = vld [vmem:[#allocation2 + $0x231] sm:$0xff]
      %v1093 = vlaneseq
      %v1094 = vshrl.u32 %v1093, 7
      %v1095 = vsub.s32 2, %v1094
      %v1096 = vrot.slane %v574, %v1095
      %v1097 = vmul.f32 %v1096, %v1057
      %v1098 = vmul.f32 %v1096, %v1058
      %v1099 = vmul.f32 %v1096, %v1059
      %v1100 = vmul.f32 %v1096, %v1060
      %v1101 = vmul.f32 %v1096, %v1061
      %v1102 = vmul.f32 %v1096, %v1062
      %v1103 = vmul.f32 %v1096, %v1063
      %v1104 = vmul.f32 %v1096, %v1064
      %v1105 = vmul.f32 %v1096, %v1065
      %v1106 = vmul.f32 %v1096, %v1066
      %v1107 = vmul.f32 %v1096, %v1067
      %v1108 = vmul.f32 %v1096, %v1068
      %v1109 = vmul.f32 %v1096, %v1069
      %v1110 = vmul.f32 %v1096, %v1070
      %v1111 = vmul.f32 %v1096, %v1071
      %v1112 = vmul.f32 %v1096, %v1072
      %v1113 = vmul.f32 %v1096, %v1073
      %v1114 = vmul.f32 %v1096, %v1074
      %v1115 = vmul.f32 %v1096, %v1075
      %v1116 = vmul.f32 %v1096, %v1076
      %v1117 = vmul.f32 %v1096, %v1077
      %v1118 = vmul.f32 %v1096, %v1078
      %v1119 = vmul.f32 %v1096, %v1079
      %v1120 = vmul.f32 %v1096, %v1080
      %v1121 = vmul.f32 %v1096, %v1081
      %v1122 = vmul.f32 %v1096, %v1082
      %v1123 = vmul.f32 %v1096, %v1083
      %v1124 = vmul.f32 %v1096, %v1084
      %v1125 = vmul.f32 %v1096, %v1085
      %v1126 = vmul.f32 %v1096, %v1086
      %v1127 = vmul.f32 %v1096, %v1087
      %v1128 = vmul.f32 %v1096, %v1088
      %v1129 = vadd.f32 %v1025, %v1097
      %v1130 = vadd.f32 %v1026, %v1098
      %v1131 = vadd.f32 %v1027, %v1099
      %v1132 = vadd.f32 %v1028, %v1100
      %v1133 = vadd.f32 %v1029, %v1101
      %v1134 = vadd.f32 %v1030, %v1102
      %v1135 = vadd.f32 %v1031, %v1103
      %v1136 = vadd.f32 %v1032, %v1104
      %v1137 = vadd.f32 %v1033, %v1105
      %v1138 = vadd.f32 %v1034, %v1106
      %v1139 = vadd.f32 %v1035, %v1107
      %v1140 = vadd.f32 %v1036, %v1108
      %v1141 = vadd.f32 %v1037, %v1109
      %v1142 = vadd.f32 %v1038, %v1110
      %v1143 = vadd.f32 %v1039, %v1111
      %v1144 = vadd.f32 %v1040, %v1112
      %v1145 = vadd.f32 %v1041, %v1113
      %v1146 = vadd.f32 %v1042, %v1114
      %v1147 = vadd.f32 %v1043, %v1115
      %v1148 = vadd.f32 %v1044, %v1116
      %v1149 = vadd.f32 %v1045, %v1117
      %v1150 = vadd.f32 %v1046, %v1118
      %v1151 = vadd.f32 %v1047, %v1119
      %v1152 = vadd.f32 %v1048, %v1120
      %v1153 = vadd.f32 %v1049, %v1121
      %v1154 = vadd.f32 %v1050, %v1122
      %v1155 = vadd.f32 %v1051, %v1123
      %v1156 = vadd.f32 %v1052, %v1124
      %v1157 = vadd.f32 %v1053, %v1125
      %v1158 = vadd.f32 %v1054, %v1126
      %v1159 = vadd.f32 %v1055, %v1127
      %v1160 = vadd.f32 %v1056, %v1128
      %v1161 = vlaneseq
      %v1162 = vshrl.u32 %v1161, 7
      %v1163 = vsub.s32 2, %v1162
      %v1164 = vrot.slane %v575, %v1163
      %v1165 = vmul.f32 %v1164, %v1059
      %v1166 = vmul.f32 %v1164, %v1060
      %v1167 = vmul.f32 %v1164, %v1061
      %v1168 = vmul.f32 %v1164, %v1062
      %v1169 = vmul.f32 %v1164, %v1063
      %v1170 = vmul.f32 %v1164, %v1064
      %v1171 = vmul.f32 %v1164, %v1065
      %v1172 = vmul.f32 %v1164, %v1066
      %v1173 = vmul.f32 %v1164, %v1067
      %v1174 = vmul.f32 %v1164, %v1068
      %v1175 = vmul.f32 %v1164, %v1069
      %v1176 = vmul.f32 %v1164, %v1070
      %v1177 = vmul.f32 %v1164, %v1071
      %v1178 = vmul.f32 %v1164, %v1072
      %v1179 = vmul.f32 %v1164, %v1073
      %v1180 = vmul.f32 %v1164, %v1074
      %v1181 = vmul.f32 %v1164, %v1075
      %v1182 = vmul.f32 %v1164, %v1076
      %v1183 = vmul.f32 %v1164, %v1077
      %v1184 = vmul.f32 %v1164, %v1078
      %v1185 = vmul.f32 %v1164, %v1079
      %v1186 = vmul.f32 %v1164, %v1080
      %v1187 = vmul.f32 %v1164, %v1081
      %v1188 = vmul.f32 %v1164, %v1082
      %v1189 = vmul.f32 %v1164, %v1083
      %v1190 = vmul.f32 %v1164, %v1084
      %v1191 = vmul.f32 %v1164, %v1085
      %v1192 = vmul.f32 %v1164, %v1086
      %v1193 = vmul.f32 %v1164, %v1087
      %v1194 = vmul.f32 %v1164, %v1088
      %v1195 = vmul.f32 %v1164, %v1089
      %v1196 = vmul.f32 %v1164, %v1090
      %v1197 = vadd.f32 %v1129, %v1165
      %v1198 = vadd.f32 %v1130, %v1166
      %v1199 = vadd.f32 %v1131, %v1167
      %v1200 = vadd.f32 %v1132, %v1168
      %v1201 = vadd.f32 %v1133, %v1169
      %v1202 = vadd.f32 %v1134, %v1170
      %v1203 = vadd.f32 %v1135, %v1171
      %v1204 = vadd.f32 %v1136, %v1172
      %v1205 = vadd.f32 %v1137, %v1173
      %v1206 = vadd.f32 %v1138, %v1174
      %v1207 = vadd.f32 %v1139, %v1175
      %v1208 = vadd.f32 %v1140, %v1176
      %v1209 = vadd.f32 %v1141, %v1177
      %v1210 = vadd.f32 %v1142, %v1178
      %v1211 = vadd.f32 %v1143, %v1179
      %v1212 = vadd.f32 %v1144, %v1180
      %v1213 = vadd.f32 %v1145, %v1181
      %v1214 = vadd.f32 %v1146, %v1182
      %v1215 = vadd.f32 %v1147, %v1183
      %v1216 = vadd.f32 %v1148, %v1184
      %v1217 = vadd.f32 %v1149, %v1185
      %v1218 = vadd.f32 %v1150, %v1186
      %v1219 = vadd.f32 %v1151, %v1187
      %v1220 = vadd.f32 %v1152, %v1188
      %v1221 = vadd.f32 %v1153, %v1189
      %v1222 = vadd.f32 %v1154, %v1190
      %v1223 = vadd.f32 %v1155, %v1191
      %v1224 = vadd.f32 %v1156, %v1192
      %v1225 = vadd.f32 %v1157, %v1193
      %v1226 = vadd.f32 %v1158, %v1194
      %v1227 = vadd.f32 %v1159, %v1195
      %v1228 = vadd.f32 %v1160, %v1196
      %v1229 = vlaneseq
      %v1230 = vshrl.u32 %v1229, 7
      %v1231 = vsub.s32 2, %v1230
      %v1232 = vrot.slane %v576, %v1231
      %v1233 = vmul.f32 %v1232, %v1061
      %v1234 = vmul.f32 %v1232, %v1062
      %v1235 = vmul.f32 %v1232, %v1063
      %v1236 = vmul.f32 %v1232, %v1064
      %v1237 = vmul.f32 %v1232, %v1065
      %v1238 = vmul.f32 %v1232, %v1066
      %v1239 = vmul.f32 %v1232, %v1067
      %v1240 = vmul.f32 %v1232, %v1068
      %v1241 = vmul.f32 %v1232, %v1069
      %v1242 = vmul.f32 %v1232, %v1070
      %v1243 = vmul.f32 %v1232, %v1071
      %v1244 = vmul.f32 %v1232, %v1072
      %v1245 = vmul.f32 %v1232, %v1073
      %v1246 = vmul.f32 %v1232, %v1074
      %v1247 = vmul.f32 %v1232, %v1075
      %v1248 = vmul.f32 %v1232, %v1076
      %v1249 = vmul.f32 %v1232, %v1077
      %v1250 = vmul.f32 %v1232, %v1078
      %v1251 = vmul.f32 %v1232, %v1079
      %v1252 = vmul.f32 %v1232, %v1080
      %v1253 = vmul.f32 %v1232, %v1081
      %v1254 = vmul.f32 %v1232, %v1082
      %v1255 = vmul.f32 %v1232, %v1083
      %v1256 = vmul.f32 %v1232, %v1084
      %v1257 = vmul.f32 %v1232, %v1085
      %v1258 = vmul.f32 %v1232, %v1086
      %v1259 = vmul.f32 %v1232, %v1087
      %v1260 = vmul.f32 %v1232, %v1088
      %v1261 = vmul.f32 %v1232, %v1089
      %v1262 = vmul.f32 %v1232, %v1090
      %v1263 = vmul.f32 %v1232, %v1091
      %v1264 = vmul.f32 %v1232, %v1092
      %v1265 = vadd.f32 %v1197, %v1233
      %v1266 = vadd.f32 %v1198, %v1234
      %v1267 = vadd.f32 %v1199, %v1235
      %v1268 = vadd.f32 %v1200, %v1236
      %v1269 = vadd.f32 %v1201, %v1237
      %v1270 = vadd.f32 %v1202, %v1238
      %v1271 = vadd.f32 %v1203, %v1239
      %v1272 = vadd.f32 %v1204, %v1240
      %v1273 = vadd.f32 %v1205, %v1241
      %v1274 = vadd.f32 %v1206, %v1242
      %v1275 = vadd.f32 %v1207, %v1243
      %v1276 = vadd.f32 %v1208, %v1244
      %v1277 = vadd.f32 %v1209, %v1245
      %v1278 = vadd.f32 %v1210, %v1246
      %v1279 = vadd.f32 %v1211, %v1247
      %v1280 = vadd.f32 %v1212, %v1248
      %v1281 = vadd.f32 %v1213, %v1249
      %v1282 = vadd.f32 %v1214, %v1250
      %v1283 = vadd.f32 %v1215, %v1251
      %v1284 = vadd.f32 %v1216, %v1252
      %v1285 = vadd.f32 %v1217, %v1253
      %v1286 = vadd.f32 %v1218, %v1254
      %v1287 = vadd.f32 %v1219, %v1255
      %v1288 = vadd.f32 %v1220, %v1256
      %v1289 = vadd.f32 %v1221, %v1257
      %v1290 = vadd.f32 %v1222, %v1258
      %v1291 = vadd.f32 %v1223, %v1259
      %v1292 = vadd.f32 %v1224, %v1260
      %v1293 = vadd.f32 %v1225, %v1261
      %v1294 = vadd.f32 %v1226, %v1262
      %v1295 = vadd.f32 %v1227, %v1263
      %v1296 = vadd.f32 %v1228, %v1264
      %v1297 = vld [vmem:[%s4] sm:$0x1]
      %v1299 = vlaneseq
      %v1300 = vshrl.u32 %v1299, 7
      %v1301 = vsub.s32 0, %v1300
      %v1302 = vrot.slane %v1297, %v1301
      %v1304 = vadd.f32 %v1265, %v1302
      %v1305 = vadd.f32 %v1266, %v1302
      %v1306 = vadd.f32 %v1267, %v1302
      %v1307 = vadd.f32 %v1268, %v1302
      %v1308 = vadd.f32 %v1269, %v1302
      %v1309 = vadd.f32 %v1270, %v1302
      %v1310 = vadd.f32 %v1271, %v1302
      %v1311 = vadd.f32 %v1272, %v1302
      %v1312 = vadd.f32 %v1273, %v1302
      %v1313 = vadd.f32 %v1274, %v1302
      %v1314 = vadd.f32 %v1275, %v1302
      %v1315 = vadd.f32 %v1276, %v1302
      %v1316 = vadd.f32 %v1277, %v1302
      %v1317 = vadd.f32 %v1278, %v1302
      %v1318 = vadd.f32 %v1279, %v1302
      %v1319 = vadd.f32 %v1280, %v1302
      %v1320 = vadd.f32 %v1281, %v1302
      %v1321 = vadd.f32 %v1282, %v1302
      %v1322 = vadd.f32 %v1283, %v1302
      %v1323 = vadd.f32 %v1284, %v1302
      %v1324 = vadd.f32 %v1285, %v1302
      %v1325 = vadd.f32 %v1286, %v1302
      %v1326 = vadd.f32 %v1287, %v1302
      %v1327 = vadd.f32 %v1288, %v1302
      %v1328 = vadd.f32 %v1289, %v1302
      %v1329 = vadd.f32 %v1290, %v1302
      %v1330 = vadd.f32 %v1291, %v1302
      %v1331 = vadd.f32 %v1292, %v1302
      %v1332 = vadd.f32 %v1293, %v1302
      %v1333 = vadd.f32 %v1294, %v1302
      %v1334 = vadd.f32 %v1295, %v1302
      %v1335 = vadd.f32 %v1296, %v1302
      %1336 = vst.msk [vmem:[%s317] sm:$0xff] %vm498, %v1304
      %1337 = vst.msk [vmem:[%s317 + $0x8] sm:$0xff] %vm498, %v1305
      %1338 = vst.msk [vmem:[%s317 + $0x10] sm:$0xff] %vm498, %v1306
      %1339 = vst.msk [vmem:[%s317 + $0x18] sm:$0xff] %vm498, %v1307
      %1340 = vst.msk [vmem:[%s317 + $0x20] sm:$0xff] %vm498, %v1308
      %1341 = vst.msk [vmem:[%s317 + $0x28] sm:$0xff] %vm498, %v1309
      %1342 = vst.msk [vmem:[%s317 + $0x30] sm:$0xff] %vm498, %v1310
      %1343 = vst.msk [vmem:[%s317 + $0x38] sm:$0xff] %vm498, %v1311
      %1344 = vst.msk [vmem:[%s317 + $0x40] sm:$0xff] %vm498, %v1312
      %1345 = vst.msk [vmem:[%s317 + $0x48] sm:$0xff] %vm498, %v1313
      %1346 = vst.msk [vmem:[%s317 + $0x50] sm:$0xff] %vm498, %v1314
      %1347 = vst.msk [vmem:[%s317 + $0x58] sm:$0xff] %vm498, %v1315
      %1348 = vst.msk [vmem:[%s317 + $0x60] sm:$0xff] %vm498, %v1316
      %1349 = vst.msk [vmem:[%s317 + $0x68] sm:$0xff] %vm498, %v1317
      %1350 = vst.msk [vmem:[%s317 + $0x70] sm:$0xff] %vm498, %v1318
      %1351 = vst.msk [vmem:[%s317 + $0x78] sm:$0xff] %vm498, %v1319
      %1352 = vst.msk [vmem:[%s317 + $0x80] sm:$0xff] %vm498, %v1320
      %1353 = vst.msk [vmem:[%s317 + $0x88] sm:$0xff] %vm498, %v1321
      %1354 = vst.msk [vmem:[%s317 + $0x90] sm:$0xff] %vm498, %v1322
      %1355 = vst.msk [vmem:[%s317 + $0x98] sm:$0xff] %vm498, %v1323
      %1356 = vst.msk [vmem:[%s317 + $0xa0] sm:$0xff] %vm498, %v1324
      %1357 = vst.msk [vmem:[%s317 + $0xa8] sm:$0xff] %vm498, %v1325
      %1358 = vst.msk [vmem:[%s317 + $0xb0] sm:$0xff] %vm498, %v1326
      %1359 = vst.msk [vmem:[%s317 + $0xb8] sm:$0xff] %vm498, %v1327
      %1360 = vst.msk [vmem:[%s317 + $0xc0] sm:$0xff] %vm498, %v1328
      %1361 = vst.msk [vmem:[%s317 + $0xc8] sm:$0xff] %vm498, %v1329
      %1362 = vst.msk [vmem:[%s317 + $0xd0] sm:$0xff] %vm498, %v1330
      %1363 = vst.msk [vmem:[%s317 + $0xd8] sm:$0xff] %vm498, %v1331
      %1364 = vst.msk [vmem:[%s317 + $0xe0] sm:$0xff] %vm498, %v1332
      %1365 = vst.msk [vmem:[%s317 + $0xe8] sm:$0xff] %vm498, %v1333
      %1366 = vst.msk [vmem:[%s317 + $0xf0] sm:$0xff] %vm498, %v1334
      %1367 = vst.msk [vmem:[%s317 + $0xf8] sm:$0xff] %vm498, %v1335
      %v1368 = vmul.f32 %v1304, %v1304
      %v1369 = vmul.f32 %v1305, %v1305
      %v1370 = vmul.f32 %v1306, %v1306
      %v1371 = vmul.f32 %v1307, %v1307
      %v1372 = vmul.f32 %v1308, %v1308
      %v1373 = vmul.f32 %v1309, %v1309
      %v1374 = vmul.f32 %v1310, %v1310
      %v1375 = vmul.f32 %v1311, %v1311
      %v1376 = vmul.f32 %v1312, %v1312
      %v1377 = vmul.f32 %v1313, %v1313
      %v1378 = vmul.f32 %v1314, %v1314
      %v1379 = vmul.f32 %v1315, %v1315
      %v1380 = vmul.f32 %v1316, %v1316
      %v1381 = vmul.f32 %v1317, %v1317
      %v1382 = vmul.f32 %v1318, %v1318
      %v1383 = vmul.f32 %v1319, %v1319
      %v1384 = vmul.f32 %v1320, %v1320
      %v1385 = vmul.f32 %v1321, %v1321
      %v1386 = vmul.f32 %v1322, %v1322
      %v1387 = vmul.f32 %v1323, %v1323
      %v1388 = vmul.f32 %v1324, %v1324
      %v1389 = vmul.f32 %v1325, %v1325
      %v1390 = vmul.f32 %v1326, %v1326
      %v1391 = vmul.f32 %v1327, %v1327
      %v1392 = vmul.f32 %v1328, %v1328
      %v1393 = vmul.f32 %v1329, %v1329
      %v1394 = vmul.f32 %v1330, %v1330
      %v1395 = vmul.f32 %v1331, %v1331
      %v1396 = vmul.f32 %v1332, %v1332
      %v1397 = vmul.f32 %v1333, %v1333
      %v1398 = vmul.f32 %v1334, %v1334
      %v1399 = vmul.f32 %v1335, %v1335
      %v1400 = vsel %vm498, %v1304, 0.0
      %v1401 = vsel %vm498, %v1305, 0.0
      %v1402 = vadd.f32 %v1400, %v1401
      %v1403 = vrot.slane %v1402, 4
      %v1404 = vadd.f32 %v1402, %v1403
      %v1405 = vrot.slane %v1404, 2
      %v1406 = vadd.f32 %v1404, %v1405
      %v1407 = vrot.slane %v1406, 1
      %v1408 = vadd.f32 %v1406, %v1407
      %v1409 = vsel %vm498, %v1306, 0.0
      %v1410 = vsel %vm498, %v1307, 0.0
      %v1411 = vadd.f32 %v1409, %v1410
      %v1412 = vrot.slane %v1411, 4
      %v1413 = vadd.f32 %v1411, %v1412
      %v1414 = vrot.slane %v1413, 2
      %v1415 = vadd.f32 %v1413, %v1414
      %v1416 = vrot.slane %v1415, 1
      %v1417 = vadd.f32 %v1415, %v1416
      %v1418 = vsel %vm498, %v1308, 0.0
      %v1419 = vsel %vm498, %v1309, 0.0
      %v1420 = vadd.f32 %v1418, %v1419
      %v1421 = vrot.slane %v1420, 4
      %v1422 = vadd.f32 %v1420, %v1421
      %v1423 = vrot.slane %v1422, 2
      %v1424 = vadd.f32 %v1422, %v1423
      %v1425 = vrot.slane %v1424, 1
      %v1426 = vadd.f32 %v1424, %v1425
      %v1427 = vsel %vm498, %v1310, 0.0
      %v1428 = vsel %vm498, %v1311, 0.0
      %v1429 = vadd.f32 %v1427, %v1428
      %v1430 = vrot.slane %v1429, 4
      %v1431 = vadd.f32 %v1429, %v1430
      %v1432 = vrot.slane %v1431, 2
      %v1433 = vadd.f32 %v1431, %v1432
      %v1434 = vrot.slane %v1433, 1
      %v1435 = vadd.f32 %v1433, %v1434
      %v1436 = vsel %vm498, %v1312, 0.0
      %v1437 = vsel %vm498, %v1313, 0.0
      %v1438 = vadd.f32 %v1436, %v1437
      %v1439 = vrot.slane %v1438, 4
      %v1440 = vadd.f32 %v1438, %v1439
      %v1441 = vrot.slane %v1440, 2
      %v1442 = vadd.f32 %v1440, %v1441
      %v1443 = vrot.slane %v1442, 1
      %v1444 = vadd.f32 %v1442, %v1443
      %v1445 = vsel %vm498, %v1314, 0.0
      %v1446 = vsel %vm498, %v1315, 0.0
      %v1447 = vadd.f32 %v1445, %v1446
      %v1448 = vrot.slane %v1447, 4
      %v1449 = vadd.f32 %v1447, %v1448
      %v1450 = vrot.slane %v1449, 2
      %v1451 = vadd.f32 %v1449, %v1450
      %v1452 = vrot.slane %v1451, 1
      %v1453 = vadd.f32 %v1451, %v1452
      %v1454 = vsel %vm498, %v1316, 0.0
      %v1455 = vsel %vm498, %v1317, 0.0
      %v1456 = vadd.f32 %v1454, %v1455
      %v1457 = vrot.slane %v1456, 4
      %v1458 = vadd.f32 %v1456, %v1457
      %v1459 = vrot.slane %v1458, 2
      %v1460 = vadd.f32 %v1458, %v1459
      %v1461 = vrot.slane %v1460, 1
      %v1462 = vadd.f32 %v1460, %v1461
      %v1463 = vsel %vm498, %v1318, 0.0
      %v1464 = vsel %vm498, %v1319, 0.0
      %v1465 = vadd.f32 %v1463, %v1464
      %v1466 = vrot.slane %v1465, 4
      %v1467 = vadd.f32 %v1465, %v1466
      %v1468 = vrot.slane %v1467, 2
      %v1469 = vadd.f32 %v1467, %v1468
      %v1470 = vrot.slane %v1469, 1
      %v1471 = vadd.f32 %v1469, %v1470
      %v1472 = vsel %vm498, %v1320, 0.0
      %v1473 = vsel %vm498, %v1321, 0.0
      %v1474 = vadd.f32 %v1472, %v1473
      %v1475 = vrot.slane %v1474, 4
      %v1476 = vadd.f32 %v1474, %v1475
      %v1477 = vrot.slane %v1476, 2
      %v1478 = vadd.f32 %v1476, %v1477
      %v1479 = vrot.slane %v1478, 1
      %v1480 = vadd.f32 %v1478, %v1479
      %v1481 = vsel %vm498, %v1322, 0.0
      %v1482 = vsel %vm498, %v1323, 0.0
      %v1483 = vadd.f32 %v1481, %v1482
      %v1484 = vrot.slane %v1483, 4
      %v1485 = vadd.f32 %v1483, %v1484
      %v1486 = vrot.slane %v1485, 2
      %v1487 = vadd.f32 %v1485, %v1486
      %v1488 = vrot.slane %v1487, 1
      %v1489 = vadd.f32 %v1487, %v1488
      %v1490 = vsel %vm498, %v1324, 0.0
      %v1491 = vsel %vm498, %v1325, 0.0
      %v1492 = vadd.f32 %v1490, %v1491
      %v1493 = vrot.slane %v1492, 4
      %v1494 = vadd.f32 %v1492, %v1493
      %v1495 = vrot.slane %v1494, 2
      %v1496 = vadd.f32 %v1494, %v1495
      %v1497 = vrot.slane %v1496, 1
      %v1498 = vadd.f32 %v1496, %v1497
      %v1499 = vsel %vm498, %v1326, 0.0
      %v1500 = vsel %vm498, %v1327, 0.0
      %v1501 = vadd.f32 %v1499, %v1500
      %v1502 = vrot.slane %v1501, 4
      %v1503 = vadd.f32 %v1501, %v1502
      %v1504 = vrot.slane %v1503, 2
      %v1505 = vadd.f32 %v1503, %v1504
      %v1506 = vrot.slane %v1505, 1
      %v1507 = vadd.f32 %v1505, %v1506
      %v1508 = vsel %vm498, %v1328, 0.0
      %v1509 = vsel %vm498, %v1329, 0.0
      %v1510 = vadd.f32 %v1508, %v1509
      %v1511 = vrot.slane %v1510, 4
      %v1512 = vadd.f32 %v1510, %v1511
      %v1513 = vrot.slane %v1512, 2
      %v1514 = vadd.f32 %v1512, %v1513
      %v1515 = vrot.slane %v1514, 1
      %v1516 = vadd.f32 %v1514, %v1515
      %v1517 = vsel %vm498, %v1330, 0.0
      %v1518 = vsel %vm498, %v1331, 0.0
      %v1519 = vadd.f32 %v1517, %v1518
      %v1520 = vrot.slane %v1519, 4
      %v1521 = vadd.f32 %v1519, %v1520
      %v1522 = vrot.slane %v1521, 2
      %v1523 = vadd.f32 %v1521, %v1522
      %v1524 = vrot.slane %v1523, 1
      %v1525 = vadd.f32 %v1523, %v1524
      %v1526 = vsel %vm498, %v1332, 0.0
      %v1527 = vsel %vm498, %v1333, 0.0
      %v1528 = vadd.f32 %v1526, %v1527
      %v1529 = vrot.slane %v1528, 4
      %v1530 = vadd.f32 %v1528, %v1529
      %v1531 = vrot.slane %v1530, 2
      %v1532 = vadd.f32 %v1530, %v1531
      %v1533 = vrot.slane %v1532, 1
      %v1534 = vadd.f32 %v1532, %v1533
      %v1535 = vsel %vm498, %v1334, 0.0
      %v1536 = vsel %vm498, %v1335, 0.0
      %v1537 = vadd.f32 %v1535, %v1536
      %v1538 = vrot.slane %v1537, 4
      %v1539 = vadd.f32 %v1537, %v1538
      %v1540 = vrot.slane %v1539, 2
      %v1541 = vadd.f32 %v1539, %v1540
      %v1542 = vrot.slane %v1541, 1
      %v1543 = vadd.f32 %v1541, %v1542
      %v1544 = vsel %vm498, %v1408, 0.0
      %v1545 = vsel %vm498, %v1417, 0.0
      %v1546 = vadd.f32 %v1544, %v1545
      %v1547 = vsel %vm498, %v1426, 0.0
      %v1548 = vadd.f32 %v1546, %v1547
      %v1549 = vsel %vm498, %v1435, 0.0
      %v1550 = vadd.f32 %v1548, %v1549
      %v1551 = vsel %vm498, %v1444, 0.0
      %v1552 = vadd.f32 %v1550, %v1551
      %v1553 = vsel %vm498, %v1453, 0.0
      %v1554 = vadd.f32 %v1552, %v1553
      %v1555 = vsel %vm498, %v1462, 0.0
      %v1556 = vadd.f32 %v1554, %v1555
      %v1557 = vsel %vm498, %v1471, 0.0
      %v1558 = vadd.f32 %v1556, %v1557
      %v1559 = vsel %vm498, %v1480, 0.0
      %v1560 = vadd.f32 %v1558, %v1559
      %v1561 = vsel %vm498, %v1489, 0.0
      %v1562 = vadd.f32 %v1560, %v1561
      %v1563 = vsel %vm498, %v1498, 0.0
      %v1564 = vadd.f32 %v1562, %v1563
      %v1565 = vsel %vm498, %v1507, 0.0
      %v1566 = vadd.f32 %v1564, %v1565
      %v1567 = vsel %vm498, %v1516, 0.0
      %v1568 = vadd.f32 %v1566, %v1567
      %v1569 = vsel %vm498, %v1525, 0.0
      %v1570 = vadd.f32 %v1568, %v1569
      %v1571 = vsel %vm498, %v1534, 0.0
      %v1572 = vadd.f32 %v1570, %v1571
      %v1573 = vsel %vm498, %v1543, 0.0
      %v1574 = vadd.f32 %v1572, %v1573
      %v1575 = vsel %vm498, %v1368, 0.0
      %v1576 = vsel %vm498, %v1369, 0.0
      %v1577 = vadd.f32 %v1575, %v1576
      %v1578 = vrot.slane %v1577, 4
      %v1579 = vadd.f32 %v1577, %v1578
      %v1580 = vrot.slane %v1579, 2
      %v1581 = vadd.f32 %v1579, %v1580
      %v1582 = vrot.slane %v1581, 1
      %v1583 = vadd.f32 %v1581, %v1582
      %v1584 = vsel %vm498, %v1370, 0.0
      %v1585 = vsel %vm498, %v1371, 0.0
      %v1586 = vadd.f32 %v1584, %v1585
      %v1587 = vrot.slane %v1586, 4
      %v1588 = vadd.f32 %v1586, %v1587
      %v1589 = vrot.slane %v1588, 2
      %v1590 = vadd.f32 %v1588, %v1589
      %v1591 = vrot.slane %v1590, 1
      %v1592 = vadd.f32 %v1590, %v1591
      %v1593 = vsel %vm498, %v1372, 0.0
      %v1594 = vsel %vm498, %v1373, 0.0
      %v1595 = vadd.f32 %v1593, %v1594
      %v1596 = vrot.slane %v1595, 4
      %v1597 = vadd.f32 %v1595, %v1596
      %v1598 = vrot.slane %v1597, 2
      %v1599 = vadd.f32 %v1597, %v1598
      %v1600 = vrot.slane %v1599, 1
      %v1601 = vadd.f32 %v1599, %v1600
      %v1602 = vsel %vm498, %v1374, 0.0
      %v1603 = vsel %vm498, %v1375, 0.0
      %v1604 = vadd.f32 %v1602, %v1603
      %v1605 = vrot.slane %v1604, 4
      %v1606 = vadd.f32 %v1604, %v1605
      %v1607 = vrot.slane %v1606, 2
      %v1608 = vadd.f32 %v1606, %v1607
      %v1609 = vrot.slane %v1608, 1
      %v1610 = vadd.f32 %v1608, %v1609
      %v1611 = vsel %vm498, %v1376, 0.0
      %v1612 = vsel %vm498, %v1377, 0.0
      %v1613 = vadd.f32 %v1611, %v1612
      %v1614 = vrot.slane %v1613, 4
      %v1615 = vadd.f32 %v1613, %v1614
      %v1616 = vrot.slane %v1615, 2
      %v1617 = vadd.f32 %v1615, %v1616
      %v1618 = vrot.slane %v1617, 1
      %v1619 = vadd.f32 %v1617, %v1618
      %v1620 = vsel %vm498, %v1378, 0.0
      %v1621 = vsel %vm498, %v1379, 0.0
      %v1622 = vadd.f32 %v1620, %v1621
      %v1623 = vrot.slane %v1622, 4
      %v1624 = vadd.f32 %v1622, %v1623
      %v1625 = vrot.slane %v1624, 2
      %v1626 = vadd.f32 %v1624, %v1625
      %v1627 = vrot.slane %v1626, 1
      %v1628 = vadd.f32 %v1626, %v1627
      %v1629 = vsel %vm498, %v1380, 0.0
      %v1630 = vsel %vm498, %v1381, 0.0
      %v1631 = vadd.f32 %v1629, %v1630
      %v1632 = vrot.slane %v1631, 4
      %v1633 = vadd.f32 %v1631, %v1632
      %v1634 = vrot.slane %v1633, 2
      %v1635 = vadd.f32 %v1633, %v1634
      %v1636 = vrot.slane %v1635, 1
      %v1637 = vadd.f32 %v1635, %v1636
      %v1638 = vsel %vm498, %v1382, 0.0
      %v1639 = vsel %vm498, %v1383, 0.0
      %v1640 = vadd.f32 %v1638, %v1639
      %v1641 = vrot.slane %v1640, 4
      %v1642 = vadd.f32 %v1640, %v1641
      %v1643 = vrot.slane %v1642, 2
      %v1644 = vadd.f32 %v1642, %v1643
      %v1645 = vrot.slane %v1644, 1
      %v1646 = vadd.f32 %v1644, %v1645
      %v1647 = vsel %vm498, %v1384, 0.0
      %v1648 = vsel %vm498, %v1385, 0.0
      %v1649 = vadd.f32 %v1647, %v1648
      %v1650 = vrot.slane %v1649, 4
      %v1651 = vadd.f32 %v1649, %v1650
      %v1652 = vrot.slane %v1651, 2
      %v1653 = vadd.f32 %v1651, %v1652
      %v1654 = vrot.slane %v1653, 1
      %v1655 = vadd.f32 %v1653, %v1654
      %v1656 = vsel %vm498, %v1386, 0.0
      %v1657 = vsel %vm498, %v1387, 0.0
      %v1658 = vadd.f32 %v1656, %v1657
      %v1659 = vrot.slane %v1658, 4
      %v1660 = vadd.f32 %v1658, %v1659
      %v1661 = vrot.slane %v1660, 2
      %v1662 = vadd.f32 %v1660, %v1661
      %v1663 = vrot.slane %v1662, 1
      %v1664 = vadd.f32 %v1662, %v1663
      %v1665 = vsel %vm498, %v1388, 0.0
      %v1666 = vsel %vm498, %v1389, 0.0
      %v1667 = vadd.f32 %v1665, %v1666
      %v1668 = vrot.slane %v1667, 4
      %v1669 = vadd.f32 %v1667, %v1668
      %v1670 = vrot.slane %v1669, 2
      %v1671 = vadd.f32 %v1669, %v1670
      %v1672 = vrot.slane %v1671, 1
      %v1673 = vadd.f32 %v1671, %v1672
      %v1674 = vsel %vm498, %v1390, 0.0
      %v1675 = vsel %vm498, %v1391, 0.0
      %v1676 = vadd.f32 %v1674, %v1675
      %v1677 = vrot.slane %v1676, 4
      %v1678 = vadd.f32 %v1676, %v1677
      %v1679 = vrot.slane %v1678, 2
      %v1680 = vadd.f32 %v1678, %v1679
      %v1681 = vrot.slane %v1680, 1
      %v1682 = vadd.f32 %v1680, %v1681
      %v1683 = vsel %vm498, %v1392, 0.0
      %v1684 = vsel %vm498, %v1393, 0.0
      %v1685 = vadd.f32 %v1683, %v1684
      %v1686 = vrot.slane %v1685, 4
      %v1687 = vadd.f32 %v1685, %v1686
      %v1688 = vrot.slane %v1687, 2
      %v1689 = vadd.f32 %v1687, %v1688
      %v1690 = vrot.slane %v1689, 1
      %v1691 = vadd.f32 %v1689, %v1690
      %v1692 = vsel %vm498, %v1394, 0.0
      %v1693 = vsel %vm498, %v1395, 0.0
      %v1694 = vadd.f32 %v1692, %v1693
      %v1695 = vrot.slane %v1694, 4
      %v1696 = vadd.f32 %v1694, %v1695
      %v1697 = vrot.slane %v1696, 2
      %v1698 = vadd.f32 %v1696, %v1697
      %v1699 = vrot.slane %v1698, 1
      %v1700 = vadd.f32 %v1698, %v1699
      %v1701 = vsel %vm498, %v1396, 0.0
      %v1702 = vsel %vm498, %v1397, 0.0
      %v1703 = vadd.f32 %v1701, %v1702
      %v1704 = vrot.slane %v1703, 4
      %v1705 = vadd.f32 %v1703, %v1704
      %v1706 = vrot.slane %v1705, 2
      %v1707 = vadd.f32 %v1705, %v1706
      %v1708 = vrot.slane %v1707, 1
      %v1709 = vadd.f32 %v1707, %v1708
      %v1710 = vsel %vm498, %v1398, 0.0
      %v1711 = vsel %vm498, %v1399, 0.0
      %v1712 = vadd.f32 %v1710, %v1711
      %v1713 = vrot.slane %v1712, 4
      %v1714 = vadd.f32 %v1712, %v1713
      %v1715 = vrot.slane %v1714, 2
      %v1716 = vadd.f32 %v1714, %v1715
      %v1717 = vrot.slane %v1716, 1
      %v1718 = vadd.f32 %v1716, %v1717
      %v1719 = vsel %vm498, %v1583, 0.0
      %v1720 = vsel %vm498, %v1592, 0.0
      %v1721 = vadd.f32 %v1719, %v1720
      %v1722 = vsel %vm498, %v1601, 0.0
      %v1723 = vadd.f32 %v1721, %v1722
      %v1724 = vsel %vm498, %v1610, 0.0
      %v1725 = vadd.f32 %v1723, %v1724
      %v1726 = vsel %vm498, %v1619, 0.0
      %v1727 = vadd.f32 %v1725, %v1726
      %v1728 = vsel %vm498, %v1628, 0.0
      %v1729 = vadd.f32 %v1727, %v1728
      %v1730 = vsel %vm498, %v1637, 0.0
      %v1731 = vadd.f32 %v1729, %v1730
      %v1732 = vsel %vm498, %v1646, 0.0
      %v1733 = vadd.f32 %v1731, %v1732
      %v1734 = vsel %vm498, %v1655, 0.0
      %v1735 = vadd.f32 %v1733, %v1734
      %v1736 = vsel %vm498, %v1664, 0.0
      %v1737 = vadd.f32 %v1735, %v1736
      %v1738 = vsel %vm498, %v1673, 0.0
      %v1739 = vadd.f32 %v1737, %v1738
      %v1740 = vsel %vm498, %v1682, 0.0
      %v1741 = vadd.f32 %v1739, %v1740
      %v1742 = vsel %vm498, %v1691, 0.0
      %v1743 = vadd.f32 %v1741, %v1742
      %v1744 = vsel %vm498, %v1700, 0.0
      %v1745 = vadd.f32 %v1743, %v1744
      %v1746 = vsel %vm498, %v1709, 0.0
      %v1747 = vadd.f32 %v1745, %v1746
      %v1748 = vsel %vm498, %v1718, 0.0
      %v1749 = vadd.f32 %v1747, %v1748
      %1750 = vst.msk [vmem:[%s320] sm:$0x1] %vm509, %v1574
      %1751 = vst.msk [vmem:[%s323] sm:$0x1] %vm509, %v1749
      %p1752 = scmp.lt.s32.totalorder %s19, 1
      %s1753 = scalar_select %p1752, %s19, 1
      %s1754 = smul.addr %s1753, 32
      %s1755 = smul.addr %s1754, 8
      %s1756 = scalar_lea.vmem %s5, %s1755
      %p1757 = scmp.lt.s32.totalorder %s19, 1
      %s1758 = scalar_select %p1757, %s19, 1
      %s1759 = scalar_lea.vmem %s6, %s1758
      %p1760 = scmp.lt.s32.totalorder %s19, 1
      %s1761 = scalar_select %p1760, %s19, 1
      %s1762 = scalar_lea.vmem %s7, %s1761
      // Predicated region
      $region41: #{linear_bottleneck_forward.5} parent=39 // pred_check
        %p1763 = pneg %p157
      $region42: #{linear_bottleneck_forward.5} parent=39 // pred_check_branch
        %1765 = sbr.rel (%p1763) target = $region44
      $region43: #{linear_bottleneck_forward.5} parent=39 // pred_region
        _
      $region44: #{linear_bottleneck_forward.5} parent=39 // pred_fallthru
        _
      // Predicated region
      $region45: #{linear_bottleneck_forward.5} parent=39 // pred_check
        %p1766 = pneg %p183
      $region46: #{linear_bottleneck_forward.5} parent=39 // pred_check_branch
        %1768 = sbr.rel (%p1766) target = $region48
      $region47: #{linear_bottleneck_forward.5} parent=39 // pred_region
        _
      $region48: #{linear_bottleneck_forward.5} parent=39 // pred_fallthru
        _
      // Predicated region
      $region49: #{linear_bottleneck_forward.5} parent=39 // pred_check
        %p1769 = pneg %p209
      $region50: #{linear_bottleneck_forward.5} parent=39 // pred_check_branch
        %1771 = sbr.rel (%p1769) target = $region52
      $region51: #{linear_bottleneck_forward.5} parent=39 // pred_region
        _
      $region52: #{linear_bottleneck_forward.5} parent=39 // pred_fallthru
        _
    $region40: #{linear_bottleneck_forward.5} parent=5 // pred_fallthru
      _
    %p1772 = scmp.le.s32.totalorder 2, %s14
    // Predicated region
    $region53: #{linear_bottleneck_forward.5} parent=5 // pred_check
      %p1773 = pneg %p1772
    $region54: #{linear_bottleneck_forward.5} parent=5 // pred_check_branch
      %1775 = sbr.rel (%p1773) target = $region56
    $region55: #{linear_bottleneck_forward.5} parent=5 // pred_region
      %s1776 = ssub.s32 %s14, 2
      // Predicated region
      $region57: #{linear_bottleneck_forward.5} parent=55 // pred_check
        %p1777 = pneg %p163
      $region58: #{linear_bottleneck_forward.5} parent=55 // pred_check_branch
        %1779 = sbr.rel (%p1777) target = $region60
      $region59: #{linear_bottleneck_forward.5} parent=55 // pred_region
        %p1780 = scmp.lt.s32.totalorder %s20, 1
        %s1781 = scalar_select %p1780, %s20, 1
        %s1782 = smul.addr %s1781, 32
        %s1783 = smul.addr %s1782, 8
        %s1784 = scalar_lea.vmem %s5, %s1783
      $region60: #{linear_bottleneck_forward.5} parent=55 // pred_fallthru
        _
      // Predicated region
      $region61: #{linear_bottleneck_forward.5} parent=55 // pred_check
        %p1785 = pneg %p189
      $region62: #{linear_bottleneck_forward.5} parent=55 // pred_check_branch
        %1787 = sbr.rel (%p1785) target = $region64
      $region63: #{linear_bottleneck_forward.5} parent=55 // pred_region
        %p1788 = scmp.lt.s32.totalorder %s20, 1
        %s1789 = scalar_select %p1788, %s20, 1
        %s1790 = scalar_lea.vmem %s6, %s1789
      $region64: #{linear_bottleneck_forward.5} parent=55 // pred_fallthru
        _
      // Predicated region
      $region65: #{linear_bottleneck_forward.5} parent=55 // pred_check
        %p1791 = pneg %p215
      $region66: #{linear_bottleneck_forward.5} parent=55 // pred_check_branch
        %1793 = sbr.rel (%p1791) target = $region68
      $region67: #{linear_bottleneck_forward.5} parent=55 // pred_region
        %p1794 = scmp.lt.s32.totalorder %s20, 1
        %s1795 = scalar_select %p1794, %s20, 1
        %s1796 = scalar_lea.vmem %s7, %s1795
      $region68: #{linear_bottleneck_forward.5} parent=55 // pred_fallthru
        _
    $region56: #{linear_bottleneck_forward.5} parent=5 // pred_fallthru
      _
  $region6: #{linear_bottleneck_forward.5} parent=0 // loop_footer
    %s18 = sadd.s32 1, %s14
  $region7: #{linear_bottleneck_forward.5} parent=0 // loop_footer_branch
    %13 = sbr.rel target = $region3
  $region8: #{linear_bottleneck_forward.5} parent=0 // loop_exit
    _

</llo_original>
